<compile_context>
chip_gen: v7x
topology: tpu7x:2x2x1
jax: 0.10.0
libtpu: 0.0.40
codegen_flags: <defaults>
</compile_context>

<pallas_src>
import functools

import jax
import jax.numpy as jnp
from jax import lax
from jax.experimental import pallas as pl
from jax.experimental.pallas import tpu as pltpu

_EPS = 1e-5


# ---------------------------------------------------------------------------
# Fused DoubleConv kernel
# ---------------------------------------------------------------------------
def _double_conv_kernel(x_ref, w1_ref, b1_ref, w2_ref, b2_ref, o_ref, mid_ref,
                        *, th, h, w, cin, cmid, cout):
    """One (batch, row-tile) step of the fused DoubleConv.

    x_ref   : (1, H+4, W+2, Cin)   bf16, zero padded (2 rows / 1 col per side)
    w1_ref  : (9, Cin,  Cmid)      bf16, BN1 scale folded in
    b1_ref  : (1, Cmid)            f32   folded BN1 shift (+ conv1 bias)
    w2_ref  : (9, Cmid, Cout)      bf16, BN2 scale folded in
    b2_ref  : (1, Cout)            f32
    o_ref   : (1, TH, W, Cout)     f32
    mid_ref : (TH+2, W+2, Cmid)    bf16 scratch (conv1 output + its zero pad)
    """
    i = pl.program_id(1)
    r0 = pl.multiple_of(i * th, th)          # first output row of this tile

    # ---- conv1: 3x3, accumulate 9 shifted MXU dots (bf16 x bf16 -> f32) ----
    m1 = (th + 2) * w
    acc1 = jnp.zeros((m1, cmid), jnp.float32)
    for di in range(3):
        for dj in range(3):
            slab = x_ref[0, pl.ds(r0 + di, th + 2), pl.ds(dj, w), :]
            acc1 = acc1 + jnp.dot(slab.reshape(m1, cin), w1_ref[di * 3 + dj],
                                  preferred_element_type=jnp.float32)
    y1 = jnp.maximum(acc1 + b1_ref[...], 0.0).reshape(th + 2, w, cmid)

    # Write conv1 output into the column-padded VMEM scratch. Only the two
    # border columns need explicit zeroing; the interior is fully overwritten.
    zcol = jnp.zeros((th + 2, 1, cmid), mid_ref.dtype)
    mid_ref[:, 0:1, :] = zcol
    mid_ref[:, w + 1:w + 2, :] = zcol
    mid_ref[:, 1:w + 1, :] = y1.astype(mid_ref.dtype)

    # Intermediate rows outside the image are conv2's zero padding (NOT conv1
    # applied to padded input): zero them only on the edge tiles.
    zrow = jnp.zeros((1, w + 2, cmid), mid_ref.dtype)

    @pl.when(i == 0)
    def _():
        mid_ref[0:1, :, :] = zrow                      # image row -1

    @pl.when(i == pl.num_programs(1) - 1)
    def _():
        mid_ref[th + 1:th + 2, :, :] = zrow            # image row H

    # ---- conv2: 3x3 over the VMEM-resident intermediate --------------------
    m2 = th * w
    acc2 = jnp.zeros((m2, cout), jnp.float32)
    for di in range(3):
        for dj in range(3):
            slab = mid_ref[di:di + th, dj:dj + w, :]
            acc2 = acc2 + jnp.dot(slab.reshape(m2, cmid), w2_ref[di * 3 + dj],
                                  preferred_element_type=jnp.float32)
    y2 = jnp.maximum(acc2 + b2_ref[...], 0.0)
    o_ref[...] = y2.reshape(1, th, w, cout).astype(o_ref.dtype)


# ---------------------------------------------------------------------------
# Wrapper
# ---------------------------------------------------------------------------
def double_conv(params, x_nchw, *, row_tile=8):
    """DoubleConv forward: (N, Cin, H, W) -> (N, Cout, H, W)."""
    n, cin, h, w = x_nchw.shape
    cmid = params["w1"].shape[-1]
    cout = params["w2"].shape[-1]
    th = row_tile if (h % row_tile == 0) else h

    x = jnp.transpose(x_nchw, (0, 2, 3, 1))                        # -> NHWC
    # zero pad: 2 rows each side (halo for conv-of-conv), 1 col each side.
    xp = jnp.pad(x, ((0, 0), (2, 2), (1, 1), (0, 0))).astype(jnp.bfloat16)

    kernel = functools.partial(_double_conv_kernel, th=th, h=h, w=w,
                               cin=cin, cmid=cmid, cout=cout)
    out = pl.pallas_call(
        kernel,
        out_shape=jax.ShapeDtypeStruct((n, h, w, cout), jnp.float32),
        grid=(n, h // th),
        in_specs=[
            pl.BlockSpec((1, h + 4, w + 2, cin), lambda b, i: (b, 0, 0, 0)),
            pl.BlockSpec((9, cin, cmid), lambda b, i: (0, 0, 0)),
            pl.BlockSpec((1, cmid), lambda b, i: (0, 0)),
            pl.BlockSpec((9, cmid, cout), lambda b, i: (0, 0, 0)),
            pl.BlockSpec((1, cout), lambda b, i: (0, 0)),
        ],
        out_specs=pl.BlockSpec((1, th, w, cout), lambda b, i: (b, i, 0, 0)),
        scratch_shapes=[pltpu.VMEM((th + 2, w + 2, cmid), jnp.bfloat16)],
        compiler_params=pltpu.CompilerParams(
            dimension_semantics=("parallel", "parallel"),
            vmem_limit_bytes=48 * 1024 * 1024,
        ),
    )(xp, params["w1"], params["b1"], params["w2"], params["b2"])
    return jnp.transpose(out, (0, 3, 1, 2))                        # -> NCHW


# ---------------------------------------------------------------------------
# Deterministic synthetic parameters, BN folded for inference
# ---------------------------------------------------------------------------
def make_params(key, in_channels, out_channels):
    kg = iter(jax.random.split(key, 16))

    def conv_w(cin, cout):
        fan_in = cin * 9
        return jax.random.normal(next(kg), (3, 3, cin, cout),
                                 jnp.float32) * (1.0 / jnp.sqrt(fan_in))

    def conv_b(c):
        return 0.05 * jax.random.normal(next(kg), (c,), jnp.float32)

    def bn(c):
        gamma = 1.0 + 0.1 * jax.random.normal(next(kg), (c,), jnp.float32)
        beta = 0.1 * jax.random.normal(next(kg), (c,), jnp.float32)
        mean = 0.1 * jax.random.normal(next(kg), (c,), jnp.float32)
        var = (1.0 + 0.1 * jax.random.normal(next(kg), (c,), jnp.float32)) ** 2
        return gamma, beta, mean, var

    def fold(w_hwio, b_conv, bn_p):
        gamma, beta, mean, var = bn_p
        scale = gamma / jnp.sqrt(var + _EPS)
        cin, cout = w_hwio.shape[2], w_hwio.shape[3]
        w_f = (w_hwio * scale).reshape(9, cin, cout)          # scale -> weights
        shift = (beta + scale * (b_conv - mean)).reshape(1, cout)
        return w_f.astype(jnp.bfloat16), shift.astype(jnp.float32)

    w1, b1 = fold(conv_w(in_channels, out_channels), conv_b(out_channels),
                  bn(out_channels))
    w2, b2 = fold(conv_w(out_channels, out_channels), conv_b(out_channels),
                  bn(out_channels))
    return {"w1": w1, "b1": b1, "w2": w2, "b2": b2}


# ---------------------------------------------------------------------------
# Pure-JAX reference (same folded, bf16-rounded parameters)
# ---------------------------------------------------------------------------
def double_conv_reference(params, x_nchw):
    x = jnp.transpose(x_nchw, (0, 2, 3, 1)).astype(jnp.bfloat16).astype(jnp.float32)
    cin = x.shape[-1]
    cmid = params["w1"].shape[-1]
    cout = params["w2"].shape[-1]

    def conv(inp, w_folded, shift, ci, co):
        wt = w_folded.astype(jnp.float32).reshape(3, 3, ci, co)
        y = lax.conv_general_dilated(
            inp, wt, window_strides=(1, 1), padding="SAME",
            dimension_numbers=("NHWC", "HWIO", "NHWC"),
            precision=lax.Precision.HIGHEST,
            preferred_element_type=jnp.float32)
        return jnp.maximum(y + shift.reshape(1, 1, 1, co), 0.0)

    y1 = conv(x, params["w1"], params["b1"], cin, cmid)
    y1 = y1.astype(jnp.bfloat16).astype(jnp.float32)   # kernel keeps mid in bf16
    y2 = conv(y1, params["w2"], params["b2"], cmid, cout)
    return jnp.transpose(y2, (0, 3, 1, 2))


# ---------------------------------------------------------------------------
if __name__ == "__main__":
    in_channels, out_channels = 4, 32
    N, H, W = 2, 16, 16

    root = jax.random.PRNGKey(0)
    k_params, k_input = jax.random.split(root)
    params = make_params(k_params, in_channels, out_channels)
    x = jax.random.normal(k_input, (N, in_channels, H, W), jnp.float32)

    fwd = jax.jit(functools.partial(double_conv, params, row_tile=8))
    y = jax.block_until_ready(fwd(x))

    assert y.shape == (N, out_channels, H, W), y.shape
    assert bool(jnp.all(jnp.isfinite(y)))
    assert bool(jnp.all(y >= 0.0))                 # ReLU output

    y_ref = double_conv_reference(params, x)
    err = float(jnp.max(jnp.abs(y - y_ref)))
    assert err < 2e-2, f"max abs error vs reference = {err}"
    print("KERNEL_OK")
</pallas_src>

<mosaic_0001>
module attributes {stable_mosaic.version = 11 : i64} {
  func.func @_double_conv_kernel(%arg0: i32, %arg1: i32, %arg2: memref<1x20x18x4xbf16, #tpu.memory_space<vmem>>, %arg3: memref<9x4x32xbf16, #tpu.memory_space<vmem>>, %arg4: memref<1x32xf32, #tpu.memory_space<vmem>>, %arg5: memref<9x32x32xbf16, #tpu.memory_space<vmem>>, %arg6: memref<1x32xf32, #tpu.memory_space<vmem>>, %arg7: memref<1x8x16x32xf32, #tpu.memory_space<vmem>>, %arg8: memref<10x18x32xbf16, #tpu.memory_space<vmem>>) attributes {dimension_semantics = [#tpu.dimension_semantics<parallel>, #tpu.dimension_semantics<parallel>], iteration_bounds = array<i64: 2, 2>, scalar_prefetch = 0 : i64, scratch_operands = 1 : i64, tpu.core_type = #tpu.core_type<tc>, window_params = [{transform_indices = @transform_0, window_bounds = array<i64: 1, 20, 18, 4>}, {pipeline_mode = #tpu.pipeline_mode<synchronous>, transform_indices = @transform_1, window_bounds = array<i64: 9, 4, 32>}, {pipeline_mode = #tpu.pipeline_mode<synchronous>, transform_indices = @transform_2, window_bounds = array<i64: 1, 32>}, {pipeline_mode = #tpu.pipeline_mode<synchronous>, transform_indices = @transform_3, window_bounds = array<i64: 9, 32, 32>}, {pipeline_mode = #tpu.pipeline_mode<synchronous>, transform_indices = @transform_4, window_bounds = array<i64: 1, 32>}, {transform_indices = @transform_5, window_bounds = array<i64: 1, 8, 16, 32>}]} {
    %c8_i32 = arith.constant 8 : i32
    %0 = arith.muli %arg1, %c8_i32 : i32
    %1 = tpu.assume_multiple %0, 8 : i32
    %cst = arith.constant 0.000000e+00 : f32
    %2 = vector.broadcast %cst : f32 to vector<160x32xf32>
    %c0_i32 = arith.constant 0 : i32
    %3 = arith.addi %1, %c0_i32 : i32
    %c0 = arith.constant 0 : index
    %4 = arith.index_cast %3 : i32 to index
    %c0_0 = arith.constant 0 : index
    %c0_1 = arith.constant 0 : index
    %5 = vector.load %arg2[%c0, %4, %c0_0, %c0_1] : memref<1x20x18x4xbf16, #tpu.memory_space<vmem>>, vector<1x10x16x4xbf16>
    %6 = vector.shape_cast %5 : vector<1x10x16x4xbf16> to vector<10x16x4xbf16>
    %7 = vector.shape_cast %6 : vector<10x16x4xbf16> to vector<160x4xbf16>
    %c0_2 = arith.constant 0 : index
    %c0_3 = arith.constant 0 : index
    %c0_4 = arith.constant 0 : index
    %8 = vector.load %arg3[%c0_2, %c0_3, %c0_4] : memref<9x4x32xbf16, #tpu.memory_space<vmem>>, vector<1x4x32xbf16>
    %9 = vector.shape_cast %8 : vector<1x4x32xbf16> to vector<4x32xbf16>
    %cst_5 = arith.constant dense<0.000000e+00> : vector<160x32xf32>
    %10 = tpu.matmul %7, %9, %cst_5 {dimension_numbers = #tpu.dot_dimension_numbers<[1], [0], [0], [1], [0, 0, 1, 1], [], []>} : vector<160x4xbf16>, vector<4x32xbf16>, vector<160x32xf32> -> vector<160x32xf32>
    %11 = arith.addf %2, %10 : vector<160x32xf32>
    %c0_i32_6 = arith.constant 0 : i32
    %12 = arith.addi %1, %c0_i32_6 : i32
    %c0_7 = arith.constant 0 : index
    %13 = arith.index_cast %12 : i32 to index
    %c1 = arith.constant 1 : index
    %c0_8 = arith.constant 0 : index
    %14 = vector.load %arg2[%c0_7, %13, %c1, %c0_8] : memref<1x20x18x4xbf16, #tpu.memory_space<vmem>>, vector<1x10x16x4xbf16>
    %15 = vector.shape_cast %14 : vector<1x10x16x4xbf16> to vector<10x16x4xbf16>
    %16 = vector.shape_cast %15 : vector<10x16x4xbf16> to vector<160x4xbf16>
    %c1_9 = arith.constant 1 : index
    %c0_10 = arith.constant 0 : index
    %c0_11 = arith.constant 0 : index
    %17 = vector.load %arg3[%c1_9, %c0_10, %c0_11] : memref<9x4x32xbf16, #tpu.memory_space<vmem>>, vector<1x4x32xbf16>
    %18 = vector.shape_cast %17 : vector<1x4x32xbf16> to vector<4x32xbf16>
    %cst_12 = arith.constant dense<0.000000e+00> : vector<160x32xf32>
    %19 = tpu.matmul %16, %18, %cst_12 {dimension_numbers = #tpu.dot_dimension_numbers<[1], [0], [0], [1], [0, 0, 1, 1], [], []>} : vector<160x4xbf16>, vector<4x32xbf16>, vector<160x32xf32> -> vector<160x32xf32>
    %20 = arith.addf %11, %19 : vector<160x32xf32>
    %c0_i32_13 = arith.constant 0 : i32
    %21 = arith.addi %1, %c0_i32_13 : i32
    %c0_14 = arith.constant 0 : index
    %22 = arith.index_cast %21 : i32 to index
    %c2 = arith.constant 2 : index
    %c0_15 = arith.constant 0 : index
    %23 = vector.load %arg2[%c0_14, %22, %c2, %c0_15] : memref<1x20x18x4xbf16, #tpu.memory_space<vmem>>, vector<1x10x16x4xbf16>
    %24 = vector.shape_cast %23 : vector<1x10x16x4xbf16> to vector<10x16x4xbf16>
    %25 = vector.shape_cast %24 : vector<10x16x4xbf16> to vector<160x4xbf16>
    %c2_16 = arith.constant 2 : index
    %c0_17 = arith.constant 0 : index
    %c0_18 = arith.constant 0 : index
    %26 = vector.load %arg3[%c2_16, %c0_17, %c0_18] : memref<9x4x32xbf16, #tpu.memory_space<vmem>>, vector<1x4x32xbf16>
    %27 = vector.shape_cast %26 : vector<1x4x32xbf16> to vector<4x32xbf16>
    %cst_19 = arith.constant dense<0.000000e+00> : vector<160x32xf32>
    %28 = tpu.matmul %25, %27, %cst_19 {dimension_numbers = #tpu.dot_dimension_numbers<[1], [0], [0], [1], [0, 0, 1, 1], [], []>} : vector<160x4xbf16>, vector<4x32xbf16>, vector<160x32xf32> -> vector<160x32xf32>
    %29 = arith.addf %20, %28 : vector<160x32xf32>
    %c1_i32 = arith.constant 1 : i32
    %30 = arith.addi %1, %c1_i32 : i32
    %c0_20 = arith.constant 0 : index
    %31 = arith.index_cast %30 : i32 to index
    %c0_21 = arith.constant 0 : index
    %c0_22 = arith.constant 0 : index
    %32 = vector.load %arg2[%c0_20, %31, %c0_21, %c0_22] : memref<1x20x18x4xbf16, #tpu.memory_space<vmem>>, vector<1x10x16x4xbf16>
    %33 = vector.shape_cast %32 : vector<1x10x16x4xbf16> to vector<10x16x4xbf16>
    %34 = vector.shape_cast %33 : vector<10x16x4xbf16> to vector<160x4xbf16>
    %c3 = arith.constant 3 : index
    %c0_23 = arith.constant 0 : index
    %c0_24 = arith.constant 0 : index
    %35 = vector.load %arg3[%c3, %c0_23, %c0_24] : memref<9x4x32xbf16, #tpu.memory_space<vmem>>, vector<1x4x32xbf16>
    %36 = vector.shape_cast %35 : vector<1x4x32xbf16> to vector<4x32xbf16>
    %cst_25 = arith.constant dense<0.000000e+00> : vector<160x32xf32>
    %37 = tpu.matmul %34, %36, %cst_25 {dimension_numbers = #tpu.dot_dimension_numbers<[1], [0], [0], [1], [0, 0, 1, 1], [], []>} : vector<160x4xbf16>, vector<4x32xbf16>, vector<160x32xf32> -> vector<160x32xf32>
    %38 = arith.addf %29, %37 : vector<160x32xf32>
    %c1_i32_26 = arith.constant 1 : i32
    %39 = arith.addi %1, %c1_i32_26 : i32
    %c0_27 = arith.constant 0 : index
    %40 = arith.index_cast %39 : i32 to index
    %c1_28 = arith.constant 1 : index
    %c0_29 = arith.constant 0 : index
    %41 = vector.load %arg2[%c0_27, %40, %c1_28, %c0_29] : memref<1x20x18x4xbf16, #tpu.memory_space<vmem>>, vector<1x10x16x4xbf16>
    %42 = vector.shape_cast %41 : vector<1x10x16x4xbf16> to vector<10x16x4xbf16>
    %43 = vector.shape_cast %42 : vector<10x16x4xbf16> to vector<160x4xbf16>
    %c4 = arith.constant 4 : index
    %c0_30 = arith.constant 0 : index
    %c0_31 = arith.constant 0 : index
    %44 = vector.load %arg3[%c4, %c0_30, %c0_31] : memref<9x4x32xbf16, #tpu.memory_space<vmem>>, vector<1x4x32xbf16>
    %45 = vector.shape_cast %44 : vector<1x4x32xbf16> to vector<4x32xbf16>
    %cst_32 = arith.constant dense<0.000000e+00> : vector<160x32xf32>
    %46 = tpu.matmul %43, %45, %cst_32 {dimension_numbers = #tpu.dot_dimension_numbers<[1], [0], [0], [1], [0, 0, 1, 1], [], []>} : vector<160x4xbf16>, vector<4x32xbf16>, vector<160x32xf32> -> vector<160x32xf32>
    %47 = arith.addf %38, %46 : vector<160x32xf32>
    %c1_i32_33 = arith.constant 1 : i32
    %48 = arith.addi %1, %c1_i32_33 : i32
    %c0_34 = arith.constant 0 : index
    %49 = arith.index_cast %48 : i32 to index
    %c2_35 = arith.constant 2 : index
    %c0_36 = arith.constant 0 : index
    %50 = vector.load %arg2[%c0_34, %49, %c2_35, %c0_36] : memref<1x20x18x4xbf16, #tpu.memory_space<vmem>>, vector<1x10x16x4xbf16>
    %51 = vector.shape_cast %50 : vector<1x10x16x4xbf16> to vector<10x16x4xbf16>
    %52 = vector.shape_cast %51 : vector<10x16x4xbf16> to vector<160x4xbf16>
    %c5 = arith.constant 5 : index
    %c0_37 = arith.constant 0 : index
    %c0_38 = arith.constant 0 : index
    %53 = vector.load %arg3[%c5, %c0_37, %c0_38] : memref<9x4x32xbf16, #tpu.memory_space<vmem>>, vector<1x4x32xbf16>
    %54 = vector.shape_cast %53 : vector<1x4x32xbf16> to vector<4x32xbf16>
    %cst_39 = arith.constant dense<0.000000e+00> : vector<160x32xf32>
    %55 = tpu.matmul %52, %54, %cst_39 {dimension_numbers = #tpu.dot_dimension_numbers<[1], [0], [0], [1], [0, 0, 1, 1], [], []>} : vector<160x4xbf16>, vector<4x32xbf16>, vector<160x32xf32> -> vector<160x32xf32>
    %56 = arith.addf %47, %55 : vector<160x32xf32>
    %c2_i32 = arith.constant 2 : i32
    %57 = arith.addi %1, %c2_i32 : i32
    %c0_40 = arith.constant 0 : index
    %58 = arith.index_cast %57 : i32 to index
    %c0_41 = arith.constant 0 : index
    %c0_42 = arith.constant 0 : index
    %59 = vector.load %arg2[%c0_40, %58, %c0_41, %c0_42] : memref<1x20x18x4xbf16, #tpu.memory_space<vmem>>, vector<1x10x16x4xbf16>
    %60 = vector.shape_cast %59 : vector<1x10x16x4xbf16> to vector<10x16x4xbf16>
    %61 = vector.shape_cast %60 : vector<10x16x4xbf16> to vector<160x4xbf16>
    %c6 = arith.constant 6 : index
    %c0_43 = arith.constant 0 : index
    %c0_44 = arith.constant 0 : index
    %62 = vector.load %arg3[%c6, %c0_43, %c0_44] : memref<9x4x32xbf16, #tpu.memory_space<vmem>>, vector<1x4x32xbf16>
    %63 = vector.shape_cast %62 : vector<1x4x32xbf16> to vector<4x32xbf16>
    %cst_45 = arith.constant dense<0.000000e+00> : vector<160x32xf32>
    %64 = tpu.matmul %61, %63, %cst_45 {dimension_numbers = #tpu.dot_dimension_numbers<[1], [0], [0], [1], [0, 0, 1, 1], [], []>} : vector<160x4xbf16>, vector<4x32xbf16>, vector<160x32xf32> -> vector<160x32xf32>
    %65 = arith.addf %56, %64 : vector<160x32xf32>
    %c2_i32_46 = arith.constant 2 : i32
    %66 = arith.addi %1, %c2_i32_46 : i32
    %c0_47 = arith.constant 0 : index
    %67 = arith.index_cast %66 : i32 to index
    %c1_48 = arith.constant 1 : index
    %c0_49 = arith.constant 0 : index
    %68 = vector.load %arg2[%c0_47, %67, %c1_48, %c0_49] : memref<1x20x18x4xbf16, #tpu.memory_space<vmem>>, vector<1x10x16x4xbf16>
    %69 = vector.shape_cast %68 : vector<1x10x16x4xbf16> to vector<10x16x4xbf16>
    %70 = vector.shape_cast %69 : vector<10x16x4xbf16> to vector<160x4xbf16>
    %c7 = arith.constant 7 : index
    %c0_50 = arith.constant 0 : index
    %c0_51 = arith.constant 0 : index
    %71 = vector.load %arg3[%c7, %c0_50, %c0_51] : memref<9x4x32xbf16, #tpu.memory_space<vmem>>, vector<1x4x32xbf16>
    %72 = vector.shape_cast %71 : vector<1x4x32xbf16> to vector<4x32xbf16>
    %cst_52 = arith.constant dense<0.000000e+00> : vector<160x32xf32>
    %73 = tpu.matmul %70, %72, %cst_52 {dimension_numbers = #tpu.dot_dimension_numbers<[1], [0], [0], [1], [0, 0, 1, 1], [], []>} : vector<160x4xbf16>, vector<4x32xbf16>, vector<160x32xf32> -> vector<160x32xf32>
    %74 = arith.addf %65, %73 : vector<160x32xf32>
    %c2_i32_53 = arith.constant 2 : i32
    %75 = arith.addi %1, %c2_i32_53 : i32
    %c0_54 = arith.constant 0 : index
    %76 = arith.index_cast %75 : i32 to index
    %c2_55 = arith.constant 2 : index
    %c0_56 = arith.constant 0 : index
    %77 = vector.load %arg2[%c0_54, %76, %c2_55, %c0_56] : memref<1x20x18x4xbf16, #tpu.memory_space<vmem>>, vector<1x10x16x4xbf16>
    %78 = vector.shape_cast %77 : vector<1x10x16x4xbf16> to vector<10x16x4xbf16>
    %79 = vector.shape_cast %78 : vector<10x16x4xbf16> to vector<160x4xbf16>
    %c8 = arith.constant 8 : index
    %c0_57 = arith.constant 0 : index
    %c0_58 = arith.constant 0 : index
    %80 = vector.load %arg3[%c8, %c0_57, %c0_58] : memref<9x4x32xbf16, #tpu.memory_space<vmem>>, vector<1x4x32xbf16>
    %81 = vector.shape_cast %80 : vector<1x4x32xbf16> to vector<4x32xbf16>
    %cst_59 = arith.constant dense<0.000000e+00> : vector<160x32xf32>
    %82 = tpu.matmul %79, %81, %cst_59 {dimension_numbers = #tpu.dot_dimension_numbers<[1], [0], [0], [1], [0, 0, 1, 1], [], []>} : vector<160x4xbf16>, vector<4x32xbf16>, vector<160x32xf32> -> vector<160x32xf32>
    %83 = arith.addf %74, %82 : vector<160x32xf32>
    %c0_60 = arith.constant 0 : index
    %c0_61 = arith.constant 0 : index
    %84 = vector.load %arg4[%c0_60, %c0_61] : memref<1x32xf32, #tpu.memory_space<vmem>>, vector<1x32xf32>
    %85 = vector.broadcast %84 : vector<1x32xf32> to vector<160x32xf32>
    %86 = arith.addf %83, %85 : vector<160x32xf32>
    %cst_62 = arith.constant 0.000000e+00 : f32
    %87 = vector.broadcast %cst_62 : f32 to vector<160x32xf32>
    %88 = arith.maximumf %86, %87 : vector<160x32xf32>
    %89 = vector.shape_cast %88 : vector<160x32xf32> to vector<10x16x32xf32>
    %cst_63 = arith.constant 0.000000e+00 : bf16
    %90 = vector.broadcast %cst_63 : bf16 to vector<10x1x32xbf16>
    %c0_64 = arith.constant 0 : index
    %c0_65 = arith.constant 0 : index
    %c0_66 = arith.constant 0 : index
    %91 = vector.load %arg8[%c0_64, %c0_65, %c0_66] : memref<10x18x32xbf16, #tpu.memory_space<vmem>>, vector<10x1x32xbf16>
    tpu.vector_store %arg8[%c0_64, %c0_65, %c0_66], %90 {strides = array<i32>} : memref<10x18x32xbf16, #tpu.memory_space<vmem>>, vector<10x1x32xbf16>,
    %c0_67 = arith.constant 0 : index
    %c17 = arith.constant 17 : index
    %c0_68 = arith.constant 0 : index
    %92 = vector.load %arg8[%c0_67, %c17, %c0_68] : memref<10x18x32xbf16, #tpu.memory_space<vmem>>, vector<10x1x32xbf16>
    tpu.vector_store %arg8[%c0_67, %c17, %c0_68], %90 {strides = array<i32>} : memref<10x18x32xbf16, #tpu.memory_space<vmem>>, vector<10x1x32xbf16>,
    %93 = arith.truncf %89 : vector<10x16x32xf32> to vector<10x16x32xbf16>
    %c0_69 = arith.constant 0 : index
    %c1_70 = arith.constant 1 : index
    %c0_71 = arith.constant 0 : index
    %94 = vector.load %arg8[%c0_69, %c1_70, %c0_71] : memref<10x18x32xbf16, #tpu.memory_space<vmem>>, vector<10x16x32xbf16>
    tpu.vector_store %arg8[%c0_69, %c1_70, %c0_71], %93 {strides = array<i32>} : memref<10x18x32xbf16, #tpu.memory_space<vmem>>, vector<10x16x32xbf16>,
    %cst_72 = arith.constant 0.000000e+00 : bf16
    %95 = vector.broadcast %cst_72 : bf16 to vector<1x18x32xbf16>
    %c0_i32_73 = arith.constant 0 : i32
    %96 = arith.cmpi eq, %arg1, %c0_i32_73 : i32
    %97 = arith.extui %96 : i1 to i32
    %c0_i32_74 = arith.constant 0 : i32
    %98 = arith.cmpi ne, %97, %c0_i32_74 : i32
    scf.if %98 {
      %c0_148 = arith.constant 0 : index
      %c0_149 = arith.constant 0 : index
      %c0_150 = arith.constant 0 : index
      %164 = vector.load %arg8[%c0_148, %c0_149, %c0_150] : memref<10x18x32xbf16, #tpu.memory_space<vmem>>, vector<1x18x32xbf16>
      tpu.vector_store %arg8[%c0_148, %c0_149, %c0_150], %95 {strides = array<i32>} : memref<10x18x32xbf16, #tpu.memory_space<vmem>>, vector<1x18x32xbf16>,
    } else {
    }
    %c1_i32_75 = arith.constant 1 : i32
    %99 = arith.cmpi eq, %arg1, %c1_i32_75 : i32
    %100 = arith.extui %99 : i1 to i32
    %c0_i32_76 = arith.constant 0 : i32
    %101 = arith.cmpi ne, %100, %c0_i32_76 : i32
    scf.if %101 {
      %c9 = arith.constant 9 : index
      %c0_148 = arith.constant 0 : index
      %c0_149 = arith.constant 0 : index
      %164 = vector.load %arg8[%c9, %c0_148, %c0_149] : memref<10x18x32xbf16, #tpu.memory_space<vmem>>, vector<1x18x32xbf16>
      tpu.vector_store %arg8[%c9, %c0_148, %c0_149], %95 {strides = array<i32>} : memref<10x18x32xbf16, #tpu.memory_space<vmem>>, vector<1x18x32xbf16>,
    } else {
    }
    %cst_77 = arith.constant 0.000000e+00 : f32
    %102 = vector.broadcast %cst_77 : f32 to vector<128x32xf32>
    %c0_78 = arith.constant 0 : index
    %c0_79 = arith.constant 0 : index
    %c0_80 = arith.constant 0 : index
    %103 = vector.load %arg8[%c0_78, %c0_79, %c0_80] : memref<10x18x32xbf16, #tpu.memory_space<vmem>>, vector<8x16x32xbf16>
    %104 = vector.shape_cast %103 : vector<8x16x32xbf16> to vector<128x32xbf16>
    %c0_81 = arith.constant 0 : index
    %c0_82 = arith.constant 0 : index
    %c0_83 = arith.constant 0 : index
    %105 = vector.load %arg5[%c0_81, %c0_82, %c0_83] : memref<9x32x32xbf16, #tpu.memory_space<vmem>>, vector<1x32x32xbf16>
    %106 = vector.shape_cast %105 : vector<1x32x32xbf16> to vector<32x32xbf16>
    %cst_84 = arith.constant dense<0.000000e+00> : vector<128x32xf32>
    %107 = tpu.matmul %104, %106, %cst_84 {dimension_numbers = #tpu.dot_dimension_numbers<[1], [0], [0], [1], [0, 0, 1, 1], [], []>} : vector<128x32xbf16>, vector<32x32xbf16>, vector<128x32xf32> -> vector<128x32xf32>
    %108 = arith.addf %102, %107 : vector<128x32xf32>
    %c0_85 = arith.constant 0 : index
    %c1_86 = arith.constant 1 : index
    %c0_87 = arith.constant 0 : index
    %109 = vector.load %arg8[%c0_85, %c1_86, %c0_87] : memref<10x18x32xbf16, #tpu.memory_space<vmem>>, vector<8x16x32xbf16>
    %110 = vector.shape_cast %109 : vector<8x16x32xbf16> to vector<128x32xbf16>
    %c1_88 = arith.constant 1 : index
    %c0_89 = arith.constant 0 : index
    %c0_90 = arith.constant 0 : index
    %111 = vector.load %arg5[%c1_88, %c0_89, %c0_90] : memref<9x32x32xbf16, #tpu.memory_space<vmem>>, vector<1x32x32xbf16>
    %112 = vector.shape_cast %111 : vector<1x32x32xbf16> to vector<32x32xbf16>
    %cst_91 = arith.constant dense<0.000000e+00> : vector<128x32xf32>
    %113 = tpu.matmul %110, %112, %cst_91 {dimension_numbers = #tpu.dot_dimension_numbers<[1], [0], [0], [1], [0, 0, 1, 1], [], []>} : vector<128x32xbf16>, vector<32x32xbf16>, vector<128x32xf32> -> vector<128x32xf32>
    %114 = arith.addf %108, %113 : vector<128x32xf32>
    %c0_92 = arith.constant 0 : index
    %c2_93 = arith.constant 2 : index
    %c0_94 = arith.constant 0 : index
    %115 = vector.load %arg8[%c0_92, %c2_93, %c0_94] : memref<10x18x32xbf16, #tpu.memory_space<vmem>>, vector<8x16x32xbf16>
    %116 = vector.shape_cast %115 : vector<8x16x32xbf16> to vector<128x32xbf16>
    %c2_95 = arith.constant 2 : index
    %c0_96 = arith.constant 0 : index
    %c0_97 = arith.constant 0 : index
    %117 = vector.load %arg5[%c2_95, %c0_96, %c0_97] : memref<9x32x32xbf16, #tpu.memory_space<vmem>>, vector<1x32x32xbf16>
    %118 = vector.shape_cast %117 : vector<1x32x32xbf16> to vector<32x32xbf16>
    %cst_98 = arith.constant dense<0.000000e+00> : vector<128x32xf32>
    %119 = tpu.matmul %116, %118, %cst_98 {dimension_numbers = #tpu.dot_dimension_numbers<[1], [0], [0], [1], [0, 0, 1, 1], [], []>} : vector<128x32xbf16>, vector<32x32xbf16>, vector<128x32xf32> -> vector<128x32xf32>
    %120 = arith.addf %114, %119 : vector<128x32xf32>
    %c1_99 = arith.constant 1 : index
    %c0_100 = arith.constant 0 : index
    %c0_101 = arith.constant 0 : index
    %121 = vector.load %arg8[%c1_99, %c0_100, %c0_101] : memref<10x18x32xbf16, #tpu.memory_space<vmem>>, vector<8x16x32xbf16>
    %122 = vector.shape_cast %121 : vector<8x16x32xbf16> to vector<128x32xbf16>
    %c3_102 = arith.constant 3 : index
    %c0_103 = arith.constant 0 : index
    %c0_104 = arith.constant 0 : index
    %123 = vector.load %arg5[%c3_102, %c0_103, %c0_104] : memref<9x32x32xbf16, #tpu.memory_space<vmem>>, vector<1x32x32xbf16>
    %124 = vector.shape_cast %123 : vector<1x32x32xbf16> to vector<32x32xbf16>
    %cst_105 = arith.constant dense<0.000000e+00> : vector<128x32xf32>
    %125 = tpu.matmul %122, %124, %cst_105 {dimension_numbers = #tpu.dot_dimension_numbers<[1], [0], [0], [1], [0, 0, 1, 1], [], []>} : vector<128x32xbf16>, vector<32x32xbf16>, vector<128x32xf32> -> vector<128x32xf32>
    %126 = arith.addf %120, %125 : vector<128x32xf32>
    %c1_106 = arith.constant 1 : index
    %c1_107 = arith.constant 1 : index
    %c0_108 = arith.constant 0 : index
    %127 = vector.load %arg8[%c1_106, %c1_107, %c0_108] : memref<10x18x32xbf16, #tpu.memory_space<vmem>>, vector<8x16x32xbf16>
    %128 = vector.shape_cast %127 : vector<8x16x32xbf16> to vector<128x32xbf16>
    %c4_109 = arith.constant 4 : index
    %c0_110 = arith.constant 0 : index
    %c0_111 = arith.constant 0 : index
    %129 = vector.load %arg5[%c4_109, %c0_110, %c0_111] : memref<9x32x32xbf16, #tpu.memory_space<vmem>>, vector<1x32x32xbf16>
    %130 = vector.shape_cast %129 : vector<1x32x32xbf16> to vector<32x32xbf16>
    %cst_112 = arith.constant dense<0.000000e+00> : vector<128x32xf32>
    %131 = tpu.matmul %128, %130, %cst_112 {dimension_numbers = #tpu.dot_dimension_numbers<[1], [0], [0], [1], [0, 0, 1, 1], [], []>} : vector<128x32xbf16>, vector<32x32xbf16>, vector<128x32xf32> -> vector<128x32xf32>
    %132 = arith.addf %126, %131 : vector<128x32xf32>
    %c1_113 = arith.constant 1 : index
    %c2_114 = arith.constant 2 : index
    %c0_115 = arith.constant 0 : index
    %133 = vector.load %arg8[%c1_113, %c2_114, %c0_115] : memref<10x18x32xbf16, #tpu.memory_space<vmem>>, vector<8x16x32xbf16>
    %134 = vector.shape_cast %133 : vector<8x16x32xbf16> to vector<128x32xbf16>
    %c5_116 = arith.constant 5 : index
    %c0_117 = arith.constant 0 : index
    %c0_118 = arith.constant 0 : index
    %135 = vector.load %arg5[%c5_116, %c0_117, %c0_118] : memref<9x32x32xbf16, #tpu.memory_space<vmem>>, vector<1x32x32xbf16>
    %136 = vector.shape_cast %135 : vector<1x32x32xbf16> to vector<32x32xbf16>
    %cst_119 = arith.constant dense<0.000000e+00> : vector<128x32xf32>
    %137 = tpu.matmul %134, %136, %cst_119 {dimension_numbers = #tpu.dot_dimension_numbers<[1], [0], [0], [1], [0, 0, 1, 1], [], []>} : vector<128x32xbf16>, vector<32x32xbf16>, vector<128x32xf32> -> vector<128x32xf32>
    %138 = arith.addf %132, %137 : vector<128x32xf32>
    %c2_120 = arith.constant 2 : index
    %c0_121 = arith.constant 0 : index
    %c0_122 = arith.constant 0 : index
    %139 = vector.load %arg8[%c2_120, %c0_121, %c0_122] : memref<10x18x32xbf16, #tpu.memory_space<vmem>>, vector<8x16x32xbf16>
    %140 = vector.shape_cast %139 : vector<8x16x32xbf16> to vector<128x32xbf16>
    %c6_123 = arith.constant 6 : index
    %c0_124 = arith.constant 0 : index
    %c0_125 = arith.constant 0 : index
    %141 = vector.load %arg5[%c6_123, %c0_124, %c0_125] : memref<9x32x32xbf16, #tpu.memory_space<vmem>>, vector<1x32x32xbf16>
    %142 = vector.shape_cast %141 : vector<1x32x32xbf16> to vector<32x32xbf16>
    %cst_126 = arith.constant dense<0.000000e+00> : vector<128x32xf32>
    %143 = tpu.matmul %140, %142, %cst_126 {dimension_numbers = #tpu.dot_dimension_numbers<[1], [0], [0], [1], [0, 0, 1, 1], [], []>} : vector<128x32xbf16>, vector<32x32xbf16>, vector<128x32xf32> -> vector<128x32xf32>
    %144 = arith.addf %138, %143 : vector<128x32xf32>
    %c2_127 = arith.constant 2 : index
    %c1_128 = arith.constant 1 : index
    %c0_129 = arith.constant 0 : index
    %145 = vector.load %arg8[%c2_127, %c1_128, %c0_129] : memref<10x18x32xbf16, #tpu.memory_space<vmem>>, vector<8x16x32xbf16>
    %146 = vector.shape_cast %145 : vector<8x16x32xbf16> to vector<128x32xbf16>
    %c7_130 = arith.constant 7 : index
    %c0_131 = arith.constant 0 : index
    %c0_132 = arith.constant 0 : index
    %147 = vector.load %arg5[%c7_130, %c0_131, %c0_132] : memref<9x32x32xbf16, #tpu.memory_space<vmem>>, vector<1x32x32xbf16>
    %148 = vector.shape_cast %147 : vector<1x32x32xbf16> to vector<32x32xbf16>
    %cst_133 = arith.constant dense<0.000000e+00> : vector<128x32xf32>
    %149 = tpu.matmul %146, %148, %cst_133 {dimension_numbers = #tpu.dot_dimension_numbers<[1], [0], [0], [1], [0, 0, 1, 1], [], []>} : vector<128x32xbf16>, vector<32x32xbf16>, vector<128x32xf32> -> vector<128x32xf32>
    %150 = arith.addf %144, %149 : vector<128x32xf32>
    %c2_134 = arith.constant 2 : index
    %c2_135 = arith.constant 2 : index
    %c0_136 = arith.constant 0 : index
    %151 = vector.load %arg8[%c2_134, %c2_135, %c0_136] : memref<10x18x32xbf16, #tpu.memory_space<vmem>>, vector<8x16x32xbf16>
    %152 = vector.shape_cast %151 : vector<8x16x32xbf16> to vector<128x32xbf16>
    %c8_137 = arith.constant 8 : index
    %c0_138 = arith.constant 0 : index
    %c0_139 = arith.constant 0 : index
    %153 = vector.load %arg5[%c8_137, %c0_138, %c0_139] : memref<9x32x32xbf16, #tpu.memory_space<vmem>>, vector<1x32x32xbf16>
    %154 = vector.shape_cast %153 : vector<1x32x32xbf16> to vector<32x32xbf16>
    %cst_140 = arith.constant dense<0.000000e+00> : vector<128x32xf32>
    %155 = tpu.matmul %152, %154, %cst_140 {dimension_numbers = #tpu.dot_dimension_numbers<[1], [0], [0], [1], [0, 0, 1, 1], [], []>} : vector<128x32xbf16>, vector<32x32xbf16>, vector<128x32xf32> -> vector<128x32xf32>
    %156 = arith.addf %150, %155 : vector<128x32xf32>
    %c0_141 = arith.constant 0 : index
    %c0_142 = arith.constant 0 : index
    %157 = vector.load %arg6[%c0_141, %c0_142] : memref<1x32xf32, #tpu.memory_space<vmem>>, vector<1x32xf32>
    %158 = vector.broadcast %157 : vector<1x32xf32> to vector<128x32xf32>
    %159 = arith.addf %156, %158 : vector<128x32xf32>
    %cst_143 = arith.constant 0.000000e+00 : f32
    %160 = vector.broadcast %cst_143 : f32 to vector<128x32xf32>
    %161 = arith.maximumf %159, %160 : vector<128x32xf32>
    %162 = vector.shape_cast %161 : vector<128x32xf32> to vector<1x8x16x32xf32>
    %c0_144 = arith.constant 0 : index
    %c0_145 = arith.constant 0 : index
    %c0_146 = arith.constant 0 : index
    %c0_147 = arith.constant 0 : index
    %163 = vector.load %arg7[%c0_144, %c0_145, %c0_146, %c0_147] : memref<1x8x16x32xf32, #tpu.memory_space<vmem>>, vector<1x8x16x32xf32>
    tpu.vector_store %arg7[%c0_144, %c0_145, %c0_146, %c0_147], %162 {strides = array<i32>} : memref<1x8x16x32xf32, #tpu.memory_space<vmem>>, vector<1x8x16x32xf32>,
    return
  }
  func.func @transform_0(%arg0: i32, %arg1: i32) -> (i32, i32, i32, i32) {
    %c0_i32 = arith.constant 0 : i32
    %c0_i32_0 = arith.constant 0 : i32
    %c0_i32_1 = arith.constant 0 : i32
    %c0_i32_2 = arith.constant 0 : i32
    return %arg0, %c0_i32, %c0_i32_0, %c0_i32_1 : i32, i32, i32, i32
  }
  func.func @transform_1(%arg0: i32, %arg1: i32) -> (i32, i32, i32) {
    %c0_i32 = arith.constant 0 : i32
    %c0_i32_0 = arith.constant 0 : i32
    %c0_i32_1 = arith.constant 0 : i32
    %c0_i32_2 = arith.constant 0 : i32
    return %c0_i32, %c0_i32_0, %c0_i32_1 : i32, i32, i32
  }
  func.func @transform_2(%arg0: i32, %arg1: i32) -> (i32, i32) {
    %c0_i32 = arith.constant 0 : i32
    %c0_i32_0 = arith.constant 0 : i32
    %c0_i32_1 = arith.constant 0 : i32
    return %c0_i32, %c0_i32_0 : i32, i32
  }
  func.func @transform_3(%arg0: i32, %arg1: i32) -> (i32, i32, i32) {
    %c0_i32 = arith.constant 0 : i32
    %c0_i32_0 = arith.constant 0 : i32
    %c0_i32_1 = arith.constant 0 : i32
    %c0_i32_2 = arith.constant 0 : i32
    return %c0_i32, %c0_i32_0, %c0_i32_1 : i32, i32, i32
  }
  func.func @transform_4(%arg0: i32, %arg1: i32) -> (i32, i32) {
    %c0_i32 = arith.constant 0 : i32
    %c0_i32_0 = arith.constant 0 : i32
    %c0_i32_1 = arith.constant 0 : i32
    return %c0_i32, %c0_i32_0 : i32, i32
  }
  func.func @transform_5(%arg0: i32, %arg1: i32) -> (i32, i32, i32, i32) {
    %c0_i32 = arith.constant 0 : i32
    %c0_i32_0 = arith.constant 0 : i32
    %c0_i32_1 = arith.constant 0 : i32
    return %arg0, %arg1, %c0_i32, %c0_i32_0 : i32, i32, i32, i32
  }
}

</mosaic_0001>

<llo_original>
// kernel: double_conv.1
$region0: #{double_conv.1}
  #allocation0 [shape = 'u32[]', space=smem, size = 0x4, offset = 0x4, fixed_abs, tag = 'smem constant byte address 0x4 - core index']
  #allocation1 [shape = 'u32[144,128]{1,0:T(1,128)}', space=vmem, size = 0x12000, scoped, tag = 'internal scratch']
  #allocation2 [shape = 'bf16[10,18,32]{2,1,0:T(8,128)(2,1)}', space=vmem, size = 0xf000, scoped, tag = 'scratch operand']
  %s0 = inlined_call_operand.vmem [shape: bf16[2,20,18,4], index: 0, kind: input, shape index: {}]
  %s1 = inlined_call_operand.vmem [shape: bf16[9,4,32], index: 1, kind: input, shape index: {}]
  %s2 = inlined_call_operand.vmem [shape: f32[1,32], index: 2, kind: input, shape index: {}]
  %s3 = inlined_call_operand.vmem [shape: bf16[9,32,32], index: 3, kind: input, shape index: {}]
  %s4 = inlined_call_operand.vmem [shape: f32[1,32], index: 4, kind: input, shape index: {}]
  %s5 = inlined_call_operand.hbm [shape: f32[2,16,16,32], index: 5, kind: output, shape index: {}]
  %s6 = sld [smem:[#allocation0]]
  $region61: #{double_conv.1} parent=0
    _
  %s8 = ssub.s32 1, %s6
  %s9 = scalar_select 0, %s8, %s6
  $region1: #{double_conv.1} parent=0
    #allocation3 [shape = 'u8[131072]{0}', space=vmem, size = 0x20000, scoped, tag = 'output window, operand 0']
    #allocation4 [shape = 's32[2]{0}', space=sflag, size = 0x8, scoped, tag = 'scoped memory for double_conv.1']
    %10 = vsyncpa [#allocation4], 0
    %s11 = scalar_lea.sflag [#allocation4], 1
    %12 = vsyncpa %s11, 0
    loop: start=0, step=1, limit=6
    $region2: #{double_conv.1} parent=1 // loop_pre_header
      _
    $region3: #{double_conv.1} parent=1 // loop_header
      %s14 = sphi 0, %s18
      %p15 = scmp.ge.s32.totalorder %s14, 6
      %s21 = sphi 0, %s33
      %s22 = sphi 0, %s29
      %s23 = sphi 0, %s21
      %s24 = sphi 0, %s22
      %s25 = sphi 0, %s23
      %s26 = sphi 0, %s24
      %s36 = sphi 0, %s38
      %s39 = sphi 0, %s36
      %s40 = sphi 0, %s39
      %s56 = sphi 0, %s40
      %s60 = sphi 0, %s60
      %s62 = sphi 0, %s60
      %s63 = sphi 0, %s62
      %s77 = sphi 0, %s63
      %s81 = sphi 0, %s81
      %s83 = sphi 0, %s81
      %s84 = sphi 0, %s83
      %s98 = sphi 0, %s84
      %s102 = sphi 0, %s102
      %s104 = sphi 0, %s102
      %s105 = sphi 0, %s104
      %s119 = sphi 0, %s105
      %s123 = sphi 0, %s123
      %s125 = sphi 0, %s123
      %s126 = sphi 0, %s125
      %s140 = sphi 0, %s126
      %s148 = sphi 0, %s150
      %s151 = sphi 0, %s148
      %s152 = sphi 0, %s151
      %s168 = sphi 0, %s152
    $region4: #{double_conv.1} parent=1 // loop_header_branch
      %17 = sbr.rel (%p15) target = $region8
    $region5: #{double_conv.1} parent=1 // loop_body
      %s19 = ssub.s32 %s14, 1
      %s20 = ssub.s32 %s14, 2
      %s27 = sadd.s32 1, %s22
      %p28 = scmp.ge.s32.totalorder %s27, 2
      %s29 = scalar_select %p28, 0, %s27
      %s30 = sadd.s32 1, %s21
      %s31 = scalar_select %p28, %s30, %s21
      %p32 = scmp.ge.s32.totalorder %s31, 2
      %s33 = scalar_select %p32, 0, %s31
      %s34 = ssub.s32 %s21, %s33
      %p35 = scmp.eq.s32.totalorder %s34, 0
      %s37 = sadd.s32 %s36, 1
      %s38 = scalar_select %p35, %s36, %s37
      %p41 = pneg %p35
      %p42 = scmp.eq.s32.totalorder %s14, 3
      %p43 = por %p41, %p42
      %p44 = scmp.ne.s32.totalorder %s36, %s39
      %p45 = scmp.eq.s32.totalorder %s14, 0
      %p46 = por %p44, %p45
      %p47 = scmp.ne.s32.totalorder %s36, %s39
      %p48 = scmp.eq.s32.totalorder %s19, 3
      %p49 = por %p47, %p48
      %p50 = scmp.ne.s32.totalorder %s39, %s40
      %p51 = scmp.eq.s32.totalorder %s19, 0
      %p52 = por %p50, %p51
      %p53 = scmp.ne.s32.totalorder %s39, %s40
      %p54 = scmp.eq.s32.totalorder %s20, 3
      %p55 = por %p53, %p54
      %p57 = scmp.ne.s32.totalorder %s40, %s56
      %p58 = scmp.eq.s32.totalorder %s20, 0
      %p59 = por %p57, %p58
      %s61 = sadd.s32 %s60, 1
      %p64 = scmp.eq.s32.totalorder %s14, 3
      %p65 = scmp.ne.s32.totalorder %s60, %s62
      %p66 = scmp.eq.s32.totalorder %s14, 0
      %p67 = por %p65, %p66
      %p68 = scmp.ne.s32.totalorder %s60, %s62
      %p69 = scmp.eq.s32.totalorder %s19, 3
      %p70 = por %p68, %p69
      %p71 = scmp.ne.s32.totalorder %s62, %s63
      %p72 = scmp.eq.s32.totalorder %s19, 0
      %p73 = por %p71, %p72
      %p74 = scmp.ne.s32.totalorder %s62, %s63
      %p75 = scmp.eq.s32.totalorder %s20, 3
      %p76 = por %p74, %p75
      %p78 = scmp.ne.s32.totalorder %s63, %s77
      %p79 = scmp.eq.s32.totalorder %s20, 0
      %p80 = por %p78, %p79
      %s82 = sadd.s32 %s81, 1
      %p85 = scmp.eq.s32.totalorder %s14, 3
      %p86 = scmp.ne.s32.totalorder %s81, %s83
      %p87 = scmp.eq.s32.totalorder %s14, 0
      %p88 = por %p86, %p87
      %p89 = scmp.ne.s32.totalorder %s81, %s83
      %p90 = scmp.eq.s32.totalorder %s19, 3
      %p91 = por %p89, %p90
      %p92 = scmp.ne.s32.totalorder %s83, %s84
      %p93 = scmp.eq.s32.totalorder %s19, 0
      %p94 = por %p92, %p93
      %p95 = scmp.ne.s32.totalorder %s83, %s84
      %p96 = scmp.eq.s32.totalorder %s20, 3
      %p97 = por %p95, %p96
      %p99 = scmp.ne.s32.totalorder %s84, %s98
      %p100 = scmp.eq.s32.totalorder %s20, 0
      %p101 = por %p99, %p100
      %s103 = sadd.s32 %s102, 1
      %p106 = scmp.eq.s32.totalorder %s14, 3
      %p107 = scmp.ne.s32.totalorder %s102, %s104
      %p108 = scmp.eq.s32.totalorder %s14, 0
      %p109 = por %p107, %p108
      %p110 = scmp.ne.s32.totalorder %s102, %s104
      %p111 = scmp.eq.s32.totalorder %s19, 3
      %p112 = por %p110, %p111
      %p113 = scmp.ne.s32.totalorder %s104, %s105
      %p114 = scmp.eq.s32.totalorder %s19, 0
      %p115 = por %p113, %p114
      %p116 = scmp.ne.s32.totalorder %s104, %s105
      %p117 = scmp.eq.s32.totalorder %s20, 3
      %p118 = por %p116, %p117
      %p120 = scmp.ne.s32.totalorder %s105, %s119
      %p121 = scmp.eq.s32.totalorder %s20, 0
      %p122 = por %p120, %p121
      %s124 = sadd.s32 %s123, 1
      %p127 = scmp.eq.s32.totalorder %s14, 3
      %p128 = scmp.ne.s32.totalorder %s123, %s125
      %p129 = scmp.eq.s32.totalorder %s14, 0
      %p130 = por %p128, %p129
      %p131 = scmp.ne.s32.totalorder %s123, %s125
      %p132 = scmp.eq.s32.totalorder %s19, 3
      %p133 = por %p131, %p132
      %p134 = scmp.ne.s32.totalorder %s125, %s126
      %p135 = scmp.eq.s32.totalorder %s19, 0
      %p136 = por %p134, %p135
      %p137 = scmp.ne.s32.totalorder %s125, %s126
      %p138 = scmp.eq.s32.totalorder %s20, 3
      %p139 = por %p137, %p138
      %p141 = scmp.ne.s32.totalorder %s126, %s140
      %p142 = scmp.eq.s32.totalorder %s20, 0
      %p143 = por %p141, %p142
      %s144 = ssub.s32 %s21, %s33
      %s145 = ssub.s32 %s22, %s29
      %s146 = sor.u32 %s144, %s145
      %p147 = scmp.eq.s32.totalorder %s146, 0
      %s149 = sadd.s32 %s148, 1
      %s150 = scalar_select %p147, %s148, %s149
      %p153 = pneg %p147
      %p154 = scmp.eq.s32.totalorder %s14, 3
      %p155 = por %p153, %p154
      %p156 = scmp.ne.s32.totalorder %s148, %s151
      %p157 = scmp.eq.s32.totalorder %s14, 0
      %p158 = por %p156, %p157
      %p159 = scmp.ne.s32.totalorder %s148, %s151
      %p160 = scmp.eq.s32.totalorder %s19, 3
      %p161 = por %p159, %p160
      %p162 = scmp.ne.s32.totalorder %s151, %s152
      %p163 = scmp.eq.s32.totalorder %s19, 0
      %p164 = por %p162, %p163
      %p165 = scmp.ne.s32.totalorder %s151, %s152
      %p166 = scmp.eq.s32.totalorder %s20, 3
      %p167 = por %p165, %p166
      %p169 = scmp.ne.s32.totalorder %s152, %s168
      %p170 = scmp.eq.s32.totalorder %s20, 0
      %p171 = por %p169, %p170
      %p172 = scmp.le.s32.totalorder 1, %s14
      %p173 = scmp.lt.s32.totalorder %s14, 5
      %p174 = pnand %p172, %p173
      %p175 = pneg %p174
      // Predicated region
      $region9: #{double_conv.1} parent=5 // pred_check
        _
      $region10: #{double_conv.1} parent=5 // pred_check_branch
        %177 = sbr.rel (%p174) target = $region12
      $region11: #{double_conv.1} parent=5 // pred_region
        %s178 = ssub.s32 %s14, 1
        // Predicated region
        $region13: #{double_conv.1} parent=11 // pred_check
          %p179 = pneg %p73
        $region14: #{double_conv.1} parent=11 // pred_check_branch
          %181 = sbr.rel (%p179) target = $region16
        $region15: #{double_conv.1} parent=11 // pred_region
          _
        $region16: #{double_conv.1} parent=11 // pred_fallthru
          _
        // Predicated region
        $region17: #{double_conv.1} parent=11 // pred_check
          %p182 = pneg %p94
        $region18: #{double_conv.1} parent=11 // pred_check_branch
          %184 = sbr.rel (%p182) target = $region20
        $region19: #{double_conv.1} parent=11 // pred_region
          _
        $region20: #{double_conv.1} parent=11 // pred_fallthru
          _
        // Predicated region
        $region21: #{double_conv.1} parent=11 // pred_check
          %p185 = pneg %p115
        $region22: #{double_conv.1} parent=11 // pred_check_branch
          %187 = sbr.rel (%p185) target = $region24
        $region23: #{double_conv.1} parent=11 // pred_region
          _
        $region24: #{double_conv.1} parent=11 // pred_fallthru
          _
        // Predicated region
        $region25: #{double_conv.1} parent=11 // pred_check
          %p188 = pneg %p136
        $region26: #{double_conv.1} parent=11 // pred_check_branch
          %190 = sbr.rel (%p188) target = $region28
        $region27: #{double_conv.1} parent=11 // pred_region
          _
        $region28: #{double_conv.1} parent=11 // pred_fallthru
          _
      $region12: #{double_conv.1} parent=5 // pred_fallthru
        _
      %p191 = scmp.lt.s32.totalorder %s14, 4
      // Predicated region
      $region29: #{double_conv.1} parent=5 // pred_check
        %p192 = pneg %p191
      $region30: #{double_conv.1} parent=5 // pred_check_branch
        %194 = sbr.rel (%p192) target = $region32
      $region31: #{double_conv.1} parent=5 // pred_region
        // Predicated region
        $region33: #{double_conv.1} parent=31 // pred_check
          %p195 = pneg %p46
        $region34: #{double_conv.1} parent=31 // pred_check_branch
          %197 = sbr.rel (%p195) target = $region36
        $region35: #{double_conv.1} parent=31 // pred_region
          %p198 = scmp.lt.s32.totalorder %s21, 1
          %s199 = scalar_select %p198, %s21, 1
          %s200 = smul.addr %s199, 60
          %s201 = smul.addr %s200, 4
          %s202 = scalar_lea.vmem %s0, %s201
        $region36: #{double_conv.1} parent=31 // pred_fallthru
          _
      $region32: #{double_conv.1} parent=5 // pred_fallthru
        _
      %p203 = scmp.le.s32.totalorder 1, %s14
      %p204 = scmp.lt.s32.totalorder %s14, 5
      %p205 = pnand %p203, %p204
      %p206 = pneg %p205
      // Predicated region
      $region37: #{double_conv.1} parent=5 // pred_check
        _
      $region38: #{double_conv.1} parent=5 // pred_check_branch
        %208 = sbr.rel (%p205) target = $region40
      $region39: #{double_conv.1} parent=5 // pred_region
        %s209 = ssub.s32 %s14, 1
        %p210 = scmp.lt.s32.totalorder %s23, 1
        %s211 = scalar_select %p210, %s23, 1
        %s212 = smul.addr %s211, 60
        %s213 = smul.addr %s212, 4
        %s214 = scalar_lea.vmem %s0, %s213
        %p215 = pneg %p52
        %p216 = pneg %p49
        %p217 = pneg %p73
        %p218 = pneg %p70
        %p219 = pneg %p94
        %p220 = pneg %p91
        %p221 = pneg %p115
        %p222 = pneg %p112
        %p223 = pneg %p136
        %p224 = pneg %p133
        %p225 = pneg %p164
        %p226 = pneg %p161
        %s227 = sand.u32 %s151, 1
        %s228 = scalar_lea.sflag [#allocation4], %s227
        %s229 = sand.u32 %s151, 1
        %s230 = smul.addr %s229, 128
        %s231 = scalar_lea.vmem [#allocation3], %s230
        %p232 = scmp.lt.s32.totalorder %s23, 1
        %s233 = scalar_select %p232, %s23, 1
        %s234 = smul.addr %s233, 60
        %s235 = smul.addr %s234, 4
        %s236 = scalar_lea.vmem %s0, %s235
        %s237 = smul.u32 8, %s24
        %s239 = smul.u32 %s24, 8
        %s240 = smul.u32 %s239, 3
        %s241 = smul.addr %s240, 4
        %s242 = scalar_lea.vmem %s236, %s241
        %v243 = vld [vmem:[%s242] sm:$0xf]
        %v244 = vld [vmem:[%s242 + $0x4] sm:$0xf]
        %v245 = vld [vmem:[%s242 + $0xc] sm:$0xf]
        %v246 = vld [vmem:[%s242 + $0x10] sm:$0xf]
        %v247 = vld [vmem:[%s242 + $0x18] sm:$0xf]
        %v248 = vld [vmem:[%s242 + $0x1c] sm:$0xf]
        %v249 = vld [vmem:[%s242 + $0x24] sm:$0xf]
        %v250 = vld [vmem:[%s242 + $0x28] sm:$0xf]
        %v251 = vld [vmem:[%s242 + $0x30] sm:$0xf]
        %v252 = vld [vmem:[%s242 + $0x34] sm:$0xf]
        %v253 = vld [vmem:[%s242 + $0x3c] sm:$0xf]
        %v254 = vld [vmem:[%s242 + $0x40] sm:$0xf]
        %v255 = vld [vmem:[%s242 + $0x48] sm:$0xf]
        %v256 = vld [vmem:[%s242 + $0x4c] sm:$0xf]
        %v257 = vld [vmem:[%s242 + $0x54] sm:$0xf]
        %v258 = vld [vmem:[%s242 + $0x58] sm:$0xf]
        %v259 = vld [vmem:[%s242 + $0x60] sm:$0xf]
        %v260 = vld [vmem:[%s242 + $0x64] sm:$0xf]
        %v261 = vld [vmem:[%s242 + $0x6c] sm:$0xf]
        %v262 = vld [vmem:[%s242 + $0x70] sm:$0xf]
        %v263 = vld [vmem:[%s1] sm:$0x3]
        %v264 = vld [vmem:[%s242 + $0x8] sm:$0x1]
        %v265 = vld [vmem:[%s242 + $0x14] sm:$0x1]
        %v266 = vld [vmem:[%s242 + $0x20] sm:$0x1]
        %v267 = vld [vmem:[%s242 + $0x2c] sm:$0x1]
        %v268 = vld [vmem:[%s242 + $0x38] sm:$0x1]
        %v269 = vld [vmem:[%s242 + $0x44] sm:$0x1]
        %v270 = vld [vmem:[%s242 + $0x50] sm:$0x1]
        %v271 = vld [vmem:[%s242 + $0x5c] sm:$0x1]
        %v272 = vld [vmem:[%s242 + $0x68] sm:$0x1]
        %v273 = vld [vmem:[%s242 + $0x74] sm:$0x1]
        %vm274 = vsmask.f32 3328
        %vm275 = vsmask.f32 7440
        %vm276 = vmor %vm274, %vm275
        %v278 = vshrl.u32 %v243, 16
        %v280 = vrot.slane %v278, 4
        %v281 = vshll.u32 %v243, 16
        %v283 = vrot.slane %v281, 5
        %v284 = vor.u32 %v280, %v283
        %v285 = vrot.slane %v284, 4
        %v287 = vshll.u32 %v244, 16
        %v289 = vrot.slane %v287, 5
        %v290 = vsel %vm276, %v285, %v289
        %v291 = vshrl.u32 %v244, 16
        %v293 = vrot.slane %v291, 4
        %v294 = vor.u32 %v293, %v289
        %v295 = vrot.slane %v294, 4
        %v297 = vshll.u32 %v264, 16
        %v299 = vrot.slane %v297, 5
        %v300 = vsel %vm276, %v295, %v299
        %v302 = vshrl.u32 %v245, 16
        %v304 = vrot.slane %v302, 4
        %v305 = vshll.u32 %v245, 16
        %v307 = vrot.slane %v305, 5
        %v308 = vor.u32 %v304, %v307
        %v309 = vrot.slane %v308, 4
        %v311 = vshll.u32 %v246, 16
        %v313 = vrot.slane %v311, 5
        %v314 = vsel %vm276, %v309, %v313
        %v315 = vshrl.u32 %v246, 16
        %v317 = vrot.slane %v315, 4
        %v318 = vor.u32 %v317, %v313
        %v319 = vrot.slane %v318, 4
        %v321 = vshll.u32 %v265, 16
        %v323 = vrot.slane %v321, 5
        %v324 = vsel %vm276, %v319, %v323
        %v326 = vshrl.u32 %v247, 16
        %v328 = vrot.slane %v326, 4
        %v329 = vshll.u32 %v247, 16
        %v331 = vrot.slane %v329, 5
        %v332 = vor.u32 %v328, %v331
        %v333 = vrot.slane %v332, 4
        %v335 = vshll.u32 %v248, 16
        %v337 = vrot.slane %v335, 5
        %v338 = vsel %vm276, %v333, %v337
        %v339 = vshrl.u32 %v248, 16
        %v341 = vrot.slane %v339, 4
        %v342 = vor.u32 %v341, %v337
        %v343 = vrot.slane %v342, 4
        %v345 = vshll.u32 %v266, 16
        %v347 = vrot.slane %v345, 5
        %v348 = vsel %vm276, %v343, %v347
        %v350 = vshrl.u32 %v249, 16
        %v352 = vrot.slane %v350, 4
        %v353 = vshll.u32 %v249, 16
        %v355 = vrot.slane %v353, 5
        %v356 = vor.u32 %v352, %v355
        %v357 = vrot.slane %v356, 4
        %v359 = vshll.u32 %v250, 16
        %v361 = vrot.slane %v359, 5
        %v362 = vsel %vm276, %v357, %v361
        %v363 = vshrl.u32 %v250, 16
        %v365 = vrot.slane %v363, 4
        %v366 = vor.u32 %v365, %v361
        %v367 = vrot.slane %v366, 4
        %v369 = vshll.u32 %v267, 16
        %v371 = vrot.slane %v369, 5
        %v372 = vsel %vm276, %v367, %v371
        %v374 = vshrl.u32 %v251, 16
        %v376 = vrot.slane %v374, 4
        %v377 = vshll.u32 %v251, 16
        %v379 = vrot.slane %v377, 5
        %v380 = vor.u32 %v376, %v379
        %v381 = vrot.slane %v380, 4
        %v383 = vshll.u32 %v252, 16
        %v385 = vrot.slane %v383, 5
        %v386 = vsel %vm276, %v381, %v385
        %v387 = vshrl.u32 %v252, 16
        %v389 = vrot.slane %v387, 4
        %v390 = vor.u32 %v389, %v385
        %v391 = vrot.slane %v390, 4
        %v393 = vshll.u32 %v268, 16
        %v395 = vrot.slane %v393, 5
        %v396 = vsel %vm276, %v391, %v395
        %v398 = vshrl.u32 %v253, 16
        %v400 = vrot.slane %v398, 4
        %v401 = vshll.u32 %v253, 16
        %v403 = vrot.slane %v401, 5
        %v404 = vor.u32 %v400, %v403
        %v405 = vrot.slane %v404, 4
        %v407 = vshll.u32 %v254, 16
        %v409 = vrot.slane %v407, 5
        %v410 = vsel %vm276, %v405, %v409
        %v411 = vshrl.u32 %v254, 16
        %v413 = vrot.slane %v411, 4
        %v414 = vor.u32 %v413, %v409
        %v415 = vrot.slane %v414, 4
        %v417 = vshll.u32 %v269, 16
        %v419 = vrot.slane %v417, 5
        %v420 = vsel %vm276, %v415, %v419
        %v422 = vshrl.u32 %v255, 16
        %v424 = vrot.slane %v422, 4
        %v425 = vshll.u32 %v255, 16
        %v427 = vrot.slane %v425, 5
        %v428 = vor.u32 %v424, %v427
        %v429 = vrot.slane %v428, 4
        %v431 = vshll.u32 %v256, 16
        %v433 = vrot.slane %v431, 5
        %v434 = vsel %vm276, %v429, %v433
        %v435 = vshrl.u32 %v256, 16
        %v437 = vrot.slane %v435, 4
        %v438 = vor.u32 %v437, %v433
        %v439 = vrot.slane %v438, 4
        %v441 = vshll.u32 %v270, 16
        %v443 = vrot.slane %v441, 5
        %v444 = vsel %vm276, %v439, %v443
        %v446 = vshrl.u32 %v257, 16
        %v448 = vrot.slane %v446, 4
        %v449 = vshll.u32 %v257, 16
        %v451 = vrot.slane %v449, 5
        %v452 = vor.u32 %v448, %v451
        %v453 = vrot.slane %v452, 4
        %v455 = vshll.u32 %v258, 16
        %v457 = vrot.slane %v455, 5
        %v458 = vsel %vm276, %v453, %v457
        %v459 = vshrl.u32 %v258, 16
        %v461 = vrot.slane %v459, 4
        %v462 = vor.u32 %v461, %v457
        %v463 = vrot.slane %v462, 4
        %v465 = vshll.u32 %v271, 16
        %v467 = vrot.slane %v465, 5
        %v468 = vsel %vm276, %v463, %v467
        %v470 = vshrl.u32 %v259, 16
        %v472 = vrot.slane %v470, 4
        %v473 = vshll.u32 %v259, 16
        %v475 = vrot.slane %v473, 5
        %v476 = vor.u32 %v472, %v475
        %v477 = vrot.slane %v476, 4
        %v479 = vshll.u32 %v260, 16
        %v481 = vrot.slane %v479, 5
        %v482 = vsel %vm276, %v477, %v481
        %v483 = vshrl.u32 %v260, 16
        %v485 = vrot.slane %v483, 4
        %v486 = vor.u32 %v485, %v481
        %v487 = vrot.slane %v486, 4
        %v489 = vshll.u32 %v272, 16
        %v491 = vrot.slane %v489, 5
        %v492 = vsel %vm276, %v487, %v491
        %v494 = vshrl.u32 %v261, 16
        %v496 = vrot.slane %v494, 4
        %v497 = vshll.u32 %v261, 16
        %v499 = vrot.slane %v497, 5
        %v500 = vor.u32 %v496, %v499
        %v501 = vrot.slane %v500, 4
        %v503 = vshll.u32 %v262, 16
        %v505 = vrot.slane %v503, 5
        %v506 = vsel %vm276, %v501, %v505
        %v507 = vshrl.u32 %v262, 16
        %v509 = vrot.slane %v507, 4
        %v510 = vor.u32 %v509, %v505
        %v511 = vrot.slane %v510, 4
        %v513 = vshll.u32 %v273, 16
        %v515 = vrot.slane %v513, 5
        %v516 = vsel %vm276, %v511, %v515
        %s517 = scalar_lea.vmem %s1, 2
        %v518 = vld [vmem:[%s517] sm:$0x3]
        %v519 = vunpack.c.l.b16 %v290
        %v520 = vunpack.c.l.b16 %v300
        %v521 = vunpack.c.l.b16 %v314
        %v522 = vunpack.c.l.b16 %v324
        %v523 = vunpack.c.l.b16 %v338
        %v524 = vunpack.c.l.b16 %v348
        %v525 = vunpack.c.l.b16 %v362
        %v526 = vunpack.c.l.b16 %v372
        %v527 = vunpack.c.l.b16 %v386
        %v528 = vunpack.c.l.b16 %v396
        %v529 = vunpack.c.l.b16 %v410
        %v530 = vunpack.c.l.b16 %v420
        %v531 = vunpack.c.l.b16 %v434
        %v532 = vunpack.c.l.b16 %v444
        %v533 = vunpack.c.l.b16 %v458
        %v534 = vunpack.c.l.b16 %v468
        %v535 = vunpack.c.l.b16 %v482
        %v536 = vunpack.c.l.b16 %v492
        %v537 = vunpack.c.l.b16 %v506
        %v538 = vunpack.c.l.b16 %v516
        %v539 = vpack.c.b16 %v520, %v519
        %v540 = vpack.c.b16 %v522, %v521
        %v541 = vpack.c.b16 %v524, %v523
        %v542 = vpack.c.b16 %v526, %v525
        %v543 = vpack.c.b16 %v528, %v527
        %v544 = vpack.c.b16 %v530, %v529
        %v545 = vpack.c.b16 %v532, %v531
        %v546 = vpack.c.b16 %v534, %v533
        %v547 = vpack.c.b16 %v536, %v535
        %v548 = vpack.c.b16 %v538, %v537
        %vm549 = vcmask 31744
        %v551 = vsel %vm549, %v539, 0
        %v554 = vsel %vm549, %v540, 0
        %v557 = vsel %vm549, %v541, 0
        %v560 = vsel %vm549, %v542, 0
        %v563 = vsel %vm549, %v543, 0
        %v566 = vsel %vm549, %v544, 0
        %v569 = vsel %vm549, %v545, 0
        %v572 = vsel %vm549, %v546, 0
        %v575 = vsel %vm549, %v547, 0
        %v578 = vsel %vm549, %v548, 0
        %vm580 = vcmask 1041408
        %v582 = vsel %vm580, %v518, 0
        %584 = vmatprep.subr.bf16.mxu0 0
        %585 = vmatpush1.bf16.msra.mxu0 %v582
        %586 = vmatprep.subr.bf16.mxu0 0
        %587 = vmatpush1.bf16.msra.mxu0 0
        %588 = vmatprep.subr.bf16.mxu0 0
        %589 = vmatpush1.bf16.msra.mxu0 0
        %590 = vmatprep.subr.bf16.mxu0 0
        %591 = vmatpush1.bf16.msra.mxu0 0
        %592 = vmatprep.subr.bf16.mxu0 0
        %593 = vmatpush1.bf16.msra.mxu0 0
        %594 = vmatprep.subr.bf16.mxu0 0
        %595 = vmatpush1.bf16.msra.mxu0 0
        %596 = vmatprep.subr.bf16.mxu0 0
        %597 = vmatpush1.bf16.msra.mxu0 0
        %598 = vmatprep.subr.bf16.mxu0 0
        %599 = vmatpush1.bf16.msra.mxu0 0
        %600 = vmatprep.subr.bf16.mxu0 0
        %601 = vmatpush1.bf16.msra.mxu0 0
        %602 = vmatprep.subr.bf16.mxu0 0
        %603 = vmatpush1.bf16.msra.mxu0 0
        %604 = vmatprep.subr.bf16.mxu0 0
        %605 = vmatpush1.bf16.msra.mxu0 0
        %606 = vmatprep.subr.bf16.mxu0 0
        %607 = vmatpush1.bf16.msra.mxu0 0
        %608 = vmatprep.subr.bf16.mxu0 0
        %609 = vmatpush1.bf16.msra.mxu0 0
        %610 = vmatprep.subr.bf16.mxu0 0
        %611 = vmatpush1.bf16.msra.mxu0 0
        %612 = vmatprep.subr.bf16.mxu0 0
        %613 = vmatpush1.bf16.msra.mxu0 0
        %614 = vmatprep.subr.bf16.mxu0 0
        %615 = vmatpush1.bf16.msra.mxu0 0
        %616 = vmatprep.mubr.bf16.mxu0 0
        %617 = vmatmul.mubr.bf16.gmra.mrb[0].mxu0 %v551
        %v618 = vpop.f32.mrb[0].mxu0
        %v619 = vadd.f32 0.0, %v618
        %v620 = vpop.f32.mrb[0].mxu0
        %v621 = vpop.f32.mrb[0].mxu0
        %v622 = vadd.f32 0.0, %v621
        %v623 = vpop.f32.mrb[0].mxu0
        %624 = vmatprep.mubr.bf16.mxu0 0
        %625 = vmatmul.mubr.bf16.gmra.mrb[0].mxu0 %v554
        %v626 = vpop.f32.mrb[0].mxu0
        %v627 = vadd.f32 0.0, %v626
        %v628 = vpop.f32.mrb[0].mxu0
        %v629 = vpop.f32.mrb[0].mxu0
        %v630 = vadd.f32 0.0, %v629
        %v631 = vpop.f32.mrb[0].mxu0
        %632 = vmatprep.mubr.bf16.mxu0 0
        %633 = vmatmul.mubr.bf16.gmra.mrb[0].mxu0 %v557
        %v634 = vpop.f32.mrb[0].mxu0
        %v635 = vadd.f32 0.0, %v634
        %v636 = vpop.f32.mrb[0].mxu0
        %v637 = vpop.f32.mrb[0].mxu0
        %v638 = vadd.f32 0.0, %v637
        %v639 = vpop.f32.mrb[0].mxu0
        %640 = vmatprep.mubr.bf16.mxu0 0
        %641 = vmatmul.mubr.bf16.gmra.mrb[0].mxu0 %v560
        %v642 = vpop.f32.mrb[0].mxu0
        %v643 = vadd.f32 0.0, %v642
        %v644 = vpop.f32.mrb[0].mxu0
        %v645 = vpop.f32.mrb[0].mxu0
        %v646 = vadd.f32 0.0, %v645
        %v647 = vpop.f32.mrb[0].mxu0
        %648 = vmatprep.mubr.bf16.mxu0 0
        %649 = vmatmul.mubr.bf16.gmra.mrb[0].mxu0 %v563
        %v650 = vpop.f32.mrb[0].mxu0
        %v651 = vadd.f32 0.0, %v650
        %v652 = vpop.f32.mrb[0].mxu0
        %v653 = vpop.f32.mrb[0].mxu0
        %v654 = vadd.f32 0.0, %v653
        %v655 = vpop.f32.mrb[0].mxu0
        %656 = vmatprep.mubr.bf16.mxu0 0
        %657 = vmatmul.mubr.bf16.gmra.mrb[0].mxu0 %v566
        %v658 = vpop.f32.mrb[0].mxu0
        %v659 = vadd.f32 0.0, %v658
        %v660 = vpop.f32.mrb[0].mxu0
        %v661 = vpop.f32.mrb[0].mxu0
        %v662 = vadd.f32 0.0, %v661
        %v663 = vpop.f32.mrb[0].mxu0
        %664 = vmatprep.mubr.bf16.mxu0 0
        %665 = vmatmul.mubr.bf16.gmra.mrb[0].mxu0 %v569
        %v666 = vpop.f32.mrb[0].mxu0
        %v667 = vadd.f32 0.0, %v666
        %v668 = vpop.f32.mrb[0].mxu0
        %v669 = vpop.f32.mrb[0].mxu0
        %v670 = vadd.f32 0.0, %v669
        %v671 = vpop.f32.mrb[0].mxu0
        %672 = vmatprep.mubr.bf16.mxu0 0
        %673 = vmatmul.mubr.bf16.gmra.mrb[0].mxu0 %v572
        %v674 = vpop.f32.mrb[0].mxu0
        %v675 = vadd.f32 0.0, %v674
        %v676 = vpop.f32.mrb[0].mxu0
        %v677 = vpop.f32.mrb[0].mxu0
        %v678 = vadd.f32 0.0, %v677
        %v679 = vpop.f32.mrb[0].mxu0
        %680 = vmatprep.mubr.bf16.mxu0 0
        %681 = vmatmul.mubr.bf16.gmra.mrb[0].mxu0 %v575
        %v682 = vpop.f32.mrb[0].mxu0
        %v683 = vadd.f32 0.0, %v682
        %v684 = vpop.f32.mrb[0].mxu0
        %v685 = vpop.f32.mrb[0].mxu0
        %v686 = vadd.f32 0.0, %v685
        %v687 = vpop.f32.mrb[0].mxu0
        %688 = vmatprep.mubr.bf16.mxu0 0
        %689 = vmatmul.mubr.bf16.gmra.mrb[0].mxu0 %v578
        %v690 = vpop.f32.mrb[0].mxu0
        %v691 = vadd.f32 0.0, %v690
        %v692 = vpop.f32.mrb[0].mxu0
        %v693 = vpop.f32.mrb[0].mxu0
        %v694 = vadd.f32 0.0, %v693
        %v695 = vpop.f32.mrb[0].mxu0
        %696 = vdwg.mxu0
        %v717 = vunpack.c.l.b16 %v243
        %v718 = vunpack.c.l.b16 %v244
        %v719 = vunpack.c.l.b16 %v245
        %v720 = vunpack.c.l.b16 %v246
        %v721 = vunpack.c.l.b16 %v247
        %v722 = vunpack.c.l.b16 %v248
        %v723 = vunpack.c.l.b16 %v249
        %v724 = vunpack.c.l.b16 %v250
        %v725 = vunpack.c.l.b16 %v251
        %v726 = vunpack.c.l.b16 %v252
        %v727 = vunpack.c.l.b16 %v253
        %v728 = vunpack.c.l.b16 %v254
        %v729 = vunpack.c.l.b16 %v255
        %v730 = vunpack.c.l.b16 %v256
        %v731 = vunpack.c.l.b16 %v257
        %v732 = vunpack.c.l.b16 %v258
        %v733 = vunpack.c.l.b16 %v259
        %v734 = vunpack.c.l.b16 %v260
        %v735 = vunpack.c.l.b16 %v261
        %v736 = vunpack.c.l.b16 %v262
        %v737 = vpack.c.b16 %v718, %v717
        %v738 = vpack.c.b16 %v720, %v719
        %v739 = vpack.c.b16 %v722, %v721
        %v740 = vpack.c.b16 %v724, %v723
        %v741 = vpack.c.b16 %v726, %v725
        %v742 = vpack.c.b16 %v728, %v727
        %v743 = vpack.c.b16 %v730, %v729
        %v744 = vpack.c.b16 %v732, %v731
        %v745 = vpack.c.b16 %v734, %v733
        %v746 = vpack.c.b16 %v736, %v735
        %v748 = vsel %vm549, %v737, 0
        %v751 = vsel %vm549, %v738, 0
        %v754 = vsel %vm549, %v739, 0
        %v757 = vsel %vm549, %v740, 0
        %v760 = vsel %vm549, %v741, 0
        %v763 = vsel %vm549, %v742, 0
        %v766 = vsel %vm549, %v743, 0
        %v769 = vsel %vm549, %v744, 0
        %v772 = vsel %vm549, %v745, 0
        %v775 = vsel %vm549, %v746, 0
        %v778 = vsel %vm580, %v263, 0
        %780 = vmatprep.subr.bf16.mxu0 0
        %781 = vmatpush1.bf16.msra.mxu0 %v778
        %782 = vmatprep.subr.bf16.mxu0 0
        %783 = vmatpush1.bf16.msra.mxu0 0
        %784 = vmatprep.subr.bf16.mxu0 0
        %785 = vmatpush1.bf16.msra.mxu0 0
        %786 = vmatprep.subr.bf16.mxu0 0
        %787 = vmatpush1.bf16.msra.mxu0 0
        %788 = vmatprep.subr.bf16.mxu0 0
        %789 = vmatpush1.bf16.msra.mxu0 0
        %790 = vmatprep.subr.bf16.mxu0 0
        %791 = vmatpush1.bf16.msra.mxu0 0
        %792 = vmatprep.subr.bf16.mxu0 0
        %793 = vmatpush1.bf16.msra.mxu0 0
        %794 = vmatprep.subr.bf16.mxu0 0
        %795 = vmatpush1.bf16.msra.mxu0 0
        %796 = vmatprep.subr.bf16.mxu0 0
        %797 = vmatpush1.bf16.msra.mxu0 0
        %798 = vmatprep.subr.bf16.mxu0 0
        %799 = vmatpush1.bf16.msra.mxu0 0
        %800 = vmatprep.subr.bf16.mxu0 0
        %801 = vmatpush1.bf16.msra.mxu0 0
        %802 = vmatprep.subr.bf16.mxu0 0
        %803 = vmatpush1.bf16.msra.mxu0 0
        %804 = vmatprep.subr.bf16.mxu0 0
        %805 = vmatpush1.bf16.msra.mxu0 0
        %806 = vmatprep.subr.bf16.mxu0 0
        %807 = vmatpush1.bf16.msra.mxu0 0
        %808 = vmatprep.subr.bf16.mxu0 0
        %809 = vmatpush1.bf16.msra.mxu0 0
        %810 = vmatprep.subr.bf16.mxu0 0
        %811 = vmatpush1.bf16.msra.mxu0 0
        %812 = vmatprep.mubr.bf16.mxu0 0
        %813 = vmatmul.mubr.bf16.gmra.mrb[0].mxu0 %v748
        %v814 = vpop.f32.mrb[0].mxu0
        %v815 = vadd.f32 %v619, %v814
        %v816 = vpop.f32.mrb[0].mxu0
        %v817 = vpop.f32.mrb[0].mxu0
        %v818 = vadd.f32 %v622, %v817
        %v819 = vpop.f32.mrb[0].mxu0
        %820 = vmatprep.mubr.bf16.mxu0 0
        %821 = vmatmul.mubr.bf16.gmra.mrb[0].mxu0 %v751
        %v822 = vpop.f32.mrb[0].mxu0
        %v823 = vadd.f32 %v627, %v822
        %v824 = vpop.f32.mrb[0].mxu0
        %v825 = vpop.f32.mrb[0].mxu0
        %v826 = vadd.f32 %v630, %v825
        %v827 = vpop.f32.mrb[0].mxu0
        %828 = vmatprep.mubr.bf16.mxu0 0
        %829 = vmatmul.mubr.bf16.gmra.mrb[0].mxu0 %v754
        %v830 = vpop.f32.mrb[0].mxu0
        %v831 = vadd.f32 %v635, %v830
        %v832 = vpop.f32.mrb[0].mxu0
        %v833 = vpop.f32.mrb[0].mxu0
        %v834 = vadd.f32 %v638, %v833
        %v835 = vpop.f32.mrb[0].mxu0
        %836 = vmatprep.mubr.bf16.mxu0 0
        %837 = vmatmul.mubr.bf16.gmra.mrb[0].mxu0 %v757
        %v838 = vpop.f32.mrb[0].mxu0
        %v839 = vadd.f32 %v643, %v838
        %v840 = vpop.f32.mrb[0].mxu0
        %v841 = vpop.f32.mrb[0].mxu0
        %v842 = vadd.f32 %v646, %v841
        %v843 = vpop.f32.mrb[0].mxu0
        %844 = vmatprep.mubr.bf16.mxu0 0
        %845 = vmatmul.mubr.bf16.gmra.mrb[0].mxu0 %v760
        %v846 = vpop.f32.mrb[0].mxu0
        %v847 = vadd.f32 %v651, %v846
        %v848 = vpop.f32.mrb[0].mxu0
        %v849 = vpop.f32.mrb[0].mxu0
        %v850 = vadd.f32 %v654, %v849
        %v851 = vpop.f32.mrb[0].mxu0
        %852 = vmatprep.mubr.bf16.mxu0 0
        %853 = vmatmul.mubr.bf16.gmra.mrb[0].mxu0 %v763
        %v854 = vpop.f32.mrb[0].mxu0
        %v855 = vadd.f32 %v659, %v854
        %v856 = vpop.f32.mrb[0].mxu0
        %v857 = vpop.f32.mrb[0].mxu0
        %v858 = vadd.f32 %v662, %v857
        %v859 = vpop.f32.mrb[0].mxu0
        %860 = vmatprep.mubr.bf16.mxu0 0
        %861 = vmatmul.mubr.bf16.gmra.mrb[0].mxu0 %v766
        %v862 = vpop.f32.mrb[0].mxu0
        %v863 = vadd.f32 %v667, %v862
        %v864 = vpop.f32.mrb[0].mxu0
        %v865 = vpop.f32.mrb[0].mxu0
        %v866 = vadd.f32 %v670, %v865
        %v867 = vpop.f32.mrb[0].mxu0
        %868 = vmatprep.mubr.bf16.mxu0 0
        %869 = vmatmul.mubr.bf16.gmra.mrb[0].mxu0 %v769
        %v870 = vpop.f32.mrb[0].mxu0
        %v871 = vadd.f32 %v675, %v870
        %v872 = vpop.f32.mrb[0].mxu0
        %v873 = vpop.f32.mrb[0].mxu0
        %v874 = vadd.f32 %v678, %v873
        %v875 = vpop.f32.mrb[0].mxu0
        %876 = vmatprep.mubr.bf16.mxu0 0
        %877 = vmatmul.mubr.bf16.gmra.mrb[0].mxu0 %v772
        %v878 = vpop.f32.mrb[0].mxu0
        %v879 = vadd.f32 %v683, %v878
        %v880 = vpop.f32.mrb[0].mxu0
        %v881 = vpop.f32.mrb[0].mxu0
        %v882 = vadd.f32 %v686, %v881
        %v883 = vpop.f32.mrb[0].mxu0
        %884 = vmatprep.mubr.bf16.mxu0 0
        %885 = vmatmul.mubr.bf16.gmra.mrb[0].mxu0 %v775
        %v886 = vpop.f32.mrb[0].mxu0
        %v887 = vadd.f32 %v691, %v886
        %v888 = vpop.f32.mrb[0].mxu0
        %v889 = vpop.f32.mrb[0].mxu0
        %v890 = vadd.f32 %v694, %v889
        %v891 = vpop.f32.mrb[0].mxu0
        %892 = vdwg.mxu0
        %v893 = vld [vmem:[%s242] sm:$0xe]
        %v894 = vld [vmem:[%s242 + $0xc] sm:$0xe]
        %v895 = vld [vmem:[%s242 + $0x18] sm:$0xe]
        %v896 = vld [vmem:[%s242 + $0x24] sm:$0xe]
        %v897 = vld [vmem:[%s242 + $0x30] sm:$0xe]
        %v898 = vld [vmem:[%s242 + $0x3c] sm:$0xe]
        %v899 = vld [vmem:[%s242 + $0x48] sm:$0xe]
        %v900 = vld [vmem:[%s242 + $0x54] sm:$0xe]
        %v901 = vld [vmem:[%s242 + $0x60] sm:$0xe]
        %v902 = vld [vmem:[%s242 + $0x6c] sm:$0xe]
        %vm923 = vcmask 1042432
        %vm924 = vcmask 1046532
        %vm925 = vmor %vm923, %vm924
        %v926 = vrot.slane %v893, 5
        %v927 = vrot.slane %v926, 4
        %v928 = vrot.slane %v244, 5
        %v929 = vsel %vm925, %v927, %v928
        %v930 = vrot.slane %v928, 4
        %v931 = vrot.slane %v264, 5
        %v932 = vsel %vm925, %v930, %v931
        %v933 = vrot.slane %v894, 5
        %v934 = vrot.slane %v933, 4
        %v935 = vrot.slane %v246, 5
        %v936 = vsel %vm925, %v934, %v935
        %v937 = vrot.slane %v935, 4
        %v938 = vrot.slane %v265, 5
        %v939 = vsel %vm925, %v937, %v938
        %v940 = vrot.slane %v895, 5
        %v941 = vrot.slane %v940, 4
        %v942 = vrot.slane %v248, 5
        %v943 = vsel %vm925, %v941, %v942
        %v944 = vrot.slane %v942, 4
        %v945 = vrot.slane %v266, 5
        %v946 = vsel %vm925, %v944, %v945
        %v947 = vrot.slane %v896, 5
        %v948 = vrot.slane %v947, 4
        %v949 = vrot.slane %v250, 5
        %v950 = vsel %vm925, %v948, %v949
        %v951 = vrot.slane %v949, 4
        %v952 = vrot.slane %v267, 5
        %v953 = vsel %vm925, %v951, %v952
        %v954 = vrot.slane %v897, 5
        %v955 = vrot.slane %v954, 4
        %v956 = vrot.slane %v252, 5
        %v957 = vsel %vm925, %v955, %v956
        %v958 = vrot.slane %v956, 4
        %v959 = vrot.slane %v268, 5
        %v960 = vsel %vm925, %v958, %v959
        %v961 = vrot.slane %v898, 5
        %v962 = vrot.slane %v961, 4
        %v963 = vrot.slane %v254, 5
        %v964 = vsel %vm925, %v962, %v963
        %v965 = vrot.slane %v963, 4
        %v966 = vrot.slane %v269, 5
        %v967 = vsel %vm925, %v965, %v966
        %v968 = vrot.slane %v899, 5
        %v969 = vrot.slane %v968, 4
        %v970 = vrot.slane %v256, 5
        %v971 = vsel %vm925, %v969, %v970
        %v972 = vrot.slane %v970, 4
        %v973 = vrot.slane %v270, 5
        %v974 = vsel %vm925, %v972, %v973
        %v975 = vrot.slane %v900, 5
        %v976 = vrot.slane %v975, 4
        %v977 = vrot.slane %v258, 5
        %v978 = vsel %vm925, %v976, %v977
        %v979 = vrot.slane %v977, 4
        %v980 = vrot.slane %v271, 5
        %v981 = vsel %vm925, %v979, %v980
        %v982 = vrot.slane %v901, 5
        %v983 = vrot.slane %v982, 4
        %v984 = vrot.slane %v260, 5
        %v985 = vsel %vm925, %v983, %v984
        %v986 = vrot.slane %v984, 4
        %v987 = vrot.slane %v272, 5
        %v988 = vsel %vm925, %v986, %v987
        %v989 = vrot.slane %v902, 5
        %v990 = vrot.slane %v989, 4
        %v991 = vrot.slane %v262, 5
        %v992 = vsel %vm925, %v990, %v991
        %v993 = vrot.slane %v991, 4
        %v994 = vrot.slane %v273, 5
        %v995 = vsel %vm925, %v993, %v994
        %s996 = scalar_lea.vmem %s1, 4
        %v997 = vld [vmem:[%s996] sm:$0x3]
        %v998 = vunpack.c.l.b16 %v929
        %v999 = vunpack.c.l.b16 %v932
        %v1000 = vunpack.c.l.b16 %v936
        %v1001 = vunpack.c.l.b16 %v939
        %v1002 = vunpack.c.l.b16 %v943
        %v1003 = vunpack.c.l.b16 %v946
        %v1004 = vunpack.c.l.b16 %v950
        %v1005 = vunpack.c.l.b16 %v953
        %v1006 = vunpack.c.l.b16 %v957
        %v1007 = vunpack.c.l.b16 %v960
        %v1008 = vunpack.c.l.b16 %v964
        %v1009 = vunpack.c.l.b16 %v967
        %v1010 = vunpack.c.l.b16 %v971
        %v1011 = vunpack.c.l.b16 %v974
        %v1012 = vunpack.c.l.b16 %v978
        %v1013 = vunpack.c.l.b16 %v981
        %v1014 = vunpack.c.l.b16 %v985
        %v1015 = vunpack.c.l.b16 %v988
        %v1016 = vunpack.c.l.b16 %v992
        %v1017 = vunpack.c.l.b16 %v995
        %v1018 = vpack.c.b16 %v999, %v998
        %v1019 = vpack.c.b16 %v1001, %v1000
        %v1020 = vpack.c.b16 %v1003, %v1002
        %v1021 = vpack.c.b16 %v1005, %v1004
        %v1022 = vpack.c.b16 %v1007, %v1006
        %v1023 = vpack.c.b16 %v1009, %v1008
        %v1024 = vpack.c.b16 %v1011, %v1010
        %v1025 = vpack.c.b16 %v1013, %v1012
        %v1026 = vpack.c.b16 %v1015, %v1014
        %v1027 = vpack.c.b16 %v1017, %v1016
        %v1029 = vsel %vm549, %v1018, 0
        %v1032 = vsel %vm549, %v1019, 0
        %v1035 = vsel %vm549, %v1020, 0
        %v1038 = vsel %vm549, %v1021, 0
        %v1041 = vsel %vm549, %v1022, 0
        %v1044 = vsel %vm549, %v1023, 0
        %v1047 = vsel %vm549, %v1024, 0
        %v1050 = vsel %vm549, %v1025, 0
        %v1053 = vsel %vm549, %v1026, 0
        %v1056 = vsel %vm549, %v1027, 0
        %v1059 = vsel %vm580, %v997, 0
        %1061 = vmatprep.subr.bf16.mxu0 0
        %1062 = vmatpush1.bf16.msra.mxu0 %v1059
        %1063 = vmatprep.subr.bf16.mxu0 0
        %1064 = vmatpush1.bf16.msra.mxu0 0
        %1065 = vmatprep.subr.bf16.mxu0 0
        %1066 = vmatpush1.bf16.msra.mxu0 0
        %1067 = vmatprep.subr.bf16.mxu0 0
        %1068 = vmatpush1.bf16.msra.mxu0 0
        %1069 = vmatprep.subr.bf16.mxu0 0
        %1070 = vmatpush1.bf16.msra.mxu0 0
        %1071 = vmatprep.subr.bf16.mxu0 0
        %1072 = vmatpush1.bf16.msra.mxu0 0
        %1073 = vmatprep.subr.bf16.mxu0 0
        %1074 = vmatpush1.bf16.msra.mxu0 0
        %1075 = vmatprep.subr.bf16.mxu0 0
        %1076 = vmatpush1.bf16.msra.mxu0 0
        %1077 = vmatprep.subr.bf16.mxu0 0
        %1078 = vmatpush1.bf16.msra.mxu0 0
        %1079 = vmatprep.subr.bf16.mxu0 0
        %1080 = vmatpush1.bf16.msra.mxu0 0
        %1081 = vmatprep.subr.bf16.mxu0 0
        %1082 = vmatpush1.bf16.msra.mxu0 0
        %1083 = vmatprep.subr.bf16.mxu0 0
        %1084 = vmatpush1.bf16.msra.mxu0 0
        %1085 = vmatprep.subr.bf16.mxu0 0
        %1086 = vmatpush1.bf16.msra.mxu0 0
        %1087 = vmatprep.subr.bf16.mxu0 0
        %1088 = vmatpush1.bf16.msra.mxu0 0
        %1089 = vmatprep.subr.bf16.mxu0 0
        %1090 = vmatpush1.bf16.msra.mxu0 0
        %1091 = vmatprep.subr.bf16.mxu0 0
        %1092 = vmatpush1.bf16.msra.mxu0 0
        %1093 = vmatprep.mubr.bf16.mxu0 0
        %1094 = vmatmul.mubr.bf16.gmra.mrb[0].mxu0 %v1029
        %v1095 = vpop.f32.mrb[0].mxu0
        %v1096 = vadd.f32 0.0, %v1095
        %v1097 = vpop.f32.mrb[0].mxu0
        %v1098 = vpop.f32.mrb[0].mxu0
        %v1099 = vadd.f32 0.0, %v1098
        %v1100 = vpop.f32.mrb[0].mxu0
        %1101 = vmatprep.mubr.bf16.mxu0 0
        %1102 = vmatmul.mubr.bf16.gmra.mrb[0].mxu0 %v1032
        %v1103 = vpop.f32.mrb[0].mxu0
        %v1104 = vadd.f32 0.0, %v1103
        %v1105 = vpop.f32.mrb[0].mxu0
        %v1106 = vpop.f32.mrb[0].mxu0
        %v1107 = vadd.f32 0.0, %v1106
        %v1108 = vpop.f32.mrb[0].mxu0
        %1109 = vmatprep.mubr.bf16.mxu0 0
        %1110 = vmatmul.mubr.bf16.gmra.mrb[0].mxu0 %v1035
        %v1111 = vpop.f32.mrb[0].mxu0
        %v1112 = vadd.f32 0.0, %v1111
        %v1113 = vpop.f32.mrb[0].mxu0
        %v1114 = vpop.f32.mrb[0].mxu0
        %v1115 = vadd.f32 0.0, %v1114
        %v1116 = vpop.f32.mrb[0].mxu0
        %1117 = vmatprep.mubr.bf16.mxu0 0
        %1118 = vmatmul.mubr.bf16.gmra.mrb[0].mxu0 %v1038
        %v1119 = vpop.f32.mrb[0].mxu0
        %v1120 = vadd.f32 0.0, %v1119
        %v1121 = vpop.f32.mrb[0].mxu0
        %v1122 = vpop.f32.mrb[0].mxu0
        %v1123 = vadd.f32 0.0, %v1122
        %v1124 = vpop.f32.mrb[0].mxu0
        %1125 = vmatprep.mubr.bf16.mxu0 0
        %1126 = vmatmul.mubr.bf16.gmra.mrb[0].mxu0 %v1041
        %v1127 = vpop.f32.mrb[0].mxu0
        %v1128 = vadd.f32 0.0, %v1127
        %v1129 = vpop.f32.mrb[0].mxu0
        %v1130 = vpop.f32.mrb[0].mxu0
        %v1131 = vadd.f32 0.0, %v1130
        %v1132 = vpop.f32.mrb[0].mxu0
        %1133 = vmatprep.mubr.bf16.mxu0 0
        %1134 = vmatmul.mubr.bf16.gmra.mrb[0].mxu0 %v1044
        %v1135 = vpop.f32.mrb[0].mxu0
        %v1136 = vadd.f32 0.0, %v1135
        %v1137 = vpop.f32.mrb[0].mxu0
        %v1138 = vpop.f32.mrb[0].mxu0
        %v1139 = vadd.f32 0.0, %v1138
        %v1140 = vpop.f32.mrb[0].mxu0
        %1141 = vmatprep.mubr.bf16.mxu0 0
        %1142 = vmatmul.mubr.bf16.gmra.mrb[0].mxu0 %v1047
        %v1143 = vpop.f32.mrb[0].mxu0
        %v1144 = vadd.f32 0.0, %v1143
        %v1145 = vpop.f32.mrb[0].mxu0
        %v1146 = vpop.f32.mrb[0].mxu0
        %v1147 = vadd.f32 0.0, %v1146
        %v1148 = vpop.f32.mrb[0].mxu0
        %1149 = vmatprep.mubr.bf16.mxu0 0
        %1150 = vmatmul.mubr.bf16.gmra.mrb[0].mxu0 %v1050
        %v1151 = vpop.f32.mrb[0].mxu0
        %v1152 = vadd.f32 0.0, %v1151
        %v1153 = vpop.f32.mrb[0].mxu0
        %v1154 = vpop.f32.mrb[0].mxu0
        %v1155 = vadd.f32 0.0, %v1154
        %v1156 = vpop.f32.mrb[0].mxu0
        %1157 = vmatprep.mubr.bf16.mxu0 0
        %1158 = vmatmul.mubr.bf16.gmra.mrb[0].mxu0 %v1053
        %v1159 = vpop.f32.mrb[0].mxu0
        %v1160 = vadd.f32 0.0, %v1159
        %v1161 = vpop.f32.mrb[0].mxu0
        %v1162 = vpop.f32.mrb[0].mxu0
        %v1163 = vadd.f32 0.0, %v1162
        %v1164 = vpop.f32.mrb[0].mxu0
        %1165 = vmatprep.mubr.bf16.mxu0 0
        %1166 = vmatmul.mubr.bf16.gmra.mrb[0].mxu0 %v1056
        %v1167 = vpop.f32.mrb[0].mxu0
        %v1168 = vadd.f32 0.0, %v1167
        %v1169 = vpop.f32.mrb[0].mxu0
        %v1170 = vpop.f32.mrb[0].mxu0
        %v1171 = vadd.f32 0.0, %v1170
        %v1172 = vpop.f32.mrb[0].mxu0
        %1173 = vdwg.mxu0
        %v1174 = vadd.f32 %v815, %v1096
        %v1175 = vadd.f32 %v818, %v1099
        %v1176 = vadd.f32 %v823, %v1104
        %v1177 = vadd.f32 %v826, %v1107
        %v1178 = vadd.f32 %v831, %v1112
        %v1179 = vadd.f32 %v834, %v1115
        %v1180 = vadd.f32 %v839, %v1120
        %v1181 = vadd.f32 %v842, %v1123
        %v1182 = vadd.f32 %v847, %v1128
        %v1183 = vadd.f32 %v850, %v1131
        %v1184 = vadd.f32 %v855, %v1136
        %v1185 = vadd.f32 %v858, %v1139
        %v1186 = vadd.f32 %v863, %v1144
        %v1187 = vadd.f32 %v866, %v1147
        %v1188 = vadd.f32 %v871, %v1152
        %v1189 = vadd.f32 %v874, %v1155
        %v1190 = vadd.f32 %v879, %v1160
        %v1191 = vadd.f32 %v882, %v1163
        %v1192 = vadd.f32 %v887, %v1168
        %v1193 = vadd.f32 %v890, %v1171
        %s1194 = sadd.s32 %s239, 1
        %s1195 = smul.u32 %s1194, 3
        %s1196 = smul.addr %s1195, 4
        %s1197 = scalar_lea.vmem %s236, %s1196
        %v1198 = vld [vmem:[%s1197] sm:$0xf]
        %v1199 = vld [vmem:[%s1197 + $0x4] sm:$0xf]
        %v1200 = vld [vmem:[%s1197 + $0xc] sm:$0xf]
        %v1201 = vld [vmem:[%s1197 + $0x10] sm:$0xf]
        %v1202 = vld [vmem:[%s1197 + $0x18] sm:$0xf]
        %v1203 = vld [vmem:[%s1197 + $0x1c] sm:$0xf]
        %v1204 = vld [vmem:[%s1197 + $0x24] sm:$0xf]
        %v1205 = vld [vmem:[%s1197 + $0x28] sm:$0xf]
        %v1206 = vld [vmem:[%s1197 + $0x30] sm:$0xf]
        %v1207 = vld [vmem:[%s1197 + $0x34] sm:$0xf]
        %v1208 = vld [vmem:[%s1197 + $0x3c] sm:$0xf]
        %v1209 = vld [vmem:[%s1197 + $0x40] sm:$0xf]
        %v1210 = vld [vmem:[%s1197 + $0x48] sm:$0xf]
        %v1211 = vld [vmem:[%s1197 + $0x4c] sm:$0xf]
        %v1212 = vld [vmem:[%s1197 + $0x54] sm:$0xf]
        %v1213 = vld [vmem:[%s1197 + $0x58] sm:$0xf]
        %v1214 = vld [vmem:[%s1197 + $0x60] sm:$0xf]
        %v1215 = vld [vmem:[%s1197 + $0x64] sm:$0xf]
        %v1216 = vld [vmem:[%s1197 + $0x6c] sm:$0xf]
        %v1217 = vld [vmem:[%s1197 + $0x70] sm:$0xf]
        %s1218 = scalar_lea.vmem %s1, 6
        %v1219 = vld [vmem:[%s1218] sm:$0x3]
        %v1240 = vunpack.c.l.b16 %v1198
        %v1241 = vunpack.c.l.b16 %v1199
        %v1242 = vunpack.c.l.b16 %v1200
        %v1243 = vunpack.c.l.b16 %v1201
        %v1244 = vunpack.c.l.b16 %v1202
        %v1245 = vunpack.c.l.b16 %v1203
        %v1246 = vunpack.c.l.b16 %v1204
        %v1247 = vunpack.c.l.b16 %v1205
        %v1248 = vunpack.c.l.b16 %v1206
        %v1249 = vunpack.c.l.b16 %v1207
        %v1250 = vunpack.c.l.b16 %v1208
        %v1251 = vunpack.c.l.b16 %v1209
        %v1252 = vunpack.c.l.b16 %v1210
        %v1253 = vunpack.c.l.b16 %v1211
        %v1254 = vunpack.c.l.b16 %v1212
        %v1255 = vunpack.c.l.b16 %v1213
        %v1256 = vunpack.c.l.b16 %v1214
        %v1257 = vunpack.c.l.b16 %v1215
        %v1258 = vunpack.c.l.b16 %v1216
        %v1259 = vunpack.c.l.b16 %v1217
        %v1260 = vpack.c.b16 %v1241, %v1240
        %v1261 = vpack.c.b16 %v1243, %v1242
        %v1262 = vpack.c.b16 %v1245, %v1244
        %v1263 = vpack.c.b16 %v1247, %v1246
        %v1264 = vpack.c.b16 %v1249, %v1248
        %v1265 = vpack.c.b16 %v1251, %v1250
        %v1266 = vpack.c.b16 %v1253, %v1252
        %v1267 = vpack.c.b16 %v1255, %v1254
        %v1268 = vpack.c.b16 %v1257, %v1256
        %v1269 = vpack.c.b16 %v1259, %v1258
        %v1271 = vsel %vm549, %v1260, 0
        %v1274 = vsel %vm549, %v1261, 0
        %v1277 = vsel %vm549, %v1262, 0
        %v1280 = vsel %vm549, %v1263, 0
        %v1283 = vsel %vm549, %v1264, 0
        %v1286 = vsel %vm549, %v1265, 0
        %v1289 = vsel %vm549, %v1266, 0
        %v1292 = vsel %vm549, %v1267, 0
        %v1295 = vsel %vm549, %v1268, 0
        %v1298 = vsel %vm549, %v1269, 0
        %v1301 = vsel %vm580, %v1219, 0
        %1303 = vmatprep.subr.bf16.mxu0 0
        %1304 = vmatpush1.bf16.msra.mxu0 %v1301
        %1305 = vmatprep.subr.bf16.mxu0 0
        %1306 = vmatpush1.bf16.msra.mxu0 0
        %1307 = vmatprep.subr.bf16.mxu0 0
        %1308 = vmatpush1.bf16.msra.mxu0 0
        %1309 = vmatprep.subr.bf16.mxu0 0
        %1310 = vmatpush1.bf16.msra.mxu0 0
        %1311 = vmatprep.subr.bf16.mxu0 0
        %1312 = vmatpush1.bf16.msra.mxu0 0
        %1313 = vmatprep.subr.bf16.mxu0 0
        %1314 = vmatpush1.bf16.msra.mxu0 0
        %1315 = vmatprep.subr.bf16.mxu0 0
        %1316 = vmatpush1.bf16.msra.mxu0 0
        %1317 = vmatprep.subr.bf16.mxu0 0
        %1318 = vmatpush1.bf16.msra.mxu0 0
        %1319 = vmatprep.subr.bf16.mxu0 0
        %1320 = vmatpush1.bf16.msra.mxu0 0
        %1321 = vmatprep.subr.bf16.mxu0 0
        %1322 = vmatpush1.bf16.msra.mxu0 0
        %1323 = vmatprep.subr.bf16.mxu0 0
        %1324 = vmatpush1.bf16.msra.mxu0 0
        %1325 = vmatprep.subr.bf16.mxu0 0
        %1326 = vmatpush1.bf16.msra.mxu0 0
        %1327 = vmatprep.subr.bf16.mxu0 0
        %1328 = vmatpush1.bf16.msra.mxu0 0
        %1329 = vmatprep.subr.bf16.mxu0 0
        %1330 = vmatpush1.bf16.msra.mxu0 0
        %1331 = vmatprep.subr.bf16.mxu0 0
        %1332 = vmatpush1.bf16.msra.mxu0 0
        %1333 = vmatprep.subr.bf16.mxu0 0
        %1334 = vmatpush1.bf16.msra.mxu0 0
        %1335 = vmatprep.mubr.bf16.mxu0 0
        %1336 = vmatmul.mubr.bf16.gmra.mrb[0].mxu0 %v1271
        %v1337 = vpop.f32.mrb[0].mxu0
        %v1338 = vadd.f32 0.0, %v1337
        %v1339 = vpop.f32.mrb[0].mxu0
        %v1340 = vpop.f32.mrb[0].mxu0
        %v1341 = vadd.f32 0.0, %v1340
        %v1342 = vpop.f32.mrb[0].mxu0
        %1343 = vmatprep.mubr.bf16.mxu0 0
        %1344 = vmatmul.mubr.bf16.gmra.mrb[0].mxu0 %v1274
        %v1345 = vpop.f32.mrb[0].mxu0
        %v1346 = vadd.f32 0.0, %v1345
        %v1347 = vpop.f32.mrb[0].mxu0
        %v1348 = vpop.f32.mrb[0].mxu0
        %v1349 = vadd.f32 0.0, %v1348
        %v1350 = vpop.f32.mrb[0].mxu0
        %1351 = vmatprep.mubr.bf16.mxu0 0
        %1352 = vmatmul.mubr.bf16.gmra.mrb[0].mxu0 %v1277
        %v1353 = vpop.f32.mrb[0].mxu0
        %v1354 = vadd.f32 0.0, %v1353
        %v1355 = vpop.f32.mrb[0].mxu0
        %v1356 = vpop.f32.mrb[0].mxu0
        %v1357 = vadd.f32 0.0, %v1356
        %v1358 = vpop.f32.mrb[0].mxu0
        %1359 = vmatprep.mubr.bf16.mxu0 0
        %1360 = vmatmul.mubr.bf16.gmra.mrb[0].mxu0 %v1280
        %v1361 = vpop.f32.mrb[0].mxu0
        %v1362 = vadd.f32 0.0, %v1361
        %v1363 = vpop.f32.mrb[0].mxu0
        %v1364 = vpop.f32.mrb[0].mxu0
        %v1365 = vadd.f32 0.0, %v1364
        %v1366 = vpop.f32.mrb[0].mxu0
        %1367 = vmatprep.mubr.bf16.mxu0 0
        %1368 = vmatmul.mubr.bf16.gmra.mrb[0].mxu0 %v1283
        %v1369 = vpop.f32.mrb[0].mxu0
        %v1370 = vadd.f32 0.0, %v1369
        %v1371 = vpop.f32.mrb[0].mxu0
        %v1372 = vpop.f32.mrb[0].mxu0
        %v1373 = vadd.f32 0.0, %v1372
        %v1374 = vpop.f32.mrb[0].mxu0
        %1375 = vmatprep.mubr.bf16.mxu0 0
        %1376 = vmatmul.mubr.bf16.gmra.mrb[0].mxu0 %v1286
        %v1377 = vpop.f32.mrb[0].mxu0
        %v1378 = vadd.f32 0.0, %v1377
        %v1379 = vpop.f32.mrb[0].mxu0
        %v1380 = vpop.f32.mrb[0].mxu0
        %v1381 = vadd.f32 0.0, %v1380
        %v1382 = vpop.f32.mrb[0].mxu0
        %1383 = vmatprep.mubr.bf16.mxu0 0
        %1384 = vmatmul.mubr.bf16.gmra.mrb[0].mxu0 %v1289
        %v1385 = vpop.f32.mrb[0].mxu0
        %v1386 = vadd.f32 0.0, %v1385
        %v1387 = vpop.f32.mrb[0].mxu0
        %v1388 = vpop.f32.mrb[0].mxu0
        %v1389 = vadd.f32 0.0, %v1388
        %v1390 = vpop.f32.mrb[0].mxu0
        %1391 = vmatprep.mubr.bf16.mxu0 0
        %1392 = vmatmul.mubr.bf16.gmra.mrb[0].mxu0 %v1292
        %v1393 = vpop.f32.mrb[0].mxu0
        %v1394 = vadd.f32 0.0, %v1393
        %v1395 = vpop.f32.mrb[0].mxu0
        %v1396 = vpop.f32.mrb[0].mxu0
        %v1397 = vadd.f32 0.0, %v1396
        %v1398 = vpop.f32.mrb[0].mxu0
        %1399 = vmatprep.mubr.bf16.mxu0 0
        %1400 = vmatmul.mubr.bf16.gmra.mrb[0].mxu0 %v1295
        %v1401 = vpop.f32.mrb[0].mxu0
        %v1402 = vadd.f32 0.0, %v1401
        %v1403 = vpop.f32.mrb[0].mxu0
        %v1404 = vpop.f32.mrb[0].mxu0
        %v1405 = vadd.f32 0.0, %v1404
        %v1406 = vpop.f32.mrb[0].mxu0
        %1407 = vmatprep.mubr.bf16.mxu0 0
        %1408 = vmatmul.mubr.bf16.gmra.mrb[0].mxu0 %v1298
        %v1409 = vpop.f32.mrb[0].mxu0
        %v1410 = vadd.f32 0.0, %v1409
        %v1411 = vpop.f32.mrb[0].mxu0
        %v1412 = vpop.f32.mrb[0].mxu0
        %v1413 = vadd.f32 0.0, %v1412
        %v1414 = vpop.f32.mrb[0].mxu0
        %1415 = vdwg.mxu0
        %v1416 = vadd.f32 %v1174, %v1338
        %v1417 = vadd.f32 %v1175, %v1341
        %v1418 = vadd.f32 %v1176, %v1346
        %v1419 = vadd.f32 %v1177, %v1349
        %v1420 = vadd.f32 %v1178, %v1354
        %v1421 = vadd.f32 %v1179, %v1357
        %v1422 = vadd.f32 %v1180, %v1362
        %v1423 = vadd.f32 %v1181, %v1365
        %v1424 = vadd.f32 %v1182, %v1370
        %v1425 = vadd.f32 %v1183, %v1373
        %v1426 = vadd.f32 %v1184, %v1378
        %v1427 = vadd.f32 %v1185, %v1381
        %v1428 = vadd.f32 %v1186, %v1386
        %v1429 = vadd.f32 %v1187, %v1389
        %v1430 = vadd.f32 %v1188, %v1394
        %v1431 = vadd.f32 %v1189, %v1397
        %v1432 = vadd.f32 %v1190, %v1402
        %v1433 = vadd.f32 %v1191, %v1405
        %v1434 = vadd.f32 %v1192, %v1410
        %v1435 = vadd.f32 %v1193, %v1413
        %v1436 = vld [vmem:[%s1197] sm:$0xf]
        %v1437 = vld [vmem:[%s1197 + $0x4] sm:$0xf]
        %v1438 = vld [vmem:[%s1197 + $0x8] sm:$0x1]
        %v1439 = vld [vmem:[%s1197 + $0xc] sm:$0xf]
        %v1440 = vld [vmem:[%s1197 + $0x10] sm:$0xf]
        %v1441 = vld [vmem:[%s1197 + $0x14] sm:$0x1]
        %v1442 = vld [vmem:[%s1197 + $0x18] sm:$0xf]
        %v1443 = vld [vmem:[%s1197 + $0x1c] sm:$0xf]
        %v1444 = vld [vmem:[%s1197 + $0x20] sm:$0x1]
        %v1445 = vld [vmem:[%s1197 + $0x24] sm:$0xf]
        %v1446 = vld [vmem:[%s1197 + $0x28] sm:$0xf]
        %v1447 = vld [vmem:[%s1197 + $0x2c] sm:$0x1]
        %v1448 = vld [vmem:[%s1197 + $0x30] sm:$0xf]
        %v1449 = vld [vmem:[%s1197 + $0x34] sm:$0xf]
        %v1450 = vld [vmem:[%s1197 + $0x38] sm:$0x1]
        %v1451 = vld [vmem:[%s1197 + $0x3c] sm:$0xf]
        %v1452 = vld [vmem:[%s1197 + $0x40] sm:$0xf]
        %v1453 = vld [vmem:[%s1197 + $0x44] sm:$0x1]
        %v1454 = vld [vmem:[%s1197 + $0x48] sm:$0xf]
        %v1455 = vld [vmem:[%s1197 + $0x4c] sm:$0xf]
        %v1456 = vld [vmem:[%s1197 + $0x50] sm:$0x1]
        %v1457 = vld [vmem:[%s1197 + $0x54] sm:$0xf]
        %v1458 = vld [vmem:[%s1197 + $0x58] sm:$0xf]
        %v1459 = vld [vmem:[%s1197 + $0x5c] sm:$0x1]
        %v1460 = vld [vmem:[%s1197 + $0x60] sm:$0xf]
        %v1461 = vld [vmem:[%s1197 + $0x64] sm:$0xf]
        %v1462 = vld [vmem:[%s1197 + $0x68] sm:$0x1]
        %v1463 = vld [vmem:[%s1197 + $0x6c] sm:$0xf]
        %v1464 = vld [vmem:[%s1197 + $0x70] sm:$0xf]
        %v1465 = vld [vmem:[%s1197 + $0x74] sm:$0x1]
        %v1467 = vshrl.u32 %v1436, 16
        %v1469 = vrot.slane %v1467, 4
        %v1470 = vshll.u32 %v1436, 16
        %v1472 = vrot.slane %v1470, 5
        %v1473 = vor.u32 %v1469, %v1472
        %v1474 = vrot.slane %v1473, 4
        %v1476 = vshll.u32 %v1437, 16
        %v1478 = vrot.slane %v1476, 5
        %v1479 = vsel %vm276, %v1474, %v1478
        %v1480 = vshrl.u32 %v1437, 16
        %v1482 = vrot.slane %v1480, 4
        %v1483 = vor.u32 %v1482, %v1478
        %v1484 = vrot.slane %v1483, 4
        %v1486 = vshll.u32 %v1438, 16
        %v1488 = vrot.slane %v1486, 5
        %v1489 = vsel %vm276, %v1484, %v1488
        %v1491 = vshrl.u32 %v1439, 16
        %v1493 = vrot.slane %v1491, 4
        %v1494 = vshll.u32 %v1439, 16
        %v1496 = vrot.slane %v1494, 5
        %v1497 = vor.u32 %v1493, %v1496
        %v1498 = vrot.slane %v1497, 4
        %v1500 = vshll.u32 %v1440, 16
        %v1502 = vrot.slane %v1500, 5
        %v1503 = vsel %vm276, %v1498, %v1502
        %v1504 = vshrl.u32 %v1440, 16
        %v1506 = vrot.slane %v1504, 4
        %v1507 = vor.u32 %v1506, %v1502
        %v1508 = vrot.slane %v1507, 4
        %v1510 = vshll.u32 %v1441, 16
        %v1512 = vrot.slane %v1510, 5
        %v1513 = vsel %vm276, %v1508, %v1512
        %v1515 = vshrl.u32 %v1442, 16
        %v1517 = vrot.slane %v1515, 4
        %v1518 = vshll.u32 %v1442, 16
        %v1520 = vrot.slane %v1518, 5
        %v1521 = vor.u32 %v1517, %v1520
        %v1522 = vrot.slane %v1521, 4
        %v1524 = vshll.u32 %v1443, 16
        %v1526 = vrot.slane %v1524, 5
        %v1527 = vsel %vm276, %v1522, %v1526
        %v1528 = vshrl.u32 %v1443, 16
        %v1530 = vrot.slane %v1528, 4
        %v1531 = vor.u32 %v1530, %v1526
        %v1532 = vrot.slane %v1531, 4
        %v1534 = vshll.u32 %v1444, 16
        %v1536 = vrot.slane %v1534, 5
        %v1537 = vsel %vm276, %v1532, %v1536
        %v1539 = vshrl.u32 %v1445, 16
        %v1541 = vrot.slane %v1539, 4
        %v1542 = vshll.u32 %v1445, 16
        %v1544 = vrot.slane %v1542, 5
        %v1545 = vor.u32 %v1541, %v1544
        %v1546 = vrot.slane %v1545, 4
        %v1548 = vshll.u32 %v1446, 16
        %v1550 = vrot.slane %v1548, 5
        %v1551 = vsel %vm276, %v1546, %v1550
        %v1552 = vshrl.u32 %v1446, 16
        %v1554 = vrot.slane %v1552, 4
        %v1555 = vor.u32 %v1554, %v1550
        %v1556 = vrot.slane %v1555, 4
        %v1558 = vshll.u32 %v1447, 16
        %v1560 = vrot.slane %v1558, 5
        %v1561 = vsel %vm276, %v1556, %v1560
        %v1563 = vshrl.u32 %v1448, 16
        %v1565 = vrot.slane %v1563, 4
        %v1566 = vshll.u32 %v1448, 16
        %v1568 = vrot.slane %v1566, 5
        %v1569 = vor.u32 %v1565, %v1568
        %v1570 = vrot.slane %v1569, 4
        %v1572 = vshll.u32 %v1449, 16
        %v1574 = vrot.slane %v1572, 5
        %v1575 = vsel %vm276, %v1570, %v1574
        %v1576 = vshrl.u32 %v1449, 16
        %v1578 = vrot.slane %v1576, 4
        %v1579 = vor.u32 %v1578, %v1574
        %v1580 = vrot.slane %v1579, 4
        %v1582 = vshll.u32 %v1450, 16
        %v1584 = vrot.slane %v1582, 5
        %v1585 = vsel %vm276, %v1580, %v1584
        %v1587 = vshrl.u32 %v1451, 16
        %v1589 = vrot.slane %v1587, 4
        %v1590 = vshll.u32 %v1451, 16
        %v1592 = vrot.slane %v1590, 5
        %v1593 = vor.u32 %v1589, %v1592
        %v1594 = vrot.slane %v1593, 4
        %v1596 = vshll.u32 %v1452, 16
        %v1598 = vrot.slane %v1596, 5
        %v1599 = vsel %vm276, %v1594, %v1598
        %v1600 = vshrl.u32 %v1452, 16
        %v1602 = vrot.slane %v1600, 4
        %v1603 = vor.u32 %v1602, %v1598
        %v1604 = vrot.slane %v1603, 4
        %v1606 = vshll.u32 %v1453, 16
        %v1608 = vrot.slane %v1606, 5
        %v1609 = vsel %vm276, %v1604, %v1608
        %v1611 = vshrl.u32 %v1454, 16
        %v1613 = vrot.slane %v1611, 4
        %v1614 = vshll.u32 %v1454, 16
        %v1616 = vrot.slane %v1614, 5
        %v1617 = vor.u32 %v1613, %v1616
        %v1618 = vrot.slane %v1617, 4
        %v1620 = vshll.u32 %v1455, 16
        %v1622 = vrot.slane %v1620, 5
        %v1623 = vsel %vm276, %v1618, %v1622
        %v1624 = vshrl.u32 %v1455, 16
        %v1626 = vrot.slane %v1624, 4
        %v1627 = vor.u32 %v1626, %v1622
        %v1628 = vrot.slane %v1627, 4
        %v1630 = vshll.u32 %v1456, 16
        %v1632 = vrot.slane %v1630, 5
        %v1633 = vsel %vm276, %v1628, %v1632
        %v1635 = vshrl.u32 %v1457, 16
        %v1637 = vrot.slane %v1635, 4
        %v1638 = vshll.u32 %v1457, 16
        %v1640 = vrot.slane %v1638, 5
        %v1641 = vor.u32 %v1637, %v1640
        %v1642 = vrot.slane %v1641, 4
        %v1644 = vshll.u32 %v1458, 16
        %v1646 = vrot.slane %v1644, 5
        %v1647 = vsel %vm276, %v1642, %v1646
        %v1648 = vshrl.u32 %v1458, 16
        %v1650 = vrot.slane %v1648, 4
        %v1651 = vor.u32 %v1650, %v1646
        %v1652 = vrot.slane %v1651, 4
        %v1654 = vshll.u32 %v1459, 16
        %v1656 = vrot.slane %v1654, 5
        %v1657 = vsel %vm276, %v1652, %v1656
        %v1659 = vshrl.u32 %v1460, 16
        %v1661 = vrot.slane %v1659, 4
        %v1662 = vshll.u32 %v1460, 16
        %v1664 = vrot.slane %v1662, 5
        %v1665 = vor.u32 %v1661, %v1664
        %v1666 = vrot.slane %v1665, 4
        %v1668 = vshll.u32 %v1461, 16
        %v1670 = vrot.slane %v1668, 5
        %v1671 = vsel %vm276, %v1666, %v1670
        %v1672 = vshrl.u32 %v1461, 16
        %v1674 = vrot.slane %v1672, 4
        %v1675 = vor.u32 %v1674, %v1670
        %v1676 = vrot.slane %v1675, 4
        %v1678 = vshll.u32 %v1462, 16
        %v1680 = vrot.slane %v1678, 5
        %v1681 = vsel %vm276, %v1676, %v1680
        %v1683 = vshrl.u32 %v1463, 16
        %v1685 = vrot.slane %v1683, 4
        %v1686 = vshll.u32 %v1463, 16
        %v1688 = vrot.slane %v1686, 5
        %v1689 = vor.u32 %v1685, %v1688
        %v1690 = vrot.slane %v1689, 4
        %v1692 = vshll.u32 %v1464, 16
        %v1694 = vrot.slane %v1692, 5
        %v1695 = vsel %vm276, %v1690, %v1694
        %v1696 = vshrl.u32 %v1464, 16
        %v1698 = vrot.slane %v1696, 4
        %v1699 = vor.u32 %v1698, %v1694
        %v1700 = vrot.slane %v1699, 4
        %v1702 = vshll.u32 %v1465, 16
        %v1704 = vrot.slane %v1702, 5
        %v1705 = vsel %vm276, %v1700, %v1704
        %s1706 = scalar_lea.vmem %s1, 8
        %v1707 = vld [vmem:[%s1706] sm:$0x3]
        %v1708 = vunpack.c.l.b16 %v1479
        %v1709 = vunpack.c.l.b16 %v1489
        %v1710 = vunpack.c.l.b16 %v1503
        %v1711 = vunpack.c.l.b16 %v1513
        %v1712 = vunpack.c.l.b16 %v1527
        %v1713 = vunpack.c.l.b16 %v1537
        %v1714 = vunpack.c.l.b16 %v1551
        %v1715 = vunpack.c.l.b16 %v1561
        %v1716 = vunpack.c.l.b16 %v1575
        %v1717 = vunpack.c.l.b16 %v1585
        %v1718 = vunpack.c.l.b16 %v1599
        %v1719 = vunpack.c.l.b16 %v1609
        %v1720 = vunpack.c.l.b16 %v1623
        %v1721 = vunpack.c.l.b16 %v1633
        %v1722 = vunpack.c.l.b16 %v1647
        %v1723 = vunpack.c.l.b16 %v1657
        %v1724 = vunpack.c.l.b16 %v1671
        %v1725 = vunpack.c.l.b16 %v1681
        %v1726 = vunpack.c.l.b16 %v1695
        %v1727 = vunpack.c.l.b16 %v1705
        %v1728 = vpack.c.b16 %v1709, %v1708
        %v1729 = vpack.c.b16 %v1711, %v1710
        %v1730 = vpack.c.b16 %v1713, %v1712
        %v1731 = vpack.c.b16 %v1715, %v1714
        %v1732 = vpack.c.b16 %v1717, %v1716
        %v1733 = vpack.c.b16 %v1719, %v1718
        %v1734 = vpack.c.b16 %v1721, %v1720
        %v1735 = vpack.c.b16 %v1723, %v1722
        %v1736 = vpack.c.b16 %v1725, %v1724
        %v1737 = vpack.c.b16 %v1727, %v1726
        %v1739 = vsel %vm549, %v1728, 0
        %v1742 = vsel %vm549, %v1729, 0
        %v1745 = vsel %vm549, %v1730, 0
        %v1748 = vsel %vm549, %v1731, 0
        %v1751 = vsel %vm549, %v1732, 0
        %v1754 = vsel %vm549, %v1733, 0
        %v1757 = vsel %vm549, %v1734, 0
        %v1760 = vsel %vm549, %v1735, 0
        %v1763 = vsel %vm549, %v1736, 0
        %v1766 = vsel %vm549, %v1737, 0
        %v1769 = vsel %vm580, %v1707, 0
        %1771 = vmatprep.subr.bf16.mxu0 0
        %1772 = vmatpush1.bf16.msra.mxu0 %v1769
        %1773 = vmatprep.subr.bf16.mxu0 0
        %1774 = vmatpush1.bf16.msra.mxu0 0
        %1775 = vmatprep.subr.bf16.mxu0 0
        %1776 = vmatpush1.bf16.msra.mxu0 0
        %1777 = vmatprep.subr.bf16.mxu0 0
        %1778 = vmatpush1.bf16.msra.mxu0 0
        %1779 = vmatprep.subr.bf16.mxu0 0
        %1780 = vmatpush1.bf16.msra.mxu0 0
        %1781 = vmatprep.subr.bf16.mxu0 0
        %1782 = vmatpush1.bf16.msra.mxu0 0
        %1783 = vmatprep.subr.bf16.mxu0 0
        %1784 = vmatpush1.bf16.msra.mxu0 0
        %1785 = vmatprep.subr.bf16.mxu0 0
        %1786 = vmatpush1.bf16.msra.mxu0 0
        %1787 = vmatprep.subr.bf16.mxu0 0
        %1788 = vmatpush1.bf16.msra.mxu0 0
        %1789 = vmatprep.subr.bf16.mxu0 0
        %1790 = vmatpush1.bf16.msra.mxu0 0
        %1791 = vmatprep.subr.bf16.mxu0 0
        %1792 = vmatpush1.bf16.msra.mxu0 0
        %1793 = vmatprep.subr.bf16.mxu0 0
        %1794 = vmatpush1.bf16.msra.mxu0 0
        %1795 = vmatprep.subr.bf16.mxu0 0
        %1796 = vmatpush1.bf16.msra.mxu0 0
        %1797 = vmatprep.subr.bf16.mxu0 0
        %1798 = vmatpush1.bf16.msra.mxu0 0
        %1799 = vmatprep.subr.bf16.mxu0 0
        %1800 = vmatpush1.bf16.msra.mxu0 0
        %1801 = vmatprep.subr.bf16.mxu0 0
        %1802 = vmatpush1.bf16.msra.mxu0 0
        %1803 = vmatprep.mubr.bf16.mxu0 0
        %1804 = vmatmul.mubr.bf16.gmra.mrb[0].mxu0 %v1739
        %v1805 = vpop.f32.mrb[0].mxu0
        %v1806 = vadd.f32 0.0, %v1805
        %v1807 = vpop.f32.mrb[0].mxu0
        %v1808 = vpop.f32.mrb[0].mxu0
        %v1809 = vadd.f32 0.0, %v1808
        %v1810 = vpop.f32.mrb[0].mxu0
        %1811 = vmatprep.mubr.bf16.mxu0 0
        %1812 = vmatmul.mubr.bf16.gmra.mrb[0].mxu0 %v1742
        %v1813 = vpop.f32.mrb[0].mxu0
        %v1814 = vadd.f32 0.0, %v1813
        %v1815 = vpop.f32.mrb[0].mxu0
        %v1816 = vpop.f32.mrb[0].mxu0
        %v1817 = vadd.f32 0.0, %v1816
        %v1818 = vpop.f32.mrb[0].mxu0
        %1819 = vmatprep.mubr.bf16.mxu0 0
        %1820 = vmatmul.mubr.bf16.gmra.mrb[0].mxu0 %v1745
        %v1821 = vpop.f32.mrb[0].mxu0
        %v1822 = vadd.f32 0.0, %v1821
        %v1823 = vpop.f32.mrb[0].mxu0
        %v1824 = vpop.f32.mrb[0].mxu0
        %v1825 = vadd.f32 0.0, %v1824
        %v1826 = vpop.f32.mrb[0].mxu0
        %1827 = vmatprep.mubr.bf16.mxu0 0
        %1828 = vmatmul.mubr.bf16.gmra.mrb[0].mxu0 %v1748
        %v1829 = vpop.f32.mrb[0].mxu0
        %v1830 = vadd.f32 0.0, %v1829
        %v1831 = vpop.f32.mrb[0].mxu0
        %v1832 = vpop.f32.mrb[0].mxu0
        %v1833 = vadd.f32 0.0, %v1832
        %v1834 = vpop.f32.mrb[0].mxu0
        %1835 = vmatprep.mubr.bf16.mxu0 0
        %1836 = vmatmul.mubr.bf16.gmra.mrb[0].mxu0 %v1751
        %v1837 = vpop.f32.mrb[0].mxu0
        %v1838 = vadd.f32 0.0, %v1837
        %v1839 = vpop.f32.mrb[0].mxu0
        %v1840 = vpop.f32.mrb[0].mxu0
        %v1841 = vadd.f32 0.0, %v1840
        %v1842 = vpop.f32.mrb[0].mxu0
        %1843 = vmatprep.mubr.bf16.mxu0 0
        %1844 = vmatmul.mubr.bf16.gmra.mrb[0].mxu0 %v1754
        %v1845 = vpop.f32.mrb[0].mxu0
        %v1846 = vadd.f32 0.0, %v1845
        %v1847 = vpop.f32.mrb[0].mxu0
        %v1848 = vpop.f32.mrb[0].mxu0
        %v1849 = vadd.f32 0.0, %v1848
        %v1850 = vpop.f32.mrb[0].mxu0
        %1851 = vmatprep.mubr.bf16.mxu0 0
        %1852 = vmatmul.mubr.bf16.gmra.mrb[0].mxu0 %v1757
        %v1853 = vpop.f32.mrb[0].mxu0
        %v1854 = vadd.f32 0.0, %v1853
        %v1855 = vpop.f32.mrb[0].mxu0
        %v1856 = vpop.f32.mrb[0].mxu0
        %v1857 = vadd.f32 0.0, %v1856
        %v1858 = vpop.f32.mrb[0].mxu0
        %1859 = vmatprep.mubr.bf16.mxu0 0
        %1860 = vmatmul.mubr.bf16.gmra.mrb[0].mxu0 %v1760
        %v1861 = vpop.f32.mrb[0].mxu0
        %v1862 = vadd.f32 0.0, %v1861
        %v1863 = vpop.f32.mrb[0].mxu0
        %v1864 = vpop.f32.mrb[0].mxu0
        %v1865 = vadd.f32 0.0, %v1864
        %v1866 = vpop.f32.mrb[0].mxu0
        %1867 = vmatprep.mubr.bf16.mxu0 0
        %1868 = vmatmul.mubr.bf16.gmra.mrb[0].mxu0 %v1763
        %v1869 = vpop.f32.mrb[0].mxu0
        %v1870 = vadd.f32 0.0, %v1869
        %v1871 = vpop.f32.mrb[0].mxu0
        %v1872 = vpop.f32.mrb[0].mxu0
        %v1873 = vadd.f32 0.0, %v1872
        %v1874 = vpop.f32.mrb[0].mxu0
        %1875 = vmatprep.mubr.bf16.mxu0 0
        %1876 = vmatmul.mubr.bf16.gmra.mrb[0].mxu0 %v1766
        %v1877 = vpop.f32.mrb[0].mxu0
        %v1878 = vadd.f32 0.0, %v1877
        %v1879 = vpop.f32.mrb[0].mxu0
        %v1880 = vpop.f32.mrb[0].mxu0
        %v1881 = vadd.f32 0.0, %v1880
        %v1882 = vpop.f32.mrb[0].mxu0
        %1883 = vdwg.mxu0
        %v1884 = vadd.f32 %v1416, %v1806
        %v1885 = vadd.f32 %v1417, %v1809
        %v1886 = vadd.f32 %v1418, %v1814
        %v1887 = vadd.f32 %v1419, %v1817
        %v1888 = vadd.f32 %v1420, %v1822
        %v1889 = vadd.f32 %v1421, %v1825
        %v1890 = vadd.f32 %v1422, %v1830
        %v1891 = vadd.f32 %v1423, %v1833
        %v1892 = vadd.f32 %v1424, %v1838
        %v1893 = vadd.f32 %v1425, %v1841
        %v1894 = vadd.f32 %v1426, %v1846
        %v1895 = vadd.f32 %v1427, %v1849
        %v1896 = vadd.f32 %v1428, %v1854
        %v1897 = vadd.f32 %v1429, %v1857
        %v1898 = vadd.f32 %v1430, %v1862
        %v1899 = vadd.f32 %v1431, %v1865
        %v1900 = vadd.f32 %v1432, %v1870
        %v1901 = vadd.f32 %v1433, %v1873
        %v1902 = vadd.f32 %v1434, %v1878
        %v1903 = vadd.f32 %v1435, %v1881
        %v1904 = vld [vmem:[%s1197] sm:$0xe]
        %v1905 = vld [vmem:[%s1197 + $0xc] sm:$0xe]
        %v1906 = vld [vmem:[%s1197 + $0x18] sm:$0xe]
        %v1907 = vld [vmem:[%s1197 + $0x24] sm:$0xe]
        %v1908 = vld [vmem:[%s1197 + $0x30] sm:$0xe]
        %v1909 = vld [vmem:[%s1197 + $0x3c] sm:$0xe]
        %v1910 = vld [vmem:[%s1197 + $0x48] sm:$0xe]
        %v1911 = vld [vmem:[%s1197 + $0x54] sm:$0xe]
        %v1912 = vld [vmem:[%s1197 + $0x60] sm:$0xe]
        %v1913 = vld [vmem:[%s1197 + $0x6c] sm:$0xe]
        %v1944 = vrot.slane %v1904, 5
        %v1945 = vrot.slane %v1944, 4
        %v1946 = vrot.slane %v1437, 5
        %v1947 = vsel %vm925, %v1945, %v1946
        %v1948 = vrot.slane %v1946, 4
        %v1949 = vrot.slane %v1438, 5
        %v1950 = vsel %vm925, %v1948, %v1949
        %v1951 = vrot.slane %v1905, 5
        %v1952 = vrot.slane %v1951, 4
        %v1953 = vrot.slane %v1440, 5
        %v1954 = vsel %vm925, %v1952, %v1953
        %v1955 = vrot.slane %v1953, 4
        %v1956 = vrot.slane %v1441, 5
        %v1957 = vsel %vm925, %v1955, %v1956
        %v1958 = vrot.slane %v1906, 5
        %v1959 = vrot.slane %v1958, 4
        %v1960 = vrot.slane %v1443, 5
        %v1961 = vsel %vm925, %v1959, %v1960
        %v1962 = vrot.slane %v1960, 4
        %v1963 = vrot.slane %v1444, 5
        %v1964 = vsel %vm925, %v1962, %v1963
        %v1965 = vrot.slane %v1907, 5
        %v1966 = vrot.slane %v1965, 4
        %v1967 = vrot.slane %v1446, 5
        %v1968 = vsel %vm925, %v1966, %v1967
        %v1969 = vrot.slane %v1967, 4
        %v1970 = vrot.slane %v1447, 5
        %v1971 = vsel %vm925, %v1969, %v1970
        %v1972 = vrot.slane %v1908, 5
        %v1973 = vrot.slane %v1972, 4
        %v1974 = vrot.slane %v1449, 5
        %v1975 = vsel %vm925, %v1973, %v1974
        %v1976 = vrot.slane %v1974, 4
        %v1977 = vrot.slane %v1450, 5
        %v1978 = vsel %vm925, %v1976, %v1977
        %v1979 = vrot.slane %v1909, 5
        %v1980 = vrot.slane %v1979, 4
        %v1981 = vrot.slane %v1452, 5
        %v1982 = vsel %vm925, %v1980, %v1981
        %v1983 = vrot.slane %v1981, 4
        %v1984 = vrot.slane %v1453, 5
        %v1985 = vsel %vm925, %v1983, %v1984
        %v1986 = vrot.slane %v1910, 5
        %v1987 = vrot.slane %v1986, 4
        %v1988 = vrot.slane %v1455, 5
        %v1989 = vsel %vm925, %v1987, %v1988
        %v1990 = vrot.slane %v1988, 4
        %v1991 = vrot.slane %v1456, 5
        %v1992 = vsel %vm925, %v1990, %v1991
        %v1993 = vrot.slane %v1911, 5
        %v1994 = vrot.slane %v1993, 4
        %v1995 = vrot.slane %v1458, 5
        %v1996 = vsel %vm925, %v1994, %v1995
        %v1997 = vrot.slane %v1995, 4
        %v1998 = vrot.slane %v1459, 5
        %v1999 = vsel %vm925, %v1997, %v1998
        %v2000 = vrot.slane %v1912, 5
        %v2001 = vrot.slane %v2000, 4
        %v2002 = vrot.slane %v1461, 5
        %v2003 = vsel %vm925, %v2001, %v2002
        %v2004 = vrot.slane %v2002, 4
        %v2005 = vrot.slane %v1462, 5
        %v2006 = vsel %vm925, %v2004, %v2005
        %v2007 = vrot.slane %v1913, 5
        %v2008 = vrot.slane %v2007, 4
        %v2009 = vrot.slane %v1464, 5
        %v2010 = vsel %vm925, %v2008, %v2009
        %v2011 = vrot.slane %v2009, 4
        %v2012 = vrot.slane %v1465, 5
        %v2013 = vsel %vm925, %v2011, %v2012
        %s2014 = scalar_lea.vmem %s1, 10
        %v2015 = vld [vmem:[%s2014] sm:$0x3]
        %v2016 = vunpack.c.l.b16 %v1947
        %v2017 = vunpack.c.l.b16 %v1950
        %v2018 = vunpack.c.l.b16 %v1954
        %v2019 = vunpack.c.l.b16 %v1957
        %v2020 = vunpack.c.l.b16 %v1961
        %v2021 = vunpack.c.l.b16 %v1964
        %v2022 = vunpack.c.l.b16 %v1968
        %v2023 = vunpack.c.l.b16 %v1971
        %v2024 = vunpack.c.l.b16 %v1975
        %v2025 = vunpack.c.l.b16 %v1978
        %v2026 = vunpack.c.l.b16 %v1982
        %v2027 = vunpack.c.l.b16 %v1985
        %v2028 = vunpack.c.l.b16 %v1989
        %v2029 = vunpack.c.l.b16 %v1992
        %v2030 = vunpack.c.l.b16 %v1996
        %v2031 = vunpack.c.l.b16 %v1999
        %v2032 = vunpack.c.l.b16 %v2003
        %v2033 = vunpack.c.l.b16 %v2006
        %v2034 = vunpack.c.l.b16 %v2010
        %v2035 = vunpack.c.l.b16 %v2013
        %v2036 = vpack.c.b16 %v2017, %v2016
        %v2037 = vpack.c.b16 %v2019, %v2018
        %v2038 = vpack.c.b16 %v2021, %v2020
        %v2039 = vpack.c.b16 %v2023, %v2022
        %v2040 = vpack.c.b16 %v2025, %v2024
        %v2041 = vpack.c.b16 %v2027, %v2026
        %v2042 = vpack.c.b16 %v2029, %v2028
        %v2043 = vpack.c.b16 %v2031, %v2030
        %v2044 = vpack.c.b16 %v2033, %v2032
        %v2045 = vpack.c.b16 %v2035, %v2034
        %v2047 = vsel %vm549, %v2036, 0
        %v2050 = vsel %vm549, %v2037, 0
        %v2053 = vsel %vm549, %v2038, 0
        %v2056 = vsel %vm549, %v2039, 0
        %v2059 = vsel %vm549, %v2040, 0
        %v2062 = vsel %vm549, %v2041, 0
        %v2065 = vsel %vm549, %v2042, 0
        %v2068 = vsel %vm549, %v2043, 0
        %v2071 = vsel %vm549, %v2044, 0
        %v2074 = vsel %vm549, %v2045, 0
        %v2077 = vsel %vm580, %v2015, 0
        %2079 = vmatprep.subr.bf16.mxu0 0
        %2080 = vmatpush1.bf16.msra.mxu0 %v2077
        %2081 = vmatprep.subr.bf16.mxu0 0
        %2082 = vmatpush1.bf16.msra.mxu0 0
        %2083 = vmatprep.subr.bf16.mxu0 0
        %2084 = vmatpush1.bf16.msra.mxu0 0
        %2085 = vmatprep.subr.bf16.mxu0 0
        %2086 = vmatpush1.bf16.msra.mxu0 0
        %2087 = vmatprep.subr.bf16.mxu0 0
        %2088 = vmatpush1.bf16.msra.mxu0 0
        %2089 = vmatprep.subr.bf16.mxu0 0
        %2090 = vmatpush1.bf16.msra.mxu0 0
        %2091 = vmatprep.subr.bf16.mxu0 0
        %2092 = vmatpush1.bf16.msra.mxu0 0
        %2093 = vmatprep.subr.bf16.mxu0 0
        %2094 = vmatpush1.bf16.msra.mxu0 0
        %2095 = vmatprep.subr.bf16.mxu0 0
        %2096 = vmatpush1.bf16.msra.mxu0 0
        %2097 = vmatprep.subr.bf16.mxu0 0
        %2098 = vmatpush1.bf16.msra.mxu0 0
        %2099 = vmatprep.subr.bf16.mxu0 0
        %2100 = vmatpush1.bf16.msra.mxu0 0
        %2101 = vmatprep.subr.bf16.mxu0 0
        %2102 = vmatpush1.bf16.msra.mxu0 0
        %2103 = vmatprep.subr.bf16.mxu0 0
        %2104 = vmatpush1.bf16.msra.mxu0 0
        %2105 = vmatprep.subr.bf16.mxu0 0
        %2106 = vmatpush1.bf16.msra.mxu0 0
        %2107 = vmatprep.subr.bf16.mxu0 0
        %2108 = vmatpush1.bf16.msra.mxu0 0
        %2109 = vmatprep.subr.bf16.mxu0 0
        %2110 = vmatpush1.bf16.msra.mxu0 0
        %2111 = vmatprep.mubr.bf16.mxu0 0
        %2112 = vmatmul.mubr.bf16.gmra.mrb[0].mxu0 %v2047
        %v2113 = vpop.f32.mrb[0].mxu0
        %v2114 = vadd.f32 0.0, %v2113
        %v2115 = vpop.f32.mrb[0].mxu0
        %v2116 = vpop.f32.mrb[0].mxu0
        %v2117 = vadd.f32 0.0, %v2116
        %v2118 = vpop.f32.mrb[0].mxu0
        %2119 = vmatprep.mubr.bf16.mxu0 0
        %2120 = vmatmul.mubr.bf16.gmra.mrb[0].mxu0 %v2050
        %v2121 = vpop.f32.mrb[0].mxu0
        %v2122 = vadd.f32 0.0, %v2121
        %v2123 = vpop.f32.mrb[0].mxu0
        %v2124 = vpop.f32.mrb[0].mxu0
        %v2125 = vadd.f32 0.0, %v2124
        %v2126 = vpop.f32.mrb[0].mxu0
        %2127 = vmatprep.mubr.bf16.mxu0 0
        %2128 = vmatmul.mubr.bf16.gmra.mrb[0].mxu0 %v2053
        %v2129 = vpop.f32.mrb[0].mxu0
        %v2130 = vadd.f32 0.0, %v2129
        %v2131 = vpop.f32.mrb[0].mxu0
        %v2132 = vpop.f32.mrb[0].mxu0
        %v2133 = vadd.f32 0.0, %v2132
        %v2134 = vpop.f32.mrb[0].mxu0
        %2135 = vmatprep.mubr.bf16.mxu0 0
        %2136 = vmatmul.mubr.bf16.gmra.mrb[0].mxu0 %v2056
        %v2137 = vpop.f32.mrb[0].mxu0
        %v2138 = vadd.f32 0.0, %v2137
        %v2139 = vpop.f32.mrb[0].mxu0
        %v2140 = vpop.f32.mrb[0].mxu0
        %v2141 = vadd.f32 0.0, %v2140
        %v2142 = vpop.f32.mrb[0].mxu0
        %2143 = vmatprep.mubr.bf16.mxu0 0
        %2144 = vmatmul.mubr.bf16.gmra.mrb[0].mxu0 %v2059
        %v2145 = vpop.f32.mrb[0].mxu0
        %v2146 = vadd.f32 0.0, %v2145
        %v2147 = vpop.f32.mrb[0].mxu0
        %v2148 = vpop.f32.mrb[0].mxu0
        %v2149 = vadd.f32 0.0, %v2148
        %v2150 = vpop.f32.mrb[0].mxu0
        %2151 = vmatprep.mubr.bf16.mxu0 0
        %2152 = vmatmul.mubr.bf16.gmra.mrb[0].mxu0 %v2062
        %v2153 = vpop.f32.mrb[0].mxu0
        %v2154 = vadd.f32 0.0, %v2153
        %v2155 = vpop.f32.mrb[0].mxu0
        %v2156 = vpop.f32.mrb[0].mxu0
        %v2157 = vadd.f32 0.0, %v2156
        %v2158 = vpop.f32.mrb[0].mxu0
        %2159 = vmatprep.mubr.bf16.mxu0 0
        %2160 = vmatmul.mubr.bf16.gmra.mrb[0].mxu0 %v2065
        %v2161 = vpop.f32.mrb[0].mxu0
        %v2162 = vadd.f32 0.0, %v2161
        %v2163 = vpop.f32.mrb[0].mxu0
        %v2164 = vpop.f32.mrb[0].mxu0
        %v2165 = vadd.f32 0.0, %v2164
        %v2166 = vpop.f32.mrb[0].mxu0
        %2167 = vmatprep.mubr.bf16.mxu0 0
        %2168 = vmatmul.mubr.bf16.gmra.mrb[0].mxu0 %v2068
        %v2169 = vpop.f32.mrb[0].mxu0
        %v2170 = vadd.f32 0.0, %v2169
        %v2171 = vpop.f32.mrb[0].mxu0
        %v2172 = vpop.f32.mrb[0].mxu0
        %v2173 = vadd.f32 0.0, %v2172
        %v2174 = vpop.f32.mrb[0].mxu0
        %2175 = vmatprep.mubr.bf16.mxu0 0
        %2176 = vmatmul.mubr.bf16.gmra.mrb[0].mxu0 %v2071
        %v2177 = vpop.f32.mrb[0].mxu0
        %v2178 = vadd.f32 0.0, %v2177
        %v2179 = vpop.f32.mrb[0].mxu0
        %v2180 = vpop.f32.mrb[0].mxu0
        %v2181 = vadd.f32 0.0, %v2180
        %v2182 = vpop.f32.mrb[0].mxu0
        %2183 = vmatprep.mubr.bf16.mxu0 0
        %2184 = vmatmul.mubr.bf16.gmra.mrb[0].mxu0 %v2074
        %v2185 = vpop.f32.mrb[0].mxu0
        %v2186 = vadd.f32 0.0, %v2185
        %v2187 = vpop.f32.mrb[0].mxu0
        %v2188 = vpop.f32.mrb[0].mxu0
        %v2189 = vadd.f32 0.0, %v2188
        %v2190 = vpop.f32.mrb[0].mxu0
        %2191 = vdwg.mxu0
        %v2192 = vadd.f32 %v1884, %v2114
        %v2193 = vadd.f32 %v1885, %v2117
        %v2194 = vadd.f32 %v1886, %v2122
        %v2195 = vadd.f32 %v1887, %v2125
        %v2196 = vadd.f32 %v1888, %v2130
        %v2197 = vadd.f32 %v1889, %v2133
        %v2198 = vadd.f32 %v1890, %v2138
        %v2199 = vadd.f32 %v1891, %v2141
        %v2200 = vadd.f32 %v1892, %v2146
        %v2201 = vadd.f32 %v1893, %v2149
        %v2202 = vadd.f32 %v1894, %v2154
        %v2203 = vadd.f32 %v1895, %v2157
        %v2204 = vadd.f32 %v1896, %v2162
        %v2205 = vadd.f32 %v1897, %v2165
        %v2206 = vadd.f32 %v1898, %v2170
        %v2207 = vadd.f32 %v1899, %v2173
        %v2208 = vadd.f32 %v1900, %v2178
        %v2209 = vadd.f32 %v1901, %v2181
        %v2210 = vadd.f32 %v1902, %v2186
        %v2211 = vadd.f32 %v1903, %v2189
        %s2212 = sadd.s32 %s239, 2
        %s2213 = smul.u32 %s2212, 3
        %s2214 = smul.addr %s2213, 4
        %s2215 = scalar_lea.vmem %s236, %s2214
        %v2216 = vld [vmem:[%s2215] sm:$0xf]
        %v2217 = vld [vmem:[%s2215 + $0x4] sm:$0xf]
        %v2218 = vld [vmem:[%s2215 + $0xc] sm:$0xf]
        %v2219 = vld [vmem:[%s2215 + $0x10] sm:$0xf]
        %v2220 = vld [vmem:[%s2215 + $0x18] sm:$0xf]
        %v2221 = vld [vmem:[%s2215 + $0x1c] sm:$0xf]
        %v2222 = vld [vmem:[%s2215 + $0x24] sm:$0xf]
        %v2223 = vld [vmem:[%s2215 + $0x28] sm:$0xf]
        %v2224 = vld [vmem:[%s2215 + $0x30] sm:$0xf]
        %v2225 = vld [vmem:[%s2215 + $0x34] sm:$0xf]
        %v2226 = vld [vmem:[%s2215 + $0x3c] sm:$0xf]
        %v2227 = vld [vmem:[%s2215 + $0x40] sm:$0xf]
        %v2228 = vld [vmem:[%s2215 + $0x48] sm:$0xf]
        %v2229 = vld [vmem:[%s2215 + $0x4c] sm:$0xf]
        %v2230 = vld [vmem:[%s2215 + $0x54] sm:$0xf]
        %v2231 = vld [vmem:[%s2215 + $0x58] sm:$0xf]
        %v2232 = vld [vmem:[%s2215 + $0x60] sm:$0xf]
        %v2233 = vld [vmem:[%s2215 + $0x64] sm:$0xf]
        %v2234 = vld [vmem:[%s2215 + $0x6c] sm:$0xf]
        %v2235 = vld [vmem:[%s2215 + $0x70] sm:$0xf]
        %s2236 = scalar_lea.vmem %s1, 12
        %v2237 = vld [vmem:[%s2236] sm:$0x3]
        %v2258 = vunpack.c.l.b16 %v2216
        %v2259 = vunpack.c.l.b16 %v2217
        %v2260 = vunpack.c.l.b16 %v2218
        %v2261 = vunpack.c.l.b16 %v2219
        %v2262 = vunpack.c.l.b16 %v2220
        %v2263 = vunpack.c.l.b16 %v2221
        %v2264 = vunpack.c.l.b16 %v2222
        %v2265 = vunpack.c.l.b16 %v2223
        %v2266 = vunpack.c.l.b16 %v2224
        %v2267 = vunpack.c.l.b16 %v2225
        %v2268 = vunpack.c.l.b16 %v2226
        %v2269 = vunpack.c.l.b16 %v2227
        %v2270 = vunpack.c.l.b16 %v2228
        %v2271 = vunpack.c.l.b16 %v2229
        %v2272 = vunpack.c.l.b16 %v2230
        %v2273 = vunpack.c.l.b16 %v2231
        %v2274 = vunpack.c.l.b16 %v2232
        %v2275 = vunpack.c.l.b16 %v2233
        %v2276 = vunpack.c.l.b16 %v2234
        %v2277 = vunpack.c.l.b16 %v2235
        %v2278 = vpack.c.b16 %v2259, %v2258
        %v2279 = vpack.c.b16 %v2261, %v2260
        %v2280 = vpack.c.b16 %v2263, %v2262
        %v2281 = vpack.c.b16 %v2265, %v2264
        %v2282 = vpack.c.b16 %v2267, %v2266
        %v2283 = vpack.c.b16 %v2269, %v2268
        %v2284 = vpack.c.b16 %v2271, %v2270
        %v2285 = vpack.c.b16 %v2273, %v2272
        %v2286 = vpack.c.b16 %v2275, %v2274
        %v2287 = vpack.c.b16 %v2277, %v2276
        %v2289 = vsel %vm549, %v2278, 0
        %v2292 = vsel %vm549, %v2279, 0
        %v2295 = vsel %vm549, %v2280, 0
        %v2298 = vsel %vm549, %v2281, 0
        %v2301 = vsel %vm549, %v2282, 0
        %v2304 = vsel %vm549, %v2283, 0
        %v2307 = vsel %vm549, %v2284, 0
        %v2310 = vsel %vm549, %v2285, 0
        %v2313 = vsel %vm549, %v2286, 0
        %v2316 = vsel %vm549, %v2287, 0
        %v2319 = vsel %vm580, %v2237, 0
        %2321 = vmatprep.subr.bf16.mxu0 0
        %2322 = vmatpush1.bf16.msra.mxu0 %v2319
        %2323 = vmatprep.subr.bf16.mxu0 0
        %2324 = vmatpush1.bf16.msra.mxu0 0
        %2325 = vmatprep.subr.bf16.mxu0 0
        %2326 = vmatpush1.bf16.msra.mxu0 0
        %2327 = vmatprep.subr.bf16.mxu0 0
        %2328 = vmatpush1.bf16.msra.mxu0 0
        %2329 = vmatprep.subr.bf16.mxu0 0
        %2330 = vmatpush1.bf16.msra.mxu0 0
        %2331 = vmatprep.subr.bf16.mxu0 0
        %2332 = vmatpush1.bf16.msra.mxu0 0
        %2333 = vmatprep.subr.bf16.mxu0 0
        %2334 = vmatpush1.bf16.msra.mxu0 0
        %2335 = vmatprep.subr.bf16.mxu0 0
        %2336 = vmatpush1.bf16.msra.mxu0 0
        %2337 = vmatprep.subr.bf16.mxu0 0
        %2338 = vmatpush1.bf16.msra.mxu0 0
        %2339 = vmatprep.subr.bf16.mxu0 0
        %2340 = vmatpush1.bf16.msra.mxu0 0
        %2341 = vmatprep.subr.bf16.mxu0 0
        %2342 = vmatpush1.bf16.msra.mxu0 0
        %2343 = vmatprep.subr.bf16.mxu0 0
        %2344 = vmatpush1.bf16.msra.mxu0 0
        %2345 = vmatprep.subr.bf16.mxu0 0
        %2346 = vmatpush1.bf16.msra.mxu0 0
        %2347 = vmatprep.subr.bf16.mxu0 0
        %2348 = vmatpush1.bf16.msra.mxu0 0
        %2349 = vmatprep.subr.bf16.mxu0 0
        %2350 = vmatpush1.bf16.msra.mxu0 0
        %2351 = vmatprep.subr.bf16.mxu0 0
        %2352 = vmatpush1.bf16.msra.mxu0 0
        %2353 = vmatprep.mubr.bf16.mxu0 0
        %2354 = vmatmul.mubr.bf16.gmra.mrb[0].mxu0 %v2289
        %v2355 = vpop.f32.mrb[0].mxu0
        %v2356 = vadd.f32 0.0, %v2355
        %v2357 = vpop.f32.mrb[0].mxu0
        %v2358 = vpop.f32.mrb[0].mxu0
        %v2359 = vadd.f32 0.0, %v2358
        %v2360 = vpop.f32.mrb[0].mxu0
        %2361 = vmatprep.mubr.bf16.mxu0 0
        %2362 = vmatmul.mubr.bf16.gmra.mrb[0].mxu0 %v2292
        %v2363 = vpop.f32.mrb[0].mxu0
        %v2364 = vadd.f32 0.0, %v2363
        %v2365 = vpop.f32.mrb[0].mxu0
        %v2366 = vpop.f32.mrb[0].mxu0
        %v2367 = vadd.f32 0.0, %v2366
        %v2368 = vpop.f32.mrb[0].mxu0
        %2369 = vmatprep.mubr.bf16.mxu0 0
        %2370 = vmatmul.mubr.bf16.gmra.mrb[0].mxu0 %v2295
        %v2371 = vpop.f32.mrb[0].mxu0
        %v2372 = vadd.f32 0.0, %v2371
        %v2373 = vpop.f32.mrb[0].mxu0
        %v2374 = vpop.f32.mrb[0].mxu0
        %v2375 = vadd.f32 0.0, %v2374
        %v2376 = vpop.f32.mrb[0].mxu0
        %2377 = vmatprep.mubr.bf16.mxu0 0
        %2378 = vmatmul.mubr.bf16.gmra.mrb[0].mxu0 %v2298
        %v2379 = vpop.f32.mrb[0].mxu0
        %v2380 = vadd.f32 0.0, %v2379
        %v2381 = vpop.f32.mrb[0].mxu0
        %v2382 = vpop.f32.mrb[0].mxu0
        %v2383 = vadd.f32 0.0, %v2382
        %v2384 = vpop.f32.mrb[0].mxu0
        %2385 = vmatprep.mubr.bf16.mxu0 0
        %2386 = vmatmul.mubr.bf16.gmra.mrb[0].mxu0 %v2301
        %v2387 = vpop.f32.mrb[0].mxu0
        %v2388 = vadd.f32 0.0, %v2387
        %v2389 = vpop.f32.mrb[0].mxu0
        %v2390 = vpop.f32.mrb[0].mxu0
        %v2391 = vadd.f32 0.0, %v2390
        %v2392 = vpop.f32.mrb[0].mxu0
        %2393 = vmatprep.mubr.bf16.mxu0 0
        %2394 = vmatmul.mubr.bf16.gmra.mrb[0].mxu0 %v2304
        %v2395 = vpop.f32.mrb[0].mxu0
        %v2396 = vadd.f32 0.0, %v2395
        %v2397 = vpop.f32.mrb[0].mxu0
        %v2398 = vpop.f32.mrb[0].mxu0
        %v2399 = vadd.f32 0.0, %v2398
        %v2400 = vpop.f32.mrb[0].mxu0
        %2401 = vmatprep.mubr.bf16.mxu0 0
        %2402 = vmatmul.mubr.bf16.gmra.mrb[0].mxu0 %v2307
        %v2403 = vpop.f32.mrb[0].mxu0
        %v2404 = vadd.f32 0.0, %v2403
        %v2405 = vpop.f32.mrb[0].mxu0
        %v2406 = vpop.f32.mrb[0].mxu0
        %v2407 = vadd.f32 0.0, %v2406
        %v2408 = vpop.f32.mrb[0].mxu0
        %2409 = vmatprep.mubr.bf16.mxu0 0
        %2410 = vmatmul.mubr.bf16.gmra.mrb[0].mxu0 %v2310
        %v2411 = vpop.f32.mrb[0].mxu0
        %v2412 = vadd.f32 0.0, %v2411
        %v2413 = vpop.f32.mrb[0].mxu0
        %v2414 = vpop.f32.mrb[0].mxu0
        %v2415 = vadd.f32 0.0, %v2414
        %v2416 = vpop.f32.mrb[0].mxu0
        %2417 = vmatprep.mubr.bf16.mxu0 0
        %2418 = vmatmul.mubr.bf16.gmra.mrb[0].mxu0 %v2313
        %v2419 = vpop.f32.mrb[0].mxu0
        %v2420 = vadd.f32 0.0, %v2419
        %v2421 = vpop.f32.mrb[0].mxu0
        %v2422 = vpop.f32.mrb[0].mxu0
        %v2423 = vadd.f32 0.0, %v2422
        %v2424 = vpop.f32.mrb[0].mxu0
        %2425 = vmatprep.mubr.bf16.mxu0 0
        %2426 = vmatmul.mubr.bf16.gmra.mrb[0].mxu0 %v2316
        %v2427 = vpop.f32.mrb[0].mxu0
        %v2428 = vadd.f32 0.0, %v2427
        %v2429 = vpop.f32.mrb[0].mxu0
        %v2430 = vpop.f32.mrb[0].mxu0
        %v2431 = vadd.f32 0.0, %v2430
        %v2432 = vpop.f32.mrb[0].mxu0
        %2433 = vdwg.mxu0
        %v2434 = vadd.f32 %v2192, %v2356
        %v2435 = vadd.f32 %v2193, %v2359
        %v2436 = vadd.f32 %v2194, %v2364
        %v2437 = vadd.f32 %v2195, %v2367
        %v2438 = vadd.f32 %v2196, %v2372
        %v2439 = vadd.f32 %v2197, %v2375
        %v2440 = vadd.f32 %v2198, %v2380
        %v2441 = vadd.f32 %v2199, %v2383
        %v2442 = vadd.f32 %v2200, %v2388
        %v2443 = vadd.f32 %v2201, %v2391
        %v2444 = vadd.f32 %v2202, %v2396
        %v2445 = vadd.f32 %v2203, %v2399
        %v2446 = vadd.f32 %v2204, %v2404
        %v2447 = vadd.f32 %v2205, %v2407
        %v2448 = vadd.f32 %v2206, %v2412
        %v2449 = vadd.f32 %v2207, %v2415
        %v2450 = vadd.f32 %v2208, %v2420
        %v2451 = vadd.f32 %v2209, %v2423
        %v2452 = vadd.f32 %v2210, %v2428
        %v2453 = vadd.f32 %v2211, %v2431
        %v2454 = vld [vmem:[%s2215] sm:$0xf]
        %v2455 = vld [vmem:[%s2215 + $0x4] sm:$0xf]
        %v2456 = vld [vmem:[%s2215 + $0x8] sm:$0x1]
        %v2457 = vld [vmem:[%s2215 + $0xc] sm:$0xf]
        %v2458 = vld [vmem:[%s2215 + $0x10] sm:$0xf]
        %v2459 = vld [vmem:[%s2215 + $0x14] sm:$0x1]
        %v2460 = vld [vmem:[%s2215 + $0x18] sm:$0xf]
        %v2461 = vld [vmem:[%s2215 + $0x1c] sm:$0xf]
        %v2462 = vld [vmem:[%s2215 + $0x20] sm:$0x1]
        %v2463 = vld [vmem:[%s2215 + $0x24] sm:$0xf]
        %v2464 = vld [vmem:[%s2215 + $0x28] sm:$0xf]
        %v2465 = vld [vmem:[%s2215 + $0x2c] sm:$0x1]
        %v2466 = vld [vmem:[%s2215 + $0x30] sm:$0xf]
        %v2467 = vld [vmem:[%s2215 + $0x34] sm:$0xf]
        %v2468 = vld [vmem:[%s2215 + $0x38] sm:$0x1]
        %v2469 = vld [vmem:[%s2215 + $0x3c] sm:$0xf]
        %v2470 = vld [vmem:[%s2215 + $0x40] sm:$0xf]
        %v2471 = vld [vmem:[%s2215 + $0x44] sm:$0x1]
        %v2472 = vld [vmem:[%s2215 + $0x48] sm:$0xf]
        %v2473 = vld [vmem:[%s2215 + $0x4c] sm:$0xf]
        %v2474 = vld [vmem:[%s2215 + $0x50] sm:$0x1]
        %v2475 = vld [vmem:[%s2215 + $0x54] sm:$0xf]
        %v2476 = vld [vmem:[%s2215 + $0x58] sm:$0xf]
        %v2477 = vld [vmem:[%s2215 + $0x5c] sm:$0x1]
        %v2478 = vld [vmem:[%s2215 + $0x60] sm:$0xf]
        %v2479 = vld [vmem:[%s2215 + $0x64] sm:$0xf]
        %v2480 = vld [vmem:[%s2215 + $0x68] sm:$0x1]
        %v2481 = vld [vmem:[%s2215 + $0x6c] sm:$0xf]
        %v2482 = vld [vmem:[%s2215 + $0x70] sm:$0xf]
        %v2483 = vld [vmem:[%s2215 + $0x74] sm:$0x1]
        %v2485 = vshrl.u32 %v2454, 16
        %v2487 = vrot.slane %v2485, 4
        %v2488 = vshll.u32 %v2454, 16
        %v2490 = vrot.slane %v2488, 5
        %v2491 = vor.u32 %v2487, %v2490
        %v2492 = vrot.slane %v2491, 4
        %v2494 = vshll.u32 %v2455, 16
        %v2496 = vrot.slane %v2494, 5
        %v2497 = vsel %vm276, %v2492, %v2496
        %v2498 = vshrl.u32 %v2455, 16
        %v2500 = vrot.slane %v2498, 4
        %v2501 = vor.u32 %v2500, %v2496
        %v2502 = vrot.slane %v2501, 4
        %v2504 = vshll.u32 %v2456, 16
        %v2506 = vrot.slane %v2504, 5
        %v2507 = vsel %vm276, %v2502, %v2506
        %v2509 = vshrl.u32 %v2457, 16
        %v2511 = vrot.slane %v2509, 4
        %v2512 = vshll.u32 %v2457, 16
        %v2514 = vrot.slane %v2512, 5
        %v2515 = vor.u32 %v2511, %v2514
        %v2516 = vrot.slane %v2515, 4
        %v2518 = vshll.u32 %v2458, 16
        %v2520 = vrot.slane %v2518, 5
        %v2521 = vsel %vm276, %v2516, %v2520
        %v2522 = vshrl.u32 %v2458, 16
        %v2524 = vrot.slane %v2522, 4
        %v2525 = vor.u32 %v2524, %v2520
        %v2526 = vrot.slane %v2525, 4
        %v2528 = vshll.u32 %v2459, 16
        %v2530 = vrot.slane %v2528, 5
        %v2531 = vsel %vm276, %v2526, %v2530
        %v2533 = vshrl.u32 %v2460, 16
        %v2535 = vrot.slane %v2533, 4
        %v2536 = vshll.u32 %v2460, 16
        %v2538 = vrot.slane %v2536, 5
        %v2539 = vor.u32 %v2535, %v2538
        %v2540 = vrot.slane %v2539, 4
        %v2542 = vshll.u32 %v2461, 16
        %v2544 = vrot.slane %v2542, 5
        %v2545 = vsel %vm276, %v2540, %v2544
        %v2546 = vshrl.u32 %v2461, 16
        %v2548 = vrot.slane %v2546, 4
        %v2549 = vor.u32 %v2548, %v2544
        %v2550 = vrot.slane %v2549, 4
        %v2552 = vshll.u32 %v2462, 16
        %v2554 = vrot.slane %v2552, 5
        %v2555 = vsel %vm276, %v2550, %v2554
        %v2557 = vshrl.u32 %v2463, 16
        %v2559 = vrot.slane %v2557, 4
        %v2560 = vshll.u32 %v2463, 16
        %v2562 = vrot.slane %v2560, 5
        %v2563 = vor.u32 %v2559, %v2562
        %v2564 = vrot.slane %v2563, 4
        %v2566 = vshll.u32 %v2464, 16
        %v2568 = vrot.slane %v2566, 5
        %v2569 = vsel %vm276, %v2564, %v2568
        %v2570 = vshrl.u32 %v2464, 16
        %v2572 = vrot.slane %v2570, 4
        %v2573 = vor.u32 %v2572, %v2568
        %v2574 = vrot.slane %v2573, 4
        %v2576 = vshll.u32 %v2465, 16
        %v2578 = vrot.slane %v2576, 5
        %v2579 = vsel %vm276, %v2574, %v2578
        %v2581 = vshrl.u32 %v2466, 16
        %v2583 = vrot.slane %v2581, 4
        %v2584 = vshll.u32 %v2466, 16
        %v2586 = vrot.slane %v2584, 5
        %v2587 = vor.u32 %v2583, %v2586
        %v2588 = vrot.slane %v2587, 4
        %v2590 = vshll.u32 %v2467, 16
        %v2592 = vrot.slane %v2590, 5
        %v2593 = vsel %vm276, %v2588, %v2592
        %v2594 = vshrl.u32 %v2467, 16
        %v2596 = vrot.slane %v2594, 4
        %v2597 = vor.u32 %v2596, %v2592
        %v2598 = vrot.slane %v2597, 4
        %v2600 = vshll.u32 %v2468, 16
        %v2602 = vrot.slane %v2600, 5
        %v2603 = vsel %vm276, %v2598, %v2602
        %v2605 = vshrl.u32 %v2469, 16
        %v2607 = vrot.slane %v2605, 4
        %v2608 = vshll.u32 %v2469, 16
        %v2610 = vrot.slane %v2608, 5
        %v2611 = vor.u32 %v2607, %v2610
        %v2612 = vrot.slane %v2611, 4
        %v2614 = vshll.u32 %v2470, 16
        %v2616 = vrot.slane %v2614, 5
        %v2617 = vsel %vm276, %v2612, %v2616
        %v2618 = vshrl.u32 %v2470, 16
        %v2620 = vrot.slane %v2618, 4
        %v2621 = vor.u32 %v2620, %v2616
        %v2622 = vrot.slane %v2621, 4
        %v2624 = vshll.u32 %v2471, 16
        %v2626 = vrot.slane %v2624, 5
        %v2627 = vsel %vm276, %v2622, %v2626
        %v2629 = vshrl.u32 %v2472, 16
        %v2631 = vrot.slane %v2629, 4
        %v2632 = vshll.u32 %v2472, 16
        %v2634 = vrot.slane %v2632, 5
        %v2635 = vor.u32 %v2631, %v2634
        %v2636 = vrot.slane %v2635, 4
        %v2638 = vshll.u32 %v2473, 16
        %v2640 = vrot.slane %v2638, 5
        %v2641 = vsel %vm276, %v2636, %v2640
        %v2642 = vshrl.u32 %v2473, 16
        %v2644 = vrot.slane %v2642, 4
        %v2645 = vor.u32 %v2644, %v2640
        %v2646 = vrot.slane %v2645, 4
        %v2648 = vshll.u32 %v2474, 16
        %v2650 = vrot.slane %v2648, 5
        %v2651 = vsel %vm276, %v2646, %v2650
        %v2653 = vshrl.u32 %v2475, 16
        %v2655 = vrot.slane %v2653, 4
        %v2656 = vshll.u32 %v2475, 16
        %v2658 = vrot.slane %v2656, 5
        %v2659 = vor.u32 %v2655, %v2658
        %v2660 = vrot.slane %v2659, 4
        %v2662 = vshll.u32 %v2476, 16
        %v2664 = vrot.slane %v2662, 5
        %v2665 = vsel %vm276, %v2660, %v2664
        %v2666 = vshrl.u32 %v2476, 16
        %v2668 = vrot.slane %v2666, 4
        %v2669 = vor.u32 %v2668, %v2664
        %v2670 = vrot.slane %v2669, 4
        %v2672 = vshll.u32 %v2477, 16
        %v2674 = vrot.slane %v2672, 5
        %v2675 = vsel %vm276, %v2670, %v2674
        %v2677 = vshrl.u32 %v2478, 16
        %v2679 = vrot.slane %v2677, 4
        %v2680 = vshll.u32 %v2478, 16
        %v2682 = vrot.slane %v2680, 5
        %v2683 = vor.u32 %v2679, %v2682
        %v2684 = vrot.slane %v2683, 4
        %v2686 = vshll.u32 %v2479, 16
        %v2688 = vrot.slane %v2686, 5
        %v2689 = vsel %vm276, %v2684, %v2688
        %v2690 = vshrl.u32 %v2479, 16
        %v2692 = vrot.slane %v2690, 4
        %v2693 = vor.u32 %v2692, %v2688
        %v2694 = vrot.slane %v2693, 4
        %v2696 = vshll.u32 %v2480, 16
        %v2698 = vrot.slane %v2696, 5
        %v2699 = vsel %vm276, %v2694, %v2698
        %v2701 = vshrl.u32 %v2481, 16
        %v2703 = vrot.slane %v2701, 4
        %v2704 = vshll.u32 %v2481, 16
        %v2706 = vrot.slane %v2704, 5
        %v2707 = vor.u32 %v2703, %v2706
        %v2708 = vrot.slane %v2707, 4
        %v2710 = vshll.u32 %v2482, 16
        %v2712 = vrot.slane %v2710, 5
        %v2713 = vsel %vm276, %v2708, %v2712
        %v2714 = vshrl.u32 %v2482, 16
        %v2716 = vrot.slane %v2714, 4
        %v2717 = vor.u32 %v2716, %v2712
        %v2718 = vrot.slane %v2717, 4
        %v2720 = vshll.u32 %v2483, 16
        %v2722 = vrot.slane %v2720, 5
        %v2723 = vsel %vm276, %v2718, %v2722
        %s2724 = scalar_lea.vmem %s1, 14
        %v2725 = vld [vmem:[%s2724] sm:$0x3]
        %v2726 = vunpack.c.l.b16 %v2497
        %v2727 = vunpack.c.l.b16 %v2507
        %v2728 = vunpack.c.l.b16 %v2521
        %v2729 = vunpack.c.l.b16 %v2531
        %v2730 = vunpack.c.l.b16 %v2545
        %v2731 = vunpack.c.l.b16 %v2555
        %v2732 = vunpack.c.l.b16 %v2569
        %v2733 = vunpack.c.l.b16 %v2579
        %v2734 = vunpack.c.l.b16 %v2593
        %v2735 = vunpack.c.l.b16 %v2603
        %v2736 = vunpack.c.l.b16 %v2617
        %v2737 = vunpack.c.l.b16 %v2627
        %v2738 = vunpack.c.l.b16 %v2641
        %v2739 = vunpack.c.l.b16 %v2651
        %v2740 = vunpack.c.l.b16 %v2665
        %v2741 = vunpack.c.l.b16 %v2675
        %v2742 = vunpack.c.l.b16 %v2689
        %v2743 = vunpack.c.l.b16 %v2699
        %v2744 = vunpack.c.l.b16 %v2713
        %v2745 = vunpack.c.l.b16 %v2723
        %v2746 = vpack.c.b16 %v2727, %v2726
        %v2747 = vpack.c.b16 %v2729, %v2728
        %v2748 = vpack.c.b16 %v2731, %v2730
        %v2749 = vpack.c.b16 %v2733, %v2732
        %v2750 = vpack.c.b16 %v2735, %v2734
        %v2751 = vpack.c.b16 %v2737, %v2736
        %v2752 = vpack.c.b16 %v2739, %v2738
        %v2753 = vpack.c.b16 %v2741, %v2740
        %v2754 = vpack.c.b16 %v2743, %v2742
        %v2755 = vpack.c.b16 %v2745, %v2744
        %v2757 = vsel %vm549, %v2746, 0
        %v2760 = vsel %vm549, %v2747, 0
        %v2763 = vsel %vm549, %v2748, 0
        %v2766 = vsel %vm549, %v2749, 0
        %v2769 = vsel %vm549, %v2750, 0
        %v2772 = vsel %vm549, %v2751, 0
        %v2775 = vsel %vm549, %v2752, 0
        %v2778 = vsel %vm549, %v2753, 0
        %v2781 = vsel %vm549, %v2754, 0
        %v2784 = vsel %vm549, %v2755, 0
        %v2787 = vsel %vm580, %v2725, 0
        %2789 = vmatprep.subr.bf16.mxu0 0
        %2790 = vmatpush1.bf16.msra.mxu0 %v2787
        %2791 = vmatprep.subr.bf16.mxu0 0
        %2792 = vmatpush1.bf16.msra.mxu0 0
        %2793 = vmatprep.subr.bf16.mxu0 0
        %2794 = vmatpush1.bf16.msra.mxu0 0
        %2795 = vmatprep.subr.bf16.mxu0 0
        %2796 = vmatpush1.bf16.msra.mxu0 0
        %2797 = vmatprep.subr.bf16.mxu0 0
        %2798 = vmatpush1.bf16.msra.mxu0 0
        %2799 = vmatprep.subr.bf16.mxu0 0
        %2800 = vmatpush1.bf16.msra.mxu0 0
        %2801 = vmatprep.subr.bf16.mxu0 0
        %2802 = vmatpush1.bf16.msra.mxu0 0
        %2803 = vmatprep.subr.bf16.mxu0 0
        %2804 = vmatpush1.bf16.msra.mxu0 0
        %2805 = vmatprep.subr.bf16.mxu0 0
        %2806 = vmatpush1.bf16.msra.mxu0 0
        %2807 = vmatprep.subr.bf16.mxu0 0
        %2808 = vmatpush1.bf16.msra.mxu0 0
        %2809 = vmatprep.subr.bf16.mxu0 0
        %2810 = vmatpush1.bf16.msra.mxu0 0
        %2811 = vmatprep.subr.bf16.mxu0 0
        %2812 = vmatpush1.bf16.msra.mxu0 0
        %2813 = vmatprep.subr.bf16.mxu0 0
        %2814 = vmatpush1.bf16.msra.mxu0 0
        %2815 = vmatprep.subr.bf16.mxu0 0
        %2816 = vmatpush1.bf16.msra.mxu0 0
        %2817 = vmatprep.subr.bf16.mxu0 0
        %2818 = vmatpush1.bf16.msra.mxu0 0
        %2819 = vmatprep.subr.bf16.mxu0 0
        %2820 = vmatpush1.bf16.msra.mxu0 0
        %2821 = vmatprep.mubr.bf16.mxu0 0
        %2822 = vmatmul.mubr.bf16.gmra.mrb[0].mxu0 %v2757
        %v2823 = vpop.f32.mrb[0].mxu0
        %v2824 = vadd.f32 0.0, %v2823
        %v2825 = vpop.f32.mrb[0].mxu0
        %v2826 = vpop.f32.mrb[0].mxu0
        %v2827 = vadd.f32 0.0, %v2826
        %v2828 = vpop.f32.mrb[0].mxu0
        %2829 = vmatprep.mubr.bf16.mxu0 0
        %2830 = vmatmul.mubr.bf16.gmra.mrb[0].mxu0 %v2760
        %v2831 = vpop.f32.mrb[0].mxu0
        %v2832 = vadd.f32 0.0, %v2831
        %v2833 = vpop.f32.mrb[0].mxu0
        %v2834 = vpop.f32.mrb[0].mxu0
        %v2835 = vadd.f32 0.0, %v2834
        %v2836 = vpop.f32.mrb[0].mxu0
        %2837 = vmatprep.mubr.bf16.mxu0 0
        %2838 = vmatmul.mubr.bf16.gmra.mrb[0].mxu0 %v2763
        %v2839 = vpop.f32.mrb[0].mxu0
        %v2840 = vadd.f32 0.0, %v2839
        %v2841 = vpop.f32.mrb[0].mxu0
        %v2842 = vpop.f32.mrb[0].mxu0
        %v2843 = vadd.f32 0.0, %v2842
        %v2844 = vpop.f32.mrb[0].mxu0
        %2845 = vmatprep.mubr.bf16.mxu0 0
        %2846 = vmatmul.mubr.bf16.gmra.mrb[0].mxu0 %v2766
        %v2847 = vpop.f32.mrb[0].mxu0
        %v2848 = vadd.f32 0.0, %v2847
        %v2849 = vpop.f32.mrb[0].mxu0
        %v2850 = vpop.f32.mrb[0].mxu0
        %v2851 = vadd.f32 0.0, %v2850
        %v2852 = vpop.f32.mrb[0].mxu0
        %2853 = vmatprep.mubr.bf16.mxu0 0
        %2854 = vmatmul.mubr.bf16.gmra.mrb[0].mxu0 %v2769
        %v2855 = vpop.f32.mrb[0].mxu0
        %v2856 = vadd.f32 0.0, %v2855
        %v2857 = vpop.f32.mrb[0].mxu0
        %v2858 = vpop.f32.mrb[0].mxu0
        %v2859 = vadd.f32 0.0, %v2858
        %v2860 = vpop.f32.mrb[0].mxu0
        %2861 = vmatprep.mubr.bf16.mxu0 0
        %2862 = vmatmul.mubr.bf16.gmra.mrb[0].mxu0 %v2772
        %v2863 = vpop.f32.mrb[0].mxu0
        %v2864 = vadd.f32 0.0, %v2863
        %v2865 = vpop.f32.mrb[0].mxu0
        %v2866 = vpop.f32.mrb[0].mxu0
        %v2867 = vadd.f32 0.0, %v2866
        %v2868 = vpop.f32.mrb[0].mxu0
        %2869 = vmatprep.mubr.bf16.mxu0 0
        %2870 = vmatmul.mubr.bf16.gmra.mrb[0].mxu0 %v2775
        %v2871 = vpop.f32.mrb[0].mxu0
        %v2872 = vadd.f32 0.0, %v2871
        %v2873 = vpop.f32.mrb[0].mxu0
        %v2874 = vpop.f32.mrb[0].mxu0
        %v2875 = vadd.f32 0.0, %v2874
        %v2876 = vpop.f32.mrb[0].mxu0
        %2877 = vmatprep.mubr.bf16.mxu0 0
        %2878 = vmatmul.mubr.bf16.gmra.mrb[0].mxu0 %v2778
        %v2879 = vpop.f32.mrb[0].mxu0
        %v2880 = vadd.f32 0.0, %v2879
        %v2881 = vpop.f32.mrb[0].mxu0
        %v2882 = vpop.f32.mrb[0].mxu0
        %v2883 = vadd.f32 0.0, %v2882
        %v2884 = vpop.f32.mrb[0].mxu0
        %2885 = vmatprep.mubr.bf16.mxu0 0
        %2886 = vmatmul.mubr.bf16.gmra.mrb[0].mxu0 %v2781
        %v2887 = vpop.f32.mrb[0].mxu0
        %v2888 = vadd.f32 0.0, %v2887
        %v2889 = vpop.f32.mrb[0].mxu0
        %v2890 = vpop.f32.mrb[0].mxu0
        %v2891 = vadd.f32 0.0, %v2890
        %v2892 = vpop.f32.mrb[0].mxu0
        %2893 = vmatprep.mubr.bf16.mxu0 0
        %2894 = vmatmul.mubr.bf16.gmra.mrb[0].mxu0 %v2784
        %v2895 = vpop.f32.mrb[0].mxu0
        %v2896 = vadd.f32 0.0, %v2895
        %v2897 = vpop.f32.mrb[0].mxu0
        %v2898 = vpop.f32.mrb[0].mxu0
        %v2899 = vadd.f32 0.0, %v2898
        %v2900 = vpop.f32.mrb[0].mxu0
        %2901 = vdwg.mxu0
        %v2902 = vadd.f32 %v2434, %v2824
        %v2903 = vadd.f32 %v2435, %v2827
        %v2904 = vadd.f32 %v2436, %v2832
        %v2905 = vadd.f32 %v2437, %v2835
        %v2906 = vadd.f32 %v2438, %v2840
        %v2907 = vadd.f32 %v2439, %v2843
        %v2908 = vadd.f32 %v2440, %v2848
        %v2909 = vadd.f32 %v2441, %v2851
        %v2910 = vadd.f32 %v2442, %v2856
        %v2911 = vadd.f32 %v2443, %v2859
        %v2912 = vadd.f32 %v2444, %v2864
        %v2913 = vadd.f32 %v2445, %v2867
        %v2914 = vadd.f32 %v2446, %v2872
        %v2915 = vadd.f32 %v2447, %v2875
        %v2916 = vadd.f32 %v2448, %v2880
        %v2917 = vadd.f32 %v2449, %v2883
        %v2918 = vadd.f32 %v2450, %v2888
        %v2919 = vadd.f32 %v2451, %v2891
        %v2920 = vadd.f32 %v2452, %v2896
        %v2921 = vadd.f32 %v2453, %v2899
        %v2922 = vld [vmem:[%s2215] sm:$0xe]
        %v2923 = vld [vmem:[%s2215 + $0xc] sm:$0xe]
        %v2924 = vld [vmem:[%s2215 + $0x18] sm:$0xe]
        %v2925 = vld [vmem:[%s2215 + $0x24] sm:$0xe]
        %v2926 = vld [vmem:[%s2215 + $0x30] sm:$0xe]
        %v2927 = vld [vmem:[%s2215 + $0x3c] sm:$0xe]
        %v2928 = vld [vmem:[%s2215 + $0x48] sm:$0xe]
        %v2929 = vld [vmem:[%s2215 + $0x54] sm:$0xe]
        %v2930 = vld [vmem:[%s2215 + $0x60] sm:$0xe]
        %v2931 = vld [vmem:[%s2215 + $0x6c] sm:$0xe]
        %v2962 = vrot.slane %v2922, 5
        %v2963 = vrot.slane %v2962, 4
        %v2964 = vrot.slane %v2455, 5
        %v2965 = vsel %vm925, %v2963, %v2964
        %v2966 = vrot.slane %v2964, 4
        %v2967 = vrot.slane %v2456, 5
        %v2968 = vsel %vm925, %v2966, %v2967
        %v2969 = vrot.slane %v2923, 5
        %v2970 = vrot.slane %v2969, 4
        %v2971 = vrot.slane %v2458, 5
        %v2972 = vsel %vm925, %v2970, %v2971
        %v2973 = vrot.slane %v2971, 4
        %v2974 = vrot.slane %v2459, 5
        %v2975 = vsel %vm925, %v2973, %v2974
        %v2976 = vrot.slane %v2924, 5
        %v2977 = vrot.slane %v2976, 4
        %v2978 = vrot.slane %v2461, 5
        %v2979 = vsel %vm925, %v2977, %v2978
        %v2980 = vrot.slane %v2978, 4
        %v2981 = vrot.slane %v2462, 5
        %v2982 = vsel %vm925, %v2980, %v2981
        %v2983 = vrot.slane %v2925, 5
        %v2984 = vrot.slane %v2983, 4
        %v2985 = vrot.slane %v2464, 5
        %v2986 = vsel %vm925, %v2984, %v2985
        %v2987 = vrot.slane %v2985, 4
        %v2988 = vrot.slane %v2465, 5
        %v2989 = vsel %vm925, %v2987, %v2988
        %v2990 = vrot.slane %v2926, 5
        %v2991 = vrot.slane %v2990, 4
        %v2992 = vrot.slane %v2467, 5
        %v2993 = vsel %vm925, %v2991, %v2992
        %v2994 = vrot.slane %v2992, 4
        %v2995 = vrot.slane %v2468, 5
        %v2996 = vsel %vm925, %v2994, %v2995
        %v2997 = vrot.slane %v2927, 5
        %v2998 = vrot.slane %v2997, 4
        %v2999 = vrot.slane %v2470, 5
        %v3000 = vsel %vm925, %v2998, %v2999
        %v3001 = vrot.slane %v2999, 4
        %v3002 = vrot.slane %v2471, 5
        %v3003 = vsel %vm925, %v3001, %v3002
        %v3004 = vrot.slane %v2928, 5
        %v3005 = vrot.slane %v3004, 4
        %v3006 = vrot.slane %v2473, 5
        %v3007 = vsel %vm925, %v3005, %v3006
        %v3008 = vrot.slane %v3006, 4
        %v3009 = vrot.slane %v2474, 5
        %v3010 = vsel %vm925, %v3008, %v3009
        %v3011 = vrot.slane %v2929, 5
        %v3012 = vrot.slane %v3011, 4
        %v3013 = vrot.slane %v2476, 5
        %v3014 = vsel %vm925, %v3012, %v3013
        %v3015 = vrot.slane %v3013, 4
        %v3016 = vrot.slane %v2477, 5
        %v3017 = vsel %vm925, %v3015, %v3016
        %v3018 = vrot.slane %v2930, 5
        %v3019 = vrot.slane %v3018, 4
        %v3020 = vrot.slane %v2479, 5
        %v3021 = vsel %vm925, %v3019, %v3020
        %v3022 = vrot.slane %v3020, 4
        %v3023 = vrot.slane %v2480, 5
        %v3024 = vsel %vm925, %v3022, %v3023
        %v3025 = vrot.slane %v2931, 5
        %v3026 = vrot.slane %v3025, 4
        %v3027 = vrot.slane %v2482, 5
        %v3028 = vsel %vm925, %v3026, %v3027
        %v3029 = vrot.slane %v3027, 4
        %v3030 = vrot.slane %v2483, 5
        %v3031 = vsel %vm925, %v3029, %v3030
        %s3032 = scalar_lea.vmem %s1, 16
        %v3033 = vld [vmem:[%s3032] sm:$0x3]
        %v3034 = vunpack.c.l.b16 %v2965
        %v3035 = vunpack.c.l.b16 %v2968
        %v3036 = vunpack.c.l.b16 %v2972
        %v3037 = vunpack.c.l.b16 %v2975
        %v3038 = vunpack.c.l.b16 %v2979
        %v3039 = vunpack.c.l.b16 %v2982
        %v3040 = vunpack.c.l.b16 %v2986
        %v3041 = vunpack.c.l.b16 %v2989
        %v3042 = vunpack.c.l.b16 %v2993
        %v3043 = vunpack.c.l.b16 %v2996
        %v3044 = vunpack.c.l.b16 %v3000
        %v3045 = vunpack.c.l.b16 %v3003
        %v3046 = vunpack.c.l.b16 %v3007
        %v3047 = vunpack.c.l.b16 %v3010
        %v3048 = vunpack.c.l.b16 %v3014
        %v3049 = vunpack.c.l.b16 %v3017
        %v3050 = vunpack.c.l.b16 %v3021
        %v3051 = vunpack.c.l.b16 %v3024
        %v3052 = vunpack.c.l.b16 %v3028
        %v3053 = vunpack.c.l.b16 %v3031
        %v3054 = vpack.c.b16 %v3035, %v3034
        %v3055 = vpack.c.b16 %v3037, %v3036
        %v3056 = vpack.c.b16 %v3039, %v3038
        %v3057 = vpack.c.b16 %v3041, %v3040
        %v3058 = vpack.c.b16 %v3043, %v3042
        %v3059 = vpack.c.b16 %v3045, %v3044
        %v3060 = vpack.c.b16 %v3047, %v3046
        %v3061 = vpack.c.b16 %v3049, %v3048
        %v3062 = vpack.c.b16 %v3051, %v3050
        %v3063 = vpack.c.b16 %v3053, %v3052
        %v3065 = vsel %vm549, %v3054, 0
        %v3068 = vsel %vm549, %v3055, 0
        %v3071 = vsel %vm549, %v3056, 0
        %v3074 = vsel %vm549, %v3057, 0
        %v3077 = vsel %vm549, %v3058, 0
        %v3080 = vsel %vm549, %v3059, 0
        %v3083 = vsel %vm549, %v3060, 0
        %v3086 = vsel %vm549, %v3061, 0
        %v3089 = vsel %vm549, %v3062, 0
        %v3092 = vsel %vm549, %v3063, 0
        %v3095 = vsel %vm580, %v3033, 0
        %3097 = vmatprep.subr.bf16.mxu0 0
        %3098 = vmatpush1.bf16.msra.mxu0 %v3095
        %3099 = vmatprep.subr.bf16.mxu0 0
        %3100 = vmatpush1.bf16.msra.mxu0 0
        %3101 = vmatprep.subr.bf16.mxu0 0
        %3102 = vmatpush1.bf16.msra.mxu0 0
        %3103 = vmatprep.subr.bf16.mxu0 0
        %3104 = vmatpush1.bf16.msra.mxu0 0
        %3105 = vmatprep.subr.bf16.mxu0 0
        %3106 = vmatpush1.bf16.msra.mxu0 0
        %3107 = vmatprep.subr.bf16.mxu0 0
        %3108 = vmatpush1.bf16.msra.mxu0 0
        %3109 = vmatprep.subr.bf16.mxu0 0
        %3110 = vmatpush1.bf16.msra.mxu0 0
        %3111 = vmatprep.subr.bf16.mxu0 0
        %3112 = vmatpush1.bf16.msra.mxu0 0
        %3113 = vmatprep.subr.bf16.mxu0 0
        %3114 = vmatpush1.bf16.msra.mxu0 0
        %3115 = vmatprep.subr.bf16.mxu0 0
        %3116 = vmatpush1.bf16.msra.mxu0 0
        %3117 = vmatprep.subr.bf16.mxu0 0
        %3118 = vmatpush1.bf16.msra.mxu0 0
        %3119 = vmatprep.subr.bf16.mxu0 0
        %3120 = vmatpush1.bf16.msra.mxu0 0
        %3121 = vmatprep.subr.bf16.mxu0 0
        %3122 = vmatpush1.bf16.msra.mxu0 0
        %3123 = vmatprep.subr.bf16.mxu0 0
        %3124 = vmatpush1.bf16.msra.mxu0 0
        %3125 = vmatprep.subr.bf16.mxu0 0
        %3126 = vmatpush1.bf16.msra.mxu0 0
        %3127 = vmatprep.subr.bf16.mxu0 0
        %3128 = vmatpush1.bf16.msra.mxu0 0
        %3129 = vmatprep.mubr.bf16.mxu0 0
        %3130 = vmatmul.mubr.bf16.gmra.mrb[0].mxu0 %v3065
        %v3131 = vpop.f32.mrb[0].mxu0
        %v3132 = vadd.f32 0.0, %v3131
        %v3133 = vpop.f32.mrb[0].mxu0
        %v3134 = vpop.f32.mrb[0].mxu0
        %v3135 = vadd.f32 0.0, %v3134
        %v3136 = vpop.f32.mrb[0].mxu0
        %3137 = vmatprep.mubr.bf16.mxu0 0
        %3138 = vmatmul.mubr.bf16.gmra.mrb[0].mxu0 %v3068
        %v3139 = vpop.f32.mrb[0].mxu0
        %v3140 = vadd.f32 0.0, %v3139
        %v3141 = vpop.f32.mrb[0].mxu0
        %v3142 = vpop.f32.mrb[0].mxu0
        %v3143 = vadd.f32 0.0, %v3142
        %v3144 = vpop.f32.mrb[0].mxu0
        %3145 = vmatprep.mubr.bf16.mxu0 0
        %3146 = vmatmul.mubr.bf16.gmra.mrb[0].mxu0 %v3071
        %v3147 = vpop.f32.mrb[0].mxu0
        %v3148 = vadd.f32 0.0, %v3147
        %v3149 = vpop.f32.mrb[0].mxu0
        %v3150 = vpop.f32.mrb[0].mxu0
        %v3151 = vadd.f32 0.0, %v3150
        %v3152 = vpop.f32.mrb[0].mxu0
        %3153 = vmatprep.mubr.bf16.mxu0 0
        %3154 = vmatmul.mubr.bf16.gmra.mrb[0].mxu0 %v3074
        %v3155 = vpop.f32.mrb[0].mxu0
        %v3156 = vadd.f32 0.0, %v3155
        %v3157 = vpop.f32.mrb[0].mxu0
        %v3158 = vpop.f32.mrb[0].mxu0
        %v3159 = vadd.f32 0.0, %v3158
        %v3160 = vpop.f32.mrb[0].mxu0
        %3161 = vmatprep.mubr.bf16.mxu0 0
        %3162 = vmatmul.mubr.bf16.gmra.mrb[0].mxu0 %v3077
        %v3163 = vpop.f32.mrb[0].mxu0
        %v3164 = vadd.f32 0.0, %v3163
        %v3165 = vpop.f32.mrb[0].mxu0
        %v3166 = vpop.f32.mrb[0].mxu0
        %v3167 = vadd.f32 0.0, %v3166
        %v3168 = vpop.f32.mrb[0].mxu0
        %3169 = vmatprep.mubr.bf16.mxu0 0
        %3170 = vmatmul.mubr.bf16.gmra.mrb[0].mxu0 %v3080
        %v3171 = vpop.f32.mrb[0].mxu0
        %v3172 = vadd.f32 0.0, %v3171
        %v3173 = vpop.f32.mrb[0].mxu0
        %v3174 = vpop.f32.mrb[0].mxu0
        %v3175 = vadd.f32 0.0, %v3174
        %v3176 = vpop.f32.mrb[0].mxu0
        %3177 = vmatprep.mubr.bf16.mxu0 0
        %3178 = vmatmul.mubr.bf16.gmra.mrb[0].mxu0 %v3083
        %v3179 = vpop.f32.mrb[0].mxu0
        %v3180 = vadd.f32 0.0, %v3179
        %v3181 = vpop.f32.mrb[0].mxu0
        %v3182 = vpop.f32.mrb[0].mxu0
        %v3183 = vadd.f32 0.0, %v3182
        %v3184 = vpop.f32.mrb[0].mxu0
        %3185 = vmatprep.mubr.bf16.mxu0 0
        %3186 = vmatmul.mubr.bf16.gmra.mrb[0].mxu0 %v3086
        %v3187 = vpop.f32.mrb[0].mxu0
        %v3188 = vadd.f32 0.0, %v3187
        %v3189 = vpop.f32.mrb[0].mxu0
        %v3190 = vpop.f32.mrb[0].mxu0
        %v3191 = vadd.f32 0.0, %v3190
        %v3192 = vpop.f32.mrb[0].mxu0
        %3193 = vmatprep.mubr.bf16.mxu0 0
        %3194 = vmatmul.mubr.bf16.gmra.mrb[0].mxu0 %v3089
        %v3195 = vpop.f32.mrb[0].mxu0
        %v3196 = vadd.f32 0.0, %v3195
        %v3197 = vpop.f32.mrb[0].mxu0
        %v3198 = vpop.f32.mrb[0].mxu0
        %v3199 = vadd.f32 0.0, %v3198
        %v3200 = vpop.f32.mrb[0].mxu0
        %3201 = vmatprep.mubr.bf16.mxu0 0
        %3202 = vmatmul.mubr.bf16.gmra.mrb[0].mxu0 %v3092
        %v3203 = vpop.f32.mrb[0].mxu0
        %v3204 = vadd.f32 0.0, %v3203
        %v3205 = vpop.f32.mrb[0].mxu0
        %v3206 = vpop.f32.mrb[0].mxu0
        %v3207 = vadd.f32 0.0, %v3206
        %v3208 = vpop.f32.mrb[0].mxu0
        %3209 = vdwg.mxu0
        %v3210 = vadd.f32 %v2902, %v3132
        %v3211 = vadd.f32 %v2903, %v3135
        %v3212 = vadd.f32 %v2904, %v3140
        %v3213 = vadd.f32 %v2905, %v3143
        %v3214 = vadd.f32 %v2906, %v3148
        %v3215 = vadd.f32 %v2907, %v3151
        %v3216 = vadd.f32 %v2908, %v3156
        %v3217 = vadd.f32 %v2909, %v3159
        %v3218 = vadd.f32 %v2910, %v3164
        %v3219 = vadd.f32 %v2911, %v3167
        %v3220 = vadd.f32 %v2912, %v3172
        %v3221 = vadd.f32 %v2913, %v3175
        %v3222 = vadd.f32 %v2914, %v3180
        %v3223 = vadd.f32 %v2915, %v3183
        %v3224 = vadd.f32 %v2916, %v3188
        %v3225 = vadd.f32 %v2917, %v3191
        %v3226 = vadd.f32 %v2918, %v3196
        %v3227 = vadd.f32 %v2919, %v3199
        %v3228 = vadd.f32 %v2920, %v3204
        %v3229 = vadd.f32 %v2921, %v3207
        %v3230 = vld [vmem:[%s2] sm:$0x1]
        %v3232 = vlaneseq
        %v3233 = vshrl.u32 %v3232, 7
        %v3234 = vsub.s32 0, %v3233
        %v3235 = vrot.slane %v3230, %v3234
        %v3237 = vadd.f32 %v3210, %v3235
        %v3238 = vadd.f32 %v3211, %v3235
        %v3239 = vadd.f32 %v3212, %v3235
        %v3240 = vadd.f32 %v3213, %v3235
        %v3241 = vadd.f32 %v3214, %v3235
        %v3242 = vadd.f32 %v3215, %v3235
        %v3243 = vadd.f32 %v3216, %v3235
        %v3244 = vadd.f32 %v3217, %v3235
        %v3245 = vadd.f32 %v3218, %v3235
        %v3246 = vadd.f32 %v3219, %v3235
        %v3247 = vadd.f32 %v3220, %v3235
        %v3248 = vadd.f32 %v3221, %v3235
        %v3249 = vadd.f32 %v3222, %v3235
        %v3250 = vadd.f32 %v3223, %v3235
        %v3251 = vadd.f32 %v3224, %v3235
        %v3252 = vadd.f32 %v3225, %v3235
        %v3253 = vadd.f32 %v3226, %v3235
        %v3254 = vadd.f32 %v3227, %v3235
        %v3255 = vadd.f32 %v3228, %v3235
        %v3256 = vadd.f32 %v3229, %v3235
        %v3257 = vmax.f32 %v3237, 0.0
        %v3258 = vmax.f32 %v3238, 0.0
        %v3259 = vmax.f32 %v3239, 0.0
        %v3260 = vmax.f32 %v3240, 0.0
        %v3261 = vmax.f32 %v3241, 0.0
        %v3262 = vmax.f32 %v3242, 0.0
        %v3263 = vmax.f32 %v3243, 0.0
        %v3264 = vmax.f32 %v3244, 0.0
        %v3265 = vmax.f32 %v3245, 0.0
        %v3266 = vmax.f32 %v3246, 0.0
        %v3267 = vmax.f32 %v3247, 0.0
        %v3268 = vmax.f32 %v3248, 0.0
        %v3269 = vmax.f32 %v3249, 0.0
        %v3270 = vmax.f32 %v3250, 0.0
        %v3271 = vmax.f32 %v3251, 0.0
        %v3272 = vmax.f32 %v3252, 0.0
        %v3273 = vmax.f32 %v3253, 0.0
        %v3274 = vmax.f32 %v3254, 0.0
        %v3275 = vmax.f32 %v3255, 0.0
        %v3276 = vmax.f32 %v3256, 0.0
        %vm3277 = vcmask 253952
        %vm3278 = vsmask.f32 256
        %vm3279 = vmand %vm3277, %vm3278
        %v3280 = vld [vmem:[#allocation2] sm:$0x1]
        %v3281 = vsel %vm3279, 0, %v3280
        %3282 = vst [vmem:[#allocation2] sm:$0x1] %v3281
        %v3283 = vld [vmem:[#allocation2 + $0xc] sm:$0x1]
        %v3284 = vsel %vm3279, 0, %v3283
        %3285 = vst [vmem:[#allocation2 + $0xc] sm:$0x1] %v3284
        %v3286 = vld [vmem:[#allocation2 + $0x18] sm:$0x1]
        %v3287 = vsel %vm3279, 0, %v3286
        %3288 = vst [vmem:[#allocation2 + $0x18] sm:$0x1] %v3287
        %v3289 = vld [vmem:[#allocation2 + $0x24] sm:$0x1]
        %v3290 = vsel %vm3279, 0, %v3289
        %3291 = vst [vmem:[#allocation2 + $0x24] sm:$0x1] %v3290
        %v3292 = vld [vmem:[#allocation2 + $0x30] sm:$0x1]
        %v3293 = vsel %vm3279, 0, %v3292
        %3294 = vst [vmem:[#allocation2 + $0x30] sm:$0x1] %v3293
        %v3295 = vld [vmem:[#allocation2 + $0x3c] sm:$0x1]
        %v3296 = vsel %vm3279, 0, %v3295
        %3297 = vst [vmem:[#allocation2 + $0x3c] sm:$0x1] %v3296
        %v3298 = vld [vmem:[#allocation2 + $0x48] sm:$0x1]
        %v3299 = vsel %vm3279, 0, %v3298
        %3300 = vst [vmem:[#allocation2 + $0x48] sm:$0x1] %v3299
        %v3301 = vld [vmem:[#allocation2 + $0x54] sm:$0x1]
        %v3302 = vsel %vm3279, 0, %v3301
        %3303 = vst [vmem:[#allocation2 + $0x54] sm:$0x1] %v3302
        %v3304 = vld [vmem:[#allocation2 + $0x60] sm:$0x1]
        %v3305 = vsel %vm3279, 0, %v3304
        %3306 = vst [vmem:[#allocation2 + $0x60] sm:$0x1] %v3305
        %v3307 = vld [vmem:[#allocation2 + $0x6c] sm:$0x1]
        %v3308 = vsel %vm3279, 0, %v3307
        %3309 = vst [vmem:[#allocation2 + $0x6c] sm:$0x1] %v3308
        %vm3310 = vsmask.f32 7938
        %vm3311 = vmand %vm3277, %vm3310
        %v3312 = vld [vmem:[#allocation2 + $0x8] sm:$0x1]
        %v3313 = vsel %vm3311, 0, %v3312
        %3314 = vst [vmem:[#allocation2 + $0x8] sm:$0x1] %v3313
        %v3315 = vld [vmem:[#allocation2 + $0x14] sm:$0x1]
        %v3316 = vsel %vm3311, 0, %v3315
        %3317 = vst [vmem:[#allocation2 + $0x14] sm:$0x1] %v3316
        %v3318 = vld [vmem:[#allocation2 + $0x20] sm:$0x1]
        %v3319 = vsel %vm3311, 0, %v3318
        %3320 = vst [vmem:[#allocation2 + $0x20] sm:$0x1] %v3319
        %v3321 = vld [vmem:[#allocation2 + $0x2c] sm:$0x1]
        %v3322 = vsel %vm3311, 0, %v3321
        %3323 = vst [vmem:[#allocation2 + $0x2c] sm:$0x1] %v3322
        %v3324 = vld [vmem:[#allocation2 + $0x38] sm:$0x1]
        %v3325 = vsel %vm3311, 0, %v3324
        %3326 = vst [vmem:[#allocation2 + $0x38] sm:$0x1] %v3325
        %v3327 = vld [vmem:[#allocation2 + $0x44] sm:$0x1]
        %v3328 = vsel %vm3311, 0, %v3327
        %3329 = vst [vmem:[#allocation2 + $0x44] sm:$0x1] %v3328
        %v3330 = vld [vmem:[#allocation2 + $0x50] sm:$0x1]
        %v3331 = vsel %vm3311, 0, %v3330
        %3332 = vst [vmem:[#allocation2 + $0x50] sm:$0x1] %v3331
        %v3333 = vld [vmem:[#allocation2 + $0x5c] sm:$0x1]
        %v3334 = vsel %vm3311, 0, %v3333
        %3335 = vst [vmem:[#allocation2 + $0x5c] sm:$0x1] %v3334
        %v3336 = vld [vmem:[#allocation2 + $0x68] sm:$0x1]
        %v3337 = vsel %vm3311, 0, %v3336
        %3338 = vst [vmem:[#allocation2 + $0x68] sm:$0x1] %v3337
        %v3339 = vld [vmem:[#allocation2 + $0x74] sm:$0x1]
        %v3340 = vsel %vm3311, 0, %v3339
        %3341 = vst [vmem:[#allocation2 + $0x74] sm:$0x1] %v3340
        %v3342 = vpack.c.bf16 %v3258, %v3257
        %v3343 = vpack.c.bf16 %v3260, %v3259
        %v3344 = vpack.c.bf16 %v3262, %v3261
        %v3345 = vpack.c.bf16 %v3264, %v3263
        %v3346 = vpack.c.bf16 %v3266, %v3265
        %v3347 = vpack.c.bf16 %v3268, %v3267
        %v3348 = vpack.c.bf16 %v3270, %v3269
        %v3349 = vpack.c.bf16 %v3272, %v3271
        %v3350 = vpack.c.bf16 %v3274, %v3273
        %v3351 = vpack.c.bf16 %v3276, %v3275
        %v3362 = vunpack.c.l.b16 %v3342
        %v3363 = vunpack.c.h.b16 %v3342
        %v3364 = vunpack.c.l.b16 %v3343
        %v3365 = vunpack.c.h.b16 %v3343
        %v3366 = vunpack.c.l.b16 %v3344
        %v3367 = vunpack.c.h.b16 %v3344
        %v3368 = vunpack.c.l.b16 %v3345
        %v3369 = vunpack.c.h.b16 %v3345
        %v3370 = vunpack.c.l.b16 %v3346
        %v3371 = vunpack.c.h.b16 %v3346
        %v3372 = vunpack.c.l.b16 %v3347
        %v3373 = vunpack.c.h.b16 %v3347
        %v3374 = vunpack.c.l.b16 %v3348
        %v3375 = vunpack.c.h.b16 %v3348
        %v3376 = vunpack.c.l.b16 %v3349
        %v3377 = vunpack.c.h.b16 %v3349
        %v3378 = vunpack.c.l.b16 %v3350
        %v3379 = vunpack.c.h.b16 %v3350
        %v3380 = vunpack.c.l.b16 %v3351
        %v3381 = vunpack.c.h.b16 %v3351
        %v3382 = vpack.c.b16 %v3362, %v3362
        %v3383 = vpack.c.b16 %v3363, %v3363
        %v3384 = vpack.c.b16 %v3364, %v3364
        %v3385 = vpack.c.b16 %v3365, %v3365
        %v3386 = vpack.c.b16 %v3366, %v3366
        %v3387 = vpack.c.b16 %v3367, %v3367
        %v3388 = vpack.c.b16 %v3368, %v3368
        %v3389 = vpack.c.b16 %v3369, %v3369
        %v3390 = vpack.c.b16 %v3370, %v3370
        %v3391 = vpack.c.b16 %v3371, %v3371
        %v3392 = vpack.c.b16 %v3372, %v3372
        %v3393 = vpack.c.b16 %v3373, %v3373
        %v3394 = vpack.c.b16 %v3374, %v3374
        %v3395 = vpack.c.b16 %v3375, %v3375
        %v3396 = vpack.c.b16 %v3376, %v3376
        %v3397 = vpack.c.b16 %v3377, %v3377
        %v3398 = vpack.c.b16 %v3378, %v3378
        %v3399 = vpack.c.b16 %v3379, %v3379
        %v3400 = vpack.c.b16 %v3380, %v3380
        %v3401 = vpack.c.b16 %v3381, %v3381
        %vm3402 = vsmask.f32 4368
        %vm3403 = vmor %vm3278, %vm3402
        %v3405 = vshrl.u32 %v3382, 16
        %v3407 = vrot.slane %v3405, 7
        %v3408 = vshll.u32 %v3382, 16
        %v3410 = vor.u32 %v3407, %v3408
        %v3411 = vrot.slane %v3407, 4
        %v3413 = vshrl.u32 %v3383, 16
        %v3415 = vrot.slane %v3413, 7
        %v3416 = vshll.u32 %v3383, 16
        %v3418 = vor.u32 %v3415, %v3416
        %v3419 = vsel %vm3403, %v3411, %v3418
        %v3420 = vrot.slane %v3415, 4
        %v3422 = vshrl.u32 %v3384, 16
        %v3424 = vrot.slane %v3422, 7
        %v3425 = vshll.u32 %v3384, 16
        %v3427 = vor.u32 %v3424, %v3425
        %v3428 = vrot.slane %v3424, 4
        %v3430 = vshrl.u32 %v3385, 16
        %v3432 = vrot.slane %v3430, 7
        %v3433 = vshll.u32 %v3385, 16
        %v3435 = vor.u32 %v3432, %v3433
        %v3436 = vsel %vm3403, %v3428, %v3435
        %v3437 = vrot.slane %v3432, 4
        %v3439 = vshrl.u32 %v3386, 16
        %v3441 = vrot.slane %v3439, 7
        %v3442 = vshll.u32 %v3386, 16
        %v3444 = vor.u32 %v3441, %v3442
        %v3445 = vrot.slane %v3441, 4
        %v3447 = vshrl.u32 %v3387, 16
        %v3449 = vrot.slane %v3447, 7
        %v3450 = vshll.u32 %v3387, 16
        %v3452 = vor.u32 %v3449, %v3450
        %v3453 = vsel %vm3403, %v3445, %v3452
        %v3454 = vrot.slane %v3449, 4
        %v3456 = vshrl.u32 %v3388, 16
        %v3458 = vrot.slane %v3456, 7
        %v3459 = vshll.u32 %v3388, 16
        %v3461 = vor.u32 %v3458, %v3459
        %v3462 = vrot.slane %v3458, 4
        %v3464 = vshrl.u32 %v3389, 16
        %v3466 = vrot.slane %v3464, 7
        %v3467 = vshll.u32 %v3389, 16
        %v3469 = vor.u32 %v3466, %v3467
        %v3470 = vsel %vm3403, %v3462, %v3469
        %v3471 = vrot.slane %v3466, 4
        %v3473 = vshrl.u32 %v3390, 16
        %v3475 = vrot.slane %v3473, 7
        %v3476 = vshll.u32 %v3390, 16
        %v3478 = vor.u32 %v3475, %v3476
        %v3479 = vrot.slane %v3475, 4
        %v3481 = vshrl.u32 %v3391, 16
        %v3483 = vrot.slane %v3481, 7
        %v3484 = vshll.u32 %v3391, 16
        %v3486 = vor.u32 %v3483, %v3484
        %v3487 = vsel %vm3403, %v3479, %v3486
        %v3488 = vrot.slane %v3483, 4
        %v3490 = vshrl.u32 %v3392, 16
        %v3492 = vrot.slane %v3490, 7
        %v3493 = vshll.u32 %v3392, 16
        %v3495 = vor.u32 %v3492, %v3493
        %v3496 = vrot.slane %v3492, 4
        %v3498 = vshrl.u32 %v3393, 16
        %v3500 = vrot.slane %v3498, 7
        %v3501 = vshll.u32 %v3393, 16
        %v3503 = vor.u32 %v3500, %v3501
        %v3504 = vsel %vm3403, %v3496, %v3503
        %v3505 = vrot.slane %v3500, 4
        %v3507 = vshrl.u32 %v3394, 16
        %v3509 = vrot.slane %v3507, 7
        %v3510 = vshll.u32 %v3394, 16
        %v3512 = vor.u32 %v3509, %v3510
        %v3513 = vrot.slane %v3509, 4
        %v3515 = vshrl.u32 %v3395, 16
        %v3517 = vrot.slane %v3515, 7
        %v3518 = vshll.u32 %v3395, 16
        %v3520 = vor.u32 %v3517, %v3518
        %v3521 = vsel %vm3403, %v3513, %v3520
        %v3522 = vrot.slane %v3517, 4
        %v3524 = vshrl.u32 %v3396, 16
        %v3526 = vrot.slane %v3524, 7
        %v3527 = vshll.u32 %v3396, 16
        %v3529 = vor.u32 %v3526, %v3527
        %v3530 = vrot.slane %v3526, 4
        %v3532 = vshrl.u32 %v3397, 16
        %v3534 = vrot.slane %v3532, 7
        %v3535 = vshll.u32 %v3397, 16
        %v3537 = vor.u32 %v3534, %v3535
        %v3538 = vsel %vm3403, %v3530, %v3537
        %v3539 = vrot.slane %v3534, 4
        %v3541 = vshrl.u32 %v3398, 16
        %v3543 = vrot.slane %v3541, 7
        %v3544 = vshll.u32 %v3398, 16
        %v3546 = vor.u32 %v3543, %v3544
        %v3547 = vrot.slane %v3543, 4
        %v3549 = vshrl.u32 %v3399, 16
        %v3551 = vrot.slane %v3549, 7
        %v3552 = vshll.u32 %v3399, 16
        %v3554 = vor.u32 %v3551, %v3552
        %v3555 = vsel %vm3403, %v3547, %v3554
        %v3556 = vrot.slane %v3551, 4
        %v3558 = vshrl.u32 %v3400, 16
        %v3560 = vrot.slane %v3558, 7
        %v3561 = vshll.u32 %v3400, 16
        %v3563 = vor.u32 %v3560, %v3561
        %v3564 = vrot.slane %v3560, 4
        %v3566 = vshrl.u32 %v3401, 16
        %v3568 = vrot.slane %v3566, 7
        %v3569 = vshll.u32 %v3401, 16
        %v3571 = vor.u32 %v3568, %v3569
        %v3572 = vsel %vm3403, %v3564, %v3571
        %v3573 = vrot.slane %v3568, 4
        %vm3604 = vcmask 257024
        %vm3605 = vmand %vm3604, %vm3310
        %v3606 = vld [vmem:[#allocation2] sm:$0xf]
        %v3607 = vsel %vm3605, %v3410, %v3606
        %3608 = vst [vmem:[#allocation2] sm:$0xf] %v3607
        %vm3609 = vcmask 257024
        %3610 = vst.msk [vmem:[#allocation2 + $0x4] sm:$0xf] %vm3609, %v3419
        %v3611 = vld [vmem:[#allocation2 + $0x8] sm:$0x1]
        %v3612 = vsel %vm3279, %v3420, %v3611
        %3613 = vst [vmem:[#allocation2 + $0x8] sm:$0x1] %v3612
        %v3614 = vld [vmem:[#allocation2 + $0xc] sm:$0xf]
        %v3615 = vsel %vm3605, %v3427, %v3614
        %3616 = vst [vmem:[#allocation2 + $0xc] sm:$0xf] %v3615
        %3617 = vst.msk [vmem:[#allocation2 + $0x10] sm:$0xf] %vm3609, %v3436
        %v3618 = vld [vmem:[#allocation2 + $0x14] sm:$0x1]
        %v3619 = vsel %vm3279, %v3437, %v3618
        %3620 = vst [vmem:[#allocation2 + $0x14] sm:$0x1] %v3619
        %v3621 = vld [vmem:[#allocation2 + $0x18] sm:$0xf]
        %v3622 = vsel %vm3605, %v3444, %v3621
        %3623 = vst [vmem:[#allocation2 + $0x18] sm:$0xf] %v3622
        %3624 = vst.msk [vmem:[#allocation2 + $0x1c] sm:$0xf] %vm3609, %v3453
        %v3625 = vld [vmem:[#allocation2 + $0x20] sm:$0x1]
        %v3626 = vsel %vm3279, %v3454, %v3625
        %3627 = vst [vmem:[#allocation2 + $0x20] sm:$0x1] %v3626
        %v3628 = vld [vmem:[#allocation2 + $0x24] sm:$0xf]
        %v3629 = vsel %vm3605, %v3461, %v3628
        %3630 = vst [vmem:[#allocation2 + $0x24] sm:$0xf] %v3629
        %3631 = vst.msk [vmem:[#allocation2 + $0x28] sm:$0xf] %vm3609, %v3470
        %v3632 = vld [vmem:[#allocation2 + $0x2c] sm:$0x1]
        %v3633 = vsel %vm3279, %v3471, %v3632
        %3634 = vst [vmem:[#allocation2 + $0x2c] sm:$0x1] %v3633
        %v3635 = vld [vmem:[#allocation2 + $0x30] sm:$0xf]
        %v3636 = vsel %vm3605, %v3478, %v3635
        %3637 = vst [vmem:[#allocation2 + $0x30] sm:$0xf] %v3636
        %3638 = vst.msk [vmem:[#allocation2 + $0x34] sm:$0xf] %vm3609, %v3487
        %v3639 = vld [vmem:[#allocation2 + $0x38] sm:$0x1]
        %v3640 = vsel %vm3279, %v3488, %v3639
        %3641 = vst [vmem:[#allocation2 + $0x38] sm:$0x1] %v3640
        %v3642 = vld [vmem:[#allocation2 + $0x3c] sm:$0xf]
        %v3643 = vsel %vm3605, %v3495, %v3642
        %3644 = vst [vmem:[#allocation2 + $0x3c] sm:$0xf] %v3643
        %3645 = vst.msk [vmem:[#allocation2 + $0x40] sm:$0xf] %vm3609, %v3504
        %v3646 = vld [vmem:[#allocation2 + $0x44] sm:$0x1]
        %v3647 = vsel %vm3279, %v3505, %v3646
        %3648 = vst [vmem:[#allocation2 + $0x44] sm:$0x1] %v3647
        %v3649 = vld [vmem:[#allocation2 + $0x48] sm:$0xf]
        %v3650 = vsel %vm3605, %v3512, %v3649
        %3651 = vst [vmem:[#allocation2 + $0x48] sm:$0xf] %v3650
        %3652 = vst.msk [vmem:[#allocation2 + $0x4c] sm:$0xf] %vm3609, %v3521
        %v3653 = vld [vmem:[#allocation2 + $0x50] sm:$0x1]
        %v3654 = vsel %vm3279, %v3522, %v3653
        %3655 = vst [vmem:[#allocation2 + $0x50] sm:$0x1] %v3654
        %v3656 = vld [vmem:[#allocation2 + $0x54] sm:$0xf]
        %v3657 = vsel %vm3605, %v3529, %v3656
        %3658 = vst [vmem:[#allocation2 + $0x54] sm:$0xf] %v3657
        %3659 = vst.msk [vmem:[#allocation2 + $0x58] sm:$0xf] %vm3609, %v3538
        %v3660 = vld [vmem:[#allocation2 + $0x5c] sm:$0x1]
        %v3661 = vsel %vm3279, %v3539, %v3660
        %3662 = vst [vmem:[#allocation2 + $0x5c] sm:$0x1] %v3661
        %v3663 = vld [vmem:[#allocation2 + $0x60] sm:$0xf]
        %v3664 = vsel %vm3605, %v3546, %v3663
        %3665 = vst [vmem:[#allocation2 + $0x60] sm:$0xf] %v3664
        %3666 = vst.msk [vmem:[#allocation2 + $0x64] sm:$0xf] %vm3609, %v3555
        %v3667 = vld [vmem:[#allocation2 + $0x68] sm:$0x1]
        %v3668 = vsel %vm3279, %v3556, %v3667
        %3669 = vst [vmem:[#allocation2 + $0x68] sm:$0x1] %v3668
        %v3670 = vld [vmem:[#allocation2 + $0x6c] sm:$0xf]
        %v3671 = vsel %vm3605, %v3563, %v3670
        %3672 = vst [vmem:[#allocation2 + $0x6c] sm:$0xf] %v3671
        %3673 = vst.msk [vmem:[#allocation2 + $0x70] sm:$0xf] %vm3609, %v3572
        %v3674 = vld [vmem:[#allocation2 + $0x74] sm:$0x1]
        %v3675 = vsel %vm3279, %v3573, %v3674
        %3676 = vst [vmem:[#allocation2 + $0x74] sm:$0x1] %v3675
        %p3677 = scmp.eq.s32.totalorder %s24, 0
        // Predicated region
        $region41: #{double_conv.1} parent=39 // pred_check
          %p3678 = pneg %p3677
        $region42: #{double_conv.1} parent=39 // pred_check_branch
          %3680 = sbr.rel (%p3678) target = $region44
        $region43: #{double_conv.1} parent=39 // pred_region
          %3681 = vst.msk [vmem:[#allocation2] sm:$0xf] %vm3609, 0
          %3682 = vst.msk [vmem:[#allocation2 + $0x4] sm:$0xf] %vm3609, 0
          %vm3683 = vcmask 253952
          %3684 = vst.msk [vmem:[#allocation2 + $0x8] sm:$0x1] %vm3683, 0
        $region44: #{double_conv.1} parent=39 // pred_fallthru
          _
        %p3685 = scmp.eq.s32.totalorder %s24, 1
        // Predicated region
        $region45: #{double_conv.1} parent=39 // pred_check
          %p3686 = pneg %p3685
        $region46: #{double_conv.1} parent=39 // pred_check_branch
          %3688 = sbr.rel (%p3686) target = $region48
        $region47: #{double_conv.1} parent=39 // pred_region
          %s3689 = scalar_lea.vmem [#allocation2], 108
          %3690 = vst.msk [vmem:[%s3689] sm:$0xf] %vm3609, 0
          %3691 = vst.msk [vmem:[%s3689 + $0x4] sm:$0xf] %vm3609, 0
          %vm3692 = vcmask 253952
          %3693 = vst.msk [vmem:[%s3689 + $0x8] sm:$0x1] %vm3692, 0
        $region48: #{double_conv.1} parent=39 // pred_fallthru
          _
        %v3694 = vld [vmem:[#allocation2] sm:$0xf]
        %v3695 = vld [vmem:[#allocation2 + $0x4] sm:$0xf]
        %v3696 = vld [vmem:[#allocation2 + $0xc] sm:$0xf]
        %v3697 = vld [vmem:[#allocation2 + $0x10] sm:$0xf]
        %v3698 = vld [vmem:[#allocation2 + $0x18] sm:$0xf]
        %v3699 = vld [vmem:[#allocation2 + $0x1c] sm:$0xf]
        %v3700 = vld [vmem:[#allocation2 + $0x24] sm:$0xf]
        %v3701 = vld [vmem:[#allocation2 + $0x28] sm:$0xf]
        %v3702 = vld [vmem:[#allocation2 + $0x30] sm:$0xf]
        %v3703 = vld [vmem:[#allocation2 + $0x34] sm:$0xf]
        %v3704 = vld [vmem:[#allocation2 + $0x3c] sm:$0xf]
        %v3705 = vld [vmem:[#allocation2 + $0x40] sm:$0xf]
        %v3706 = vld [vmem:[#allocation2 + $0x48] sm:$0xf]
        %v3707 = vld [vmem:[#allocation2 + $0x4c] sm:$0xf]
        %v3708 = vld [vmem:[#allocation2 + $0x54] sm:$0xf]
        %v3709 = vld [vmem:[#allocation2 + $0x58] sm:$0xf]
        %v3710 = vld [vmem:[%s3] sm:$0xf]
        %v3711 = vld [vmem:[%s3 + $0x4] sm:$0xf]
        %v3712 = vld [vmem:[%s3 + $0x8] sm:$0xf]
        %v3713 = vld [vmem:[%s3 + $0xc] sm:$0xf]
        %v3714 = vld [vmem:[#allocation2 + $0x8] sm:$0x1]
        %v3715 = vld [vmem:[#allocation2 + $0x14] sm:$0x1]
        %v3716 = vld [vmem:[#allocation2 + $0x20] sm:$0x1]
        %v3717 = vld [vmem:[#allocation2 + $0x2c] sm:$0x1]
        %v3718 = vld [vmem:[#allocation2 + $0x38] sm:$0x1]
        %v3719 = vld [vmem:[#allocation2 + $0x44] sm:$0x1]
        %v3720 = vld [vmem:[#allocation2 + $0x50] sm:$0x1]
        %v3721 = vld [vmem:[#allocation2 + $0x5c] sm:$0x1]
        %v3723 = vshrl.u32 %v3694, 16
        %v3725 = vrot.slane %v3723, 4
        %v3726 = vshll.u32 %v3694, 16
        %v3728 = vrot.slane %v3726, 5
        %v3729 = vor.u32 %v3725, %v3728
        %v3730 = vrot.slane %v3729, 4
        %v3732 = vshll.u32 %v3695, 16
        %v3734 = vrot.slane %v3732, 5
        %v3735 = vsel %vm276, %v3730, %v3734
        %v3736 = vshrl.u32 %v3695, 16
        %v3738 = vrot.slane %v3736, 4
        %v3739 = vor.u32 %v3738, %v3734
        %v3740 = vrot.slane %v3739, 4
        %v3742 = vshll.u32 %v3714, 16
        %v3744 = vrot.slane %v3742, 5
        %v3745 = vsel %vm276, %v3740, %v3744
        %v3747 = vshrl.u32 %v3696, 16
        %v3749 = vrot.slane %v3747, 4
        %v3750 = vshll.u32 %v3696, 16
        %v3752 = vrot.slane %v3750, 5
        %v3753 = vor.u32 %v3749, %v3752
        %v3754 = vrot.slane %v3753, 4
        %v3756 = vshll.u32 %v3697, 16
        %v3758 = vrot.slane %v3756, 5
        %v3759 = vsel %vm276, %v3754, %v3758
        %v3760 = vshrl.u32 %v3697, 16
        %v3762 = vrot.slane %v3760, 4
        %v3763 = vor.u32 %v3762, %v3758
        %v3764 = vrot.slane %v3763, 4
        %v3766 = vshll.u32 %v3715, 16
        %v3768 = vrot.slane %v3766, 5
        %v3769 = vsel %vm276, %v3764, %v3768
        %v3771 = vshrl.u32 %v3698, 16
        %v3773 = vrot.slane %v3771, 4
        %v3774 = vshll.u32 %v3698, 16
        %v3776 = vrot.slane %v3774, 5
        %v3777 = vor.u32 %v3773, %v3776
        %v3778 = vrot.slane %v3777, 4
        %v3780 = vshll.u32 %v3699, 16
        %v3782 = vrot.slane %v3780, 5
        %v3783 = vsel %vm276, %v3778, %v3782
        %v3784 = vshrl.u32 %v3699, 16
        %v3786 = vrot.slane %v3784, 4
        %v3787 = vor.u32 %v3786, %v3782
        %v3788 = vrot.slane %v3787, 4
        %v3790 = vshll.u32 %v3716, 16
        %v3792 = vrot.slane %v3790, 5
        %v3793 = vsel %vm276, %v3788, %v3792
        %v3795 = vshrl.u32 %v3700, 16
        %v3797 = vrot.slane %v3795, 4
        %v3798 = vshll.u32 %v3700, 16
        %v3800 = vrot.slane %v3798, 5
        %v3801 = vor.u32 %v3797, %v3800
        %v3802 = vrot.slane %v3801, 4
        %v3804 = vshll.u32 %v3701, 16
        %v3806 = vrot.slane %v3804, 5
        %v3807 = vsel %vm276, %v3802, %v3806
        %v3808 = vshrl.u32 %v3701, 16
        %v3810 = vrot.slane %v3808, 4
        %v3811 = vor.u32 %v3810, %v3806
        %v3812 = vrot.slane %v3811, 4
        %v3814 = vshll.u32 %v3717, 16
        %v3816 = vrot.slane %v3814, 5
        %v3817 = vsel %vm276, %v3812, %v3816
        %v3819 = vshrl.u32 %v3702, 16
        %v3821 = vrot.slane %v3819, 4
        %v3822 = vshll.u32 %v3702, 16
        %v3824 = vrot.slane %v3822, 5
        %v3825 = vor.u32 %v3821, %v3824
        %v3826 = vrot.slane %v3825, 4
        %v3828 = vshll.u32 %v3703, 16
        %v3830 = vrot.slane %v3828, 5
        %v3831 = vsel %vm276, %v3826, %v3830
        %v3832 = vshrl.u32 %v3703, 16
        %v3834 = vrot.slane %v3832, 4
        %v3835 = vor.u32 %v3834, %v3830
        %v3836 = vrot.slane %v3835, 4
        %v3838 = vshll.u32 %v3718, 16
        %v3840 = vrot.slane %v3838, 5
        %v3841 = vsel %vm276, %v3836, %v3840
        %v3843 = vshrl.u32 %v3704, 16
        %v3845 = vrot.slane %v3843, 4
        %v3846 = vshll.u32 %v3704, 16
        %v3848 = vrot.slane %v3846, 5
        %v3849 = vor.u32 %v3845, %v3848
        %v3850 = vrot.slane %v3849, 4
        %v3852 = vshll.u32 %v3705, 16
        %v3854 = vrot.slane %v3852, 5
        %v3855 = vsel %vm276, %v3850, %v3854
        %v3856 = vshrl.u32 %v3705, 16
        %v3858 = vrot.slane %v3856, 4
        %v3859 = vor.u32 %v3858, %v3854
        %v3860 = vrot.slane %v3859, 4
        %v3862 = vshll.u32 %v3719, 16
        %v3864 = vrot.slane %v3862, 5
        %v3865 = vsel %vm276, %v3860, %v3864
        %v3867 = vshrl.u32 %v3706, 16
        %v3869 = vrot.slane %v3867, 4
        %v3870 = vshll.u32 %v3706, 16
        %v3872 = vrot.slane %v3870, 5
        %v3873 = vor.u32 %v3869, %v3872
        %v3874 = vrot.slane %v3873, 4
        %v3876 = vshll.u32 %v3707, 16
        %v3878 = vrot.slane %v3876, 5
        %v3879 = vsel %vm276, %v3874, %v3878
        %v3880 = vshrl.u32 %v3707, 16
        %v3882 = vrot.slane %v3880, 4
        %v3883 = vor.u32 %v3882, %v3878
        %v3884 = vrot.slane %v3883, 4
        %v3886 = vshll.u32 %v3720, 16
        %v3888 = vrot.slane %v3886, 5
        %v3889 = vsel %vm276, %v3884, %v3888
        %v3891 = vshrl.u32 %v3708, 16
        %v3893 = vrot.slane %v3891, 4
        %v3894 = vshll.u32 %v3708, 16
        %v3896 = vrot.slane %v3894, 5
        %v3897 = vor.u32 %v3893, %v3896
        %v3898 = vrot.slane %v3897, 4
        %v3900 = vshll.u32 %v3709, 16
        %v3902 = vrot.slane %v3900, 5
        %v3903 = vsel %vm276, %v3898, %v3902
        %v3904 = vshrl.u32 %v3709, 16
        %v3906 = vrot.slane %v3904, 4
        %v3907 = vor.u32 %v3906, %v3902
        %v3908 = vrot.slane %v3907, 4
        %v3910 = vshll.u32 %v3721, 16
        %v3912 = vrot.slane %v3910, 5
        %v3913 = vsel %vm276, %v3908, %v3912
        %s3914 = scalar_lea.vmem %s3, 16
        %v3915 = vld [vmem:[%s3914] sm:$0xf]
        %v3916 = vld [vmem:[%s3914 + $0x4] sm:$0xf]
        %v3917 = vld [vmem:[%s3914 + $0x8] sm:$0xf]
        %v3918 = vld [vmem:[%s3914 + $0xc] sm:$0xf]
        %v3919 = vunpack.c.l.b16 %v3735
        %v3920 = vunpack.c.l.b16 %v3745
        %v3921 = vunpack.c.l.b16 %v3759
        %v3922 = vunpack.c.l.b16 %v3769
        %v3923 = vunpack.c.l.b16 %v3783
        %v3924 = vunpack.c.l.b16 %v3793
        %v3925 = vunpack.c.l.b16 %v3807
        %v3926 = vunpack.c.l.b16 %v3817
        %v3927 = vunpack.c.l.b16 %v3831
        %v3928 = vunpack.c.l.b16 %v3841
        %v3929 = vunpack.c.l.b16 %v3855
        %v3930 = vunpack.c.l.b16 %v3865
        %v3931 = vunpack.c.l.b16 %v3879
        %v3932 = vunpack.c.l.b16 %v3889
        %v3933 = vunpack.c.l.b16 %v3903
        %v3934 = vunpack.c.l.b16 %v3913
        %v3935 = vpack.c.b16 %v3920, %v3919
        %v3936 = vpack.c.b16 %v3922, %v3921
        %v3937 = vpack.c.b16 %v3924, %v3923
        %v3938 = vpack.c.b16 %v3926, %v3925
        %v3939 = vpack.c.b16 %v3928, %v3927
        %v3940 = vpack.c.b16 %v3930, %v3929
        %v3941 = vpack.c.b16 %v3932, %v3931
        %v3942 = vpack.c.b16 %v3934, %v3933
        %v3947 = vunpack.c.l.b16 %v3915
        %v3948 = vunpack.c.l.b16 %v3916
        %v3949 = vunpack.c.l.b16 %v3917
        %v3950 = vunpack.c.l.b16 %v3918
        %v3951 = vpack.c.b16 %v3948, %v3947
        %v3952 = vpack.c.b16 %v3950, %v3949
        %vm3955 = vcmask 261120
        %v3957 = vsel %vm3955, %v3935, 0
        %v3960 = vsel %vm3955, %v3936, 0
        %v3963 = vsel %vm3955, %v3937, 0
        %v3966 = vsel %vm3955, %v3938, 0
        %v3969 = vsel %vm3955, %v3939, 0
        %v3972 = vsel %vm3955, %v3940, 0
        %v3975 = vsel %vm3955, %v3941, 0
        %v3978 = vsel %vm3955, %v3942, 0
        %3980 = vmatprep.subr.bf16.mxu0 0
        %3981 = vmatpush1.bf16.msra.mxu0 %v3951
        %3982 = vmatprep.subr.bf16.mxu0 0
        %3983 = vmatpush1.bf16.msra.mxu0 %v3952
        %3984 = vmatprep.subr.bf16.mxu0 0
        %3985 = vmatpush1.bf16.msra.mxu0 0
        %3986 = vmatprep.subr.bf16.mxu0 0
        %3987 = vmatpush1.bf16.msra.mxu0 0
        %3988 = vmatprep.subr.bf16.mxu0 0
        %3989 = vmatpush1.bf16.msra.mxu0 0
        %3990 = vmatprep.subr.bf16.mxu0 0
        %3991 = vmatpush1.bf16.msra.mxu0 0
        %3992 = vmatprep.subr.bf16.mxu0 0
        %3993 = vmatpush1.bf16.msra.mxu0 0
        %3994 = vmatprep.subr.bf16.mxu0 0
        %3995 = vmatpush1.bf16.msra.mxu0 0
        %3996 = vmatprep.subr.bf16.mxu0 0
        %3997 = vmatpush1.bf16.msra.mxu0 0
        %3998 = vmatprep.subr.bf16.mxu0 0
        %3999 = vmatpush1.bf16.msra.mxu0 0
        %4000 = vmatprep.subr.bf16.mxu0 0
        %4001 = vmatpush1.bf16.msra.mxu0 0
        %4002 = vmatprep.subr.bf16.mxu0 0
        %4003 = vmatpush1.bf16.msra.mxu0 0
        %4004 = vmatprep.subr.bf16.mxu0 0
        %4005 = vmatpush1.bf16.msra.mxu0 0
        %4006 = vmatprep.subr.bf16.mxu0 0
        %4007 = vmatpush1.bf16.msra.mxu0 0
        %4008 = vmatprep.subr.bf16.mxu0 0
        %4009 = vmatpush1.bf16.msra.mxu0 0
        %4010 = vmatprep.subr.bf16.mxu0 0
        %4011 = vmatpush1.bf16.msra.mxu0 0
        %4012 = vmatprep.mubr.bf16.mxu0 0
        %4013 = vmatmul.mubr.bf16.gmra.mrb[0].mxu0 %v3957
        %v4014 = vpop.f32.mrb[0].mxu0
        %v4015 = vadd.f32 0.0, %v4014
        %v4016 = vpop.f32.mrb[0].mxu0
        %v4017 = vpop.f32.mrb[0].mxu0
        %v4018 = vadd.f32 0.0, %v4017
        %v4019 = vpop.f32.mrb[0].mxu0
        %4020 = vmatprep.mubr.bf16.mxu0 0
        %4021 = vmatmul.mubr.bf16.gmra.mrb[0].mxu0 %v3960
        %v4022 = vpop.f32.mrb[0].mxu0
        %v4023 = vadd.f32 0.0, %v4022
        %v4024 = vpop.f32.mrb[0].mxu0
        %v4025 = vpop.f32.mrb[0].mxu0
        %v4026 = vadd.f32 0.0, %v4025
        %v4027 = vpop.f32.mrb[0].mxu0
        %4028 = vmatprep.mubr.bf16.mxu0 0
        %4029 = vmatmul.mubr.bf16.gmra.mrb[0].mxu0 %v3963
        %v4030 = vpop.f32.mrb[0].mxu0
        %v4031 = vadd.f32 0.0, %v4030
        %v4032 = vpop.f32.mrb[0].mxu0
        %v4033 = vpop.f32.mrb[0].mxu0
        %v4034 = vadd.f32 0.0, %v4033
        %v4035 = vpop.f32.mrb[0].mxu0
        %4036 = vmatprep.mubr.bf16.mxu0 0
        %4037 = vmatmul.mubr.bf16.gmra.mrb[0].mxu0 %v3966
        %v4038 = vpop.f32.mrb[0].mxu0
        %v4039 = vadd.f32 0.0, %v4038
        %v4040 = vpop.f32.mrb[0].mxu0
        %v4041 = vpop.f32.mrb[0].mxu0
        %v4042 = vadd.f32 0.0, %v4041
        %v4043 = vpop.f32.mrb[0].mxu0
        %4044 = vmatprep.mubr.bf16.mxu0 0
        %4045 = vmatmul.mubr.bf16.gmra.mrb[0].mxu0 %v3969
        %v4046 = vpop.f32.mrb[0].mxu0
        %v4047 = vadd.f32 0.0, %v4046
        %v4048 = vpop.f32.mrb[0].mxu0
        %v4049 = vpop.f32.mrb[0].mxu0
        %v4050 = vadd.f32 0.0, %v4049
        %v4051 = vpop.f32.mrb[0].mxu0
        %4052 = vmatprep.mubr.bf16.mxu0 0
        %4053 = vmatmul.mubr.bf16.gmra.mrb[0].mxu0 %v3972
        %v4054 = vpop.f32.mrb[0].mxu0
        %v4055 = vadd.f32 0.0, %v4054
        %v4056 = vpop.f32.mrb[0].mxu0
        %v4057 = vpop.f32.mrb[0].mxu0
        %v4058 = vadd.f32 0.0, %v4057
        %v4059 = vpop.f32.mrb[0].mxu0
        %4060 = vmatprep.mubr.bf16.mxu0 0
        %4061 = vmatmul.mubr.bf16.gmra.mrb[0].mxu0 %v3975
        %v4062 = vpop.f32.mrb[0].mxu0
        %v4063 = vadd.f32 0.0, %v4062
        %v4064 = vpop.f32.mrb[0].mxu0
        %v4065 = vpop.f32.mrb[0].mxu0
        %v4066 = vadd.f32 0.0, %v4065
        %v4067 = vpop.f32.mrb[0].mxu0
        %4068 = vmatprep.mubr.bf16.mxu0 0
        %4069 = vmatmul.mubr.bf16.gmra.mrb[0].mxu0 %v3978
        %v4070 = vpop.f32.mrb[0].mxu0
        %v4071 = vadd.f32 0.0, %v4070
        %v4072 = vpop.f32.mrb[0].mxu0
        %v4073 = vpop.f32.mrb[0].mxu0
        %v4074 = vadd.f32 0.0, %v4073
        %v4075 = vpop.f32.mrb[0].mxu0
        %4076 = vdwg.mxu0
        %v4093 = vunpack.c.l.b16 %v3694
        %v4094 = vunpack.c.l.b16 %v3695
        %v4095 = vunpack.c.l.b16 %v3696
        %v4096 = vunpack.c.l.b16 %v3697
        %v4097 = vunpack.c.l.b16 %v3698
        %v4098 = vunpack.c.l.b16 %v3699
        %v4099 = vunpack.c.l.b16 %v3700
        %v4100 = vunpack.c.l.b16 %v3701
        %v4101 = vunpack.c.l.b16 %v3702
        %v4102 = vunpack.c.l.b16 %v3703
        %v4103 = vunpack.c.l.b16 %v3704
        %v4104 = vunpack.c.l.b16 %v3705
        %v4105 = vunpack.c.l.b16 %v3706
        %v4106 = vunpack.c.l.b16 %v3707
        %v4107 = vunpack.c.l.b16 %v3708
        %v4108 = vunpack.c.l.b16 %v3709
        %v4109 = vpack.c.b16 %v4094, %v4093
        %v4110 = vpack.c.b16 %v4096, %v4095
        %v4111 = vpack.c.b16 %v4098, %v4097
        %v4112 = vpack.c.b16 %v4100, %v4099
        %v4113 = vpack.c.b16 %v4102, %v4101
        %v4114 = vpack.c.b16 %v4104, %v4103
        %v4115 = vpack.c.b16 %v4106, %v4105
        %v4116 = vpack.c.b16 %v4108, %v4107
        %v4121 = vunpack.c.l.b16 %v3710
        %v4122 = vunpack.c.l.b16 %v3711
        %v4123 = vunpack.c.l.b16 %v3712
        %v4124 = vunpack.c.l.b16 %v3713
        %v4125 = vpack.c.b16 %v4122, %v4121
        %v4126 = vpack.c.b16 %v4124, %v4123
        %v4130 = vsel %vm3955, %v4109, 0
        %v4133 = vsel %vm3955, %v4110, 0
        %v4136 = vsel %vm3955, %v4111, 0
        %v4139 = vsel %vm3955, %v4112, 0
        %v4142 = vsel %vm3955, %v4113, 0
        %v4145 = vsel %vm3955, %v4114, 0
        %v4148 = vsel %vm3955, %v4115, 0
        %v4151 = vsel %vm3955, %v4116, 0
        %4153 = vmatprep.subr.bf16.mxu0 0
        %4154 = vmatpush1.bf16.msra.mxu0 %v4125
        %4155 = vmatprep.subr.bf16.mxu0 0
        %4156 = vmatpush1.bf16.msra.mxu0 %v4126
        %4157 = vmatprep.subr.bf16.mxu0 0
        %4158 = vmatpush1.bf16.msra.mxu0 0
        %4159 = vmatprep.subr.bf16.mxu0 0
        %4160 = vmatpush1.bf16.msra.mxu0 0
        %4161 = vmatprep.subr.bf16.mxu0 0
        %4162 = vmatpush1.bf16.msra.mxu0 0
        %4163 = vmatprep.subr.bf16.mxu0 0
        %4164 = vmatpush1.bf16.msra.mxu0 0
        %4165 = vmatprep.subr.bf16.mxu0 0
        %4166 = vmatpush1.bf16.msra.mxu0 0
        %4167 = vmatprep.subr.bf16.mxu0 0
        %4168 = vmatpush1.bf16.msra.mxu0 0
        %4169 = vmatprep.subr.bf16.mxu0 0
        %4170 = vmatpush1.bf16.msra.mxu0 0
        %4171 = vmatprep.subr.bf16.mxu0 0
        %4172 = vmatpush1.bf16.msra.mxu0 0
        %4173 = vmatprep.subr.bf16.mxu0 0
        %4174 = vmatpush1.bf16.msra.mxu0 0
        %4175 = vmatprep.subr.bf16.mxu0 0
        %4176 = vmatpush1.bf16.msra.mxu0 0
        %4177 = vmatprep.subr.bf16.mxu0 0
        %4178 = vmatpush1.bf16.msra.mxu0 0
        %4179 = vmatprep.subr.bf16.mxu0 0
        %4180 = vmatpush1.bf16.msra.mxu0 0
        %4181 = vmatprep.subr.bf16.mxu0 0
        %4182 = vmatpush1.bf16.msra.mxu0 0
        %4183 = vmatprep.subr.bf16.mxu0 0
        %4184 = vmatpush1.bf16.msra.mxu0 0
        %4185 = vmatprep.mubr.bf16.mxu0 0
        %4186 = vmatmul.mubr.bf16.gmra.mrb[0].mxu0 %v4130
        %v4187 = vpop.f32.mrb[0].mxu0
        %v4188 = vadd.f32 %v4015, %v4187
        %v4189 = vpop.f32.mrb[0].mxu0
        %v4190 = vpop.f32.mrb[0].mxu0
        %v4191 = vadd.f32 %v4018, %v4190
        %v4192 = vpop.f32.mrb[0].mxu0
        %4193 = vmatprep.mubr.bf16.mxu0 0
        %4194 = vmatmul.mubr.bf16.gmra.mrb[0].mxu0 %v4133
        %v4195 = vpop.f32.mrb[0].mxu0
        %v4196 = vadd.f32 %v4023, %v4195
        %v4197 = vpop.f32.mrb[0].mxu0
        %v4198 = vpop.f32.mrb[0].mxu0
        %v4199 = vadd.f32 %v4026, %v4198
        %v4200 = vpop.f32.mrb[0].mxu0
        %4201 = vmatprep.mubr.bf16.mxu0 0
        %4202 = vmatmul.mubr.bf16.gmra.mrb[0].mxu0 %v4136
        %v4203 = vpop.f32.mrb[0].mxu0
        %v4204 = vadd.f32 %v4031, %v4203
        %v4205 = vpop.f32.mrb[0].mxu0
        %v4206 = vpop.f32.mrb[0].mxu0
        %v4207 = vadd.f32 %v4034, %v4206
        %v4208 = vpop.f32.mrb[0].mxu0
        %4209 = vmatprep.mubr.bf16.mxu0 0
        %4210 = vmatmul.mubr.bf16.gmra.mrb[0].mxu0 %v4139
        %v4211 = vpop.f32.mrb[0].mxu0
        %v4212 = vadd.f32 %v4039, %v4211
        %v4213 = vpop.f32.mrb[0].mxu0
        %v4214 = vpop.f32.mrb[0].mxu0
        %v4215 = vadd.f32 %v4042, %v4214
        %v4216 = vpop.f32.mrb[0].mxu0
        %4217 = vmatprep.mubr.bf16.mxu0 0
        %4218 = vmatmul.mubr.bf16.gmra.mrb[0].mxu0 %v4142
        %v4219 = vpop.f32.mrb[0].mxu0
        %v4220 = vadd.f32 %v4047, %v4219
        %v4221 = vpop.f32.mrb[0].mxu0
        %v4222 = vpop.f32.mrb[0].mxu0
        %v4223 = vadd.f32 %v4050, %v4222
        %v4224 = vpop.f32.mrb[0].mxu0
        %4225 = vmatprep.mubr.bf16.mxu0 0
        %4226 = vmatmul.mubr.bf16.gmra.mrb[0].mxu0 %v4145
        %v4227 = vpop.f32.mrb[0].mxu0
        %v4228 = vadd.f32 %v4055, %v4227
        %v4229 = vpop.f32.mrb[0].mxu0
        %v4230 = vpop.f32.mrb[0].mxu0
        %v4231 = vadd.f32 %v4058, %v4230
        %v4232 = vpop.f32.mrb[0].mxu0
        %4233 = vmatprep.mubr.bf16.mxu0 0
        %4234 = vmatmul.mubr.bf16.gmra.mrb[0].mxu0 %v4148
        %v4235 = vpop.f32.mrb[0].mxu0
        %v4236 = vadd.f32 %v4063, %v4235
        %v4237 = vpop.f32.mrb[0].mxu0
        %v4238 = vpop.f32.mrb[0].mxu0
        %v4239 = vadd.f32 %v4066, %v4238
        %v4240 = vpop.f32.mrb[0].mxu0
        %4241 = vmatprep.mubr.bf16.mxu0 0
        %4242 = vmatmul.mubr.bf16.gmra.mrb[0].mxu0 %v4151
        %v4243 = vpop.f32.mrb[0].mxu0
        %v4244 = vadd.f32 %v4071, %v4243
        %v4245 = vpop.f32.mrb[0].mxu0
        %v4246 = vpop.f32.mrb[0].mxu0
        %v4247 = vadd.f32 %v4074, %v4246
        %v4248 = vpop.f32.mrb[0].mxu0
        %4249 = vdwg.mxu0
        %v4250 = vld [vmem:[#allocation2] sm:$0xe]
        %v4251 = vld [vmem:[#allocation2 + $0xc] sm:$0xe]
        %v4252 = vld [vmem:[#allocation2 + $0x18] sm:$0xe]
        %v4253 = vld [vmem:[#allocation2 + $0x24] sm:$0xe]
        %v4254 = vld [vmem:[#allocation2 + $0x30] sm:$0xe]
        %v4255 = vld [vmem:[#allocation2 + $0x3c] sm:$0xe]
        %v4256 = vld [vmem:[#allocation2 + $0x48] sm:$0xe]
        %v4257 = vld [vmem:[#allocation2 + $0x54] sm:$0xe]
        %v4274 = vrot.slane %v4250, 5
        %v4275 = vrot.slane %v4274, 4
        %v4276 = vrot.slane %v3695, 5
        %v4277 = vsel %vm925, %v4275, %v4276
        %v4278 = vrot.slane %v4276, 4
        %v4279 = vrot.slane %v3714, 5
        %v4280 = vsel %vm925, %v4278, %v4279
        %v4281 = vrot.slane %v4251, 5
        %v4282 = vrot.slane %v4281, 4
        %v4283 = vrot.slane %v3697, 5
        %v4284 = vsel %vm925, %v4282, %v4283
        %v4285 = vrot.slane %v4283, 4
        %v4286 = vrot.slane %v3715, 5
        %v4287 = vsel %vm925, %v4285, %v4286
        %v4288 = vrot.slane %v4252, 5
        %v4289 = vrot.slane %v4288, 4
        %v4290 = vrot.slane %v3699, 5
        %v4291 = vsel %vm925, %v4289, %v4290
        %v4292 = vrot.slane %v4290, 4
        %v4293 = vrot.slane %v3716, 5
        %v4294 = vsel %vm925, %v4292, %v4293
        %v4295 = vrot.slane %v4253, 5
        %v4296 = vrot.slane %v4295, 4
        %v4297 = vrot.slane %v3701, 5
        %v4298 = vsel %vm925, %v4296, %v4297
        %v4299 = vrot.slane %v4297, 4
        %v4300 = vrot.slane %v3717, 5
        %v4301 = vsel %vm925, %v4299, %v4300
        %v4302 = vrot.slane %v4254, 5
        %v4303 = vrot.slane %v4302, 4
        %v4304 = vrot.slane %v3703, 5
        %v4305 = vsel %vm925, %v4303, %v4304
        %v4306 = vrot.slane %v4304, 4
        %v4307 = vrot.slane %v3718, 5
        %v4308 = vsel %vm925, %v4306, %v4307
        %v4309 = vrot.slane %v4255, 5
        %v4310 = vrot.slane %v4309, 4
        %v4311 = vrot.slane %v3705, 5
        %v4312 = vsel %vm925, %v4310, %v4311
        %v4313 = vrot.slane %v4311, 4
        %v4314 = vrot.slane %v3719, 5
        %v4315 = vsel %vm925, %v4313, %v4314
        %v4316 = vrot.slane %v4256, 5
        %v4317 = vrot.slane %v4316, 4
        %v4318 = vrot.slane %v3707, 5
        %v4319 = vsel %vm925, %v4317, %v4318
        %v4320 = vrot.slane %v4318, 4
        %v4321 = vrot.slane %v3720, 5
        %v4322 = vsel %vm925, %v4320, %v4321
        %v4323 = vrot.slane %v4257, 5
        %v4324 = vrot.slane %v4323, 4
        %v4325 = vrot.slane %v3709, 5
        %v4326 = vsel %vm925, %v4324, %v4325
        %v4327 = vrot.slane %v4325, 4
        %v4328 = vrot.slane %v3721, 5
        %v4329 = vsel %vm925, %v4327, %v4328
        %s4330 = scalar_lea.vmem %s3, 32
        %v4331 = vld [vmem:[%s4330] sm:$0xf]
        %v4332 = vld [vmem:[%s4330 + $0x4] sm:$0xf]
        %v4333 = vld [vmem:[%s4330 + $0x8] sm:$0xf]
        %v4334 = vld [vmem:[%s4330 + $0xc] sm:$0xf]
        %v4335 = vunpack.c.l.b16 %v4277
        %v4336 = vunpack.c.l.b16 %v4280
        %v4337 = vunpack.c.l.b16 %v4284
        %v4338 = vunpack.c.l.b16 %v4287
        %v4339 = vunpack.c.l.b16 %v4291
        %v4340 = vunpack.c.l.b16 %v4294
        %v4341 = vunpack.c.l.b16 %v4298
        %v4342 = vunpack.c.l.b16 %v4301
        %v4343 = vunpack.c.l.b16 %v4305
        %v4344 = vunpack.c.l.b16 %v4308
        %v4345 = vunpack.c.l.b16 %v4312
        %v4346 = vunpack.c.l.b16 %v4315
        %v4347 = vunpack.c.l.b16 %v4319
        %v4348 = vunpack.c.l.b16 %v4322
        %v4349 = vunpack.c.l.b16 %v4326
        %v4350 = vunpack.c.l.b16 %v4329
        %v4351 = vpack.c.b16 %v4336, %v4335
        %v4352 = vpack.c.b16 %v4338, %v4337
        %v4353 = vpack.c.b16 %v4340, %v4339
        %v4354 = vpack.c.b16 %v4342, %v4341
        %v4355 = vpack.c.b16 %v4344, %v4343
        %v4356 = vpack.c.b16 %v4346, %v4345
        %v4357 = vpack.c.b16 %v4348, %v4347
        %v4358 = vpack.c.b16 %v4350, %v4349
        %v4363 = vunpack.c.l.b16 %v4331
        %v4364 = vunpack.c.l.b16 %v4332
        %v4365 = vunpack.c.l.b16 %v4333
        %v4366 = vunpack.c.l.b16 %v4334
        %v4367 = vpack.c.b16 %v4364, %v4363
        %v4368 = vpack.c.b16 %v4366, %v4365
        %v4372 = vsel %vm3955, %v4351, 0
        %v4375 = vsel %vm3955, %v4352, 0
        %v4378 = vsel %vm3955, %v4353, 0
        %v4381 = vsel %vm3955, %v4354, 0
        %v4384 = vsel %vm3955, %v4355, 0
        %v4387 = vsel %vm3955, %v4356, 0
        %v4390 = vsel %vm3955, %v4357, 0
        %v4393 = vsel %vm3955, %v4358, 0
        %4395 = vmatprep.subr.bf16.mxu0 0
        %4396 = vmatpush1.bf16.msra.mxu0 %v4367
        %4397 = vmatprep.subr.bf16.mxu0 0
        %4398 = vmatpush1.bf16.msra.mxu0 %v4368
        %4399 = vmatprep.subr.bf16.mxu0 0
        %4400 = vmatpush1.bf16.msra.mxu0 0
        %4401 = vmatprep.subr.bf16.mxu0 0
        %4402 = vmatpush1.bf16.msra.mxu0 0
        %4403 = vmatprep.subr.bf16.mxu0 0
        %4404 = vmatpush1.bf16.msra.mxu0 0
        %4405 = vmatprep.subr.bf16.mxu0 0
        %4406 = vmatpush1.bf16.msra.mxu0 0
        %4407 = vmatprep.subr.bf16.mxu0 0
        %4408 = vmatpush1.bf16.msra.mxu0 0
        %4409 = vmatprep.subr.bf16.mxu0 0
        %4410 = vmatpush1.bf16.msra.mxu0 0
        %4411 = vmatprep.subr.bf16.mxu0 0
        %4412 = vmatpush1.bf16.msra.mxu0 0
        %4413 = vmatprep.subr.bf16.mxu0 0
        %4414 = vmatpush1.bf16.msra.mxu0 0
        %4415 = vmatprep.subr.bf16.mxu0 0
        %4416 = vmatpush1.bf16.msra.mxu0 0
        %4417 = vmatprep.subr.bf16.mxu0 0
        %4418 = vmatpush1.bf16.msra.mxu0 0
        %4419 = vmatprep.subr.bf16.mxu0 0
        %4420 = vmatpush1.bf16.msra.mxu0 0
        %4421 = vmatprep.subr.bf16.mxu0 0
        %4422 = vmatpush1.bf16.msra.mxu0 0
        %4423 = vmatprep.subr.bf16.mxu0 0
        %4424 = vmatpush1.bf16.msra.mxu0 0
        %4425 = vmatprep.subr.bf16.mxu0 0
        %4426 = vmatpush1.bf16.msra.mxu0 0
        %4427 = vmatprep.mubr.bf16.mxu0 0
        %4428 = vmatmul.mubr.bf16.gmra.mrb[0].mxu0 %v4372
        %v4429 = vpop.f32.mrb[0].mxu0
        %v4430 = vadd.f32 0.0, %v4429
        %v4431 = vpop.f32.mrb[0].mxu0
        %v4432 = vpop.f32.mrb[0].mxu0
        %v4433 = vadd.f32 0.0, %v4432
        %v4434 = vpop.f32.mrb[0].mxu0
        %4435 = vmatprep.mubr.bf16.mxu0 0
        %4436 = vmatmul.mubr.bf16.gmra.mrb[0].mxu0 %v4375
        %v4437 = vpop.f32.mrb[0].mxu0
        %v4438 = vadd.f32 0.0, %v4437
        %v4439 = vpop.f32.mrb[0].mxu0
        %v4440 = vpop.f32.mrb[0].mxu0
        %v4441 = vadd.f32 0.0, %v4440
        %v4442 = vpop.f32.mrb[0].mxu0
        %4443 = vmatprep.mubr.bf16.mxu0 0
        %4444 = vmatmul.mubr.bf16.gmra.mrb[0].mxu0 %v4378
        %v4445 = vpop.f32.mrb[0].mxu0
        %v4446 = vadd.f32 0.0, %v4445
        %v4447 = vpop.f32.mrb[0].mxu0
        %v4448 = vpop.f32.mrb[0].mxu0
        %v4449 = vadd.f32 0.0, %v4448
        %v4450 = vpop.f32.mrb[0].mxu0
        %4451 = vmatprep.mubr.bf16.mxu0 0
        %4452 = vmatmul.mubr.bf16.gmra.mrb[0].mxu0 %v4381
        %v4453 = vpop.f32.mrb[0].mxu0
        %v4454 = vadd.f32 0.0, %v4453
        %v4455 = vpop.f32.mrb[0].mxu0
        %v4456 = vpop.f32.mrb[0].mxu0
        %v4457 = vadd.f32 0.0, %v4456
        %v4458 = vpop.f32.mrb[0].mxu0
        %4459 = vmatprep.mubr.bf16.mxu0 0
        %4460 = vmatmul.mubr.bf16.gmra.mrb[0].mxu0 %v4384
        %v4461 = vpop.f32.mrb[0].mxu0
        %v4462 = vadd.f32 0.0, %v4461
        %v4463 = vpop.f32.mrb[0].mxu0
        %v4464 = vpop.f32.mrb[0].mxu0
        %v4465 = vadd.f32 0.0, %v4464
        %v4466 = vpop.f32.mrb[0].mxu0
        %4467 = vmatprep.mubr.bf16.mxu0 0
        %4468 = vmatmul.mubr.bf16.gmra.mrb[0].mxu0 %v4387
        %v4469 = vpop.f32.mrb[0].mxu0
        %v4470 = vadd.f32 0.0, %v4469
        %v4471 = vpop.f32.mrb[0].mxu0
        %v4472 = vpop.f32.mrb[0].mxu0
        %v4473 = vadd.f32 0.0, %v4472
        %v4474 = vpop.f32.mrb[0].mxu0
        %4475 = vmatprep.mubr.bf16.mxu0 0
        %4476 = vmatmul.mubr.bf16.gmra.mrb[0].mxu0 %v4390
        %v4477 = vpop.f32.mrb[0].mxu0
        %v4478 = vadd.f32 0.0, %v4477
        %v4479 = vpop.f32.mrb[0].mxu0
        %v4480 = vpop.f32.mrb[0].mxu0
        %v4481 = vadd.f32 0.0, %v4480
        %v4482 = vpop.f32.mrb[0].mxu0
        %4483 = vmatprep.mubr.bf16.mxu0 0
        %4484 = vmatmul.mubr.bf16.gmra.mrb[0].mxu0 %v4393
        %v4485 = vpop.f32.mrb[0].mxu0
        %v4486 = vadd.f32 0.0, %v4485
        %v4487 = vpop.f32.mrb[0].mxu0
        %v4488 = vpop.f32.mrb[0].mxu0
        %v4489 = vadd.f32 0.0, %v4488
        %v4490 = vpop.f32.mrb[0].mxu0
        %4491 = vdwg.mxu0
        %v4492 = vadd.f32 %v4188, %v4430
        %v4493 = vadd.f32 %v4191, %v4433
        %v4494 = vadd.f32 %v4196, %v4438
        %v4495 = vadd.f32 %v4199, %v4441
        %v4496 = vadd.f32 %v4204, %v4446
        %v4497 = vadd.f32 %v4207, %v4449
        %v4498 = vadd.f32 %v4212, %v4454
        %v4499 = vadd.f32 %v4215, %v4457
        %v4500 = vadd.f32 %v4220, %v4462
        %v4501 = vadd.f32 %v4223, %v4465
        %v4502 = vadd.f32 %v4228, %v4470
        %v4503 = vadd.f32 %v4231, %v4473
        %v4504 = vadd.f32 %v4236, %v4478
        %v4505 = vadd.f32 %v4239, %v4481
        %v4506 = vadd.f32 %v4244, %v4486
        %v4507 = vadd.f32 %v4247, %v4489
        %s4508 = scalar_lea.vmem [#allocation2], 12
        %v4509 = vld [vmem:[%s4508] sm:$0xf]
        %v4510 = vld [vmem:[%s4508 + $0x4] sm:$0xf]
        %v4511 = vld [vmem:[%s4508 + $0xc] sm:$0xf]
        %v4512 = vld [vmem:[%s4508 + $0x10] sm:$0xf]
        %v4513 = vld [vmem:[%s4508 + $0x18] sm:$0xf]
        %v4514 = vld [vmem:[%s4508 + $0x1c] sm:$0xf]
        %v4515 = vld [vmem:[%s4508 + $0x24] sm:$0xf]
        %v4516 = vld [vmem:[%s4508 + $0x28] sm:$0xf]
        %v4517 = vld [vmem:[%s4508 + $0x30] sm:$0xf]
        %v4518 = vld [vmem:[%s4508 + $0x34] sm:$0xf]
        %v4519 = vld [vmem:[%s4508 + $0x3c] sm:$0xf]
        %v4520 = vld [vmem:[%s4508 + $0x40] sm:$0xf]
        %v4521 = vld [vmem:[%s4508 + $0x48] sm:$0xf]
        %v4522 = vld [vmem:[%s4508 + $0x4c] sm:$0xf]
        %v4523 = vld [vmem:[%s4508 + $0x54] sm:$0xf]
        %v4524 = vld [vmem:[%s4508 + $0x58] sm:$0xf]
        %s4525 = scalar_lea.vmem %s3, 48
        %v4526 = vld [vmem:[%s4525] sm:$0xf]
        %v4527 = vld [vmem:[%s4525 + $0x4] sm:$0xf]
        %v4528 = vld [vmem:[%s4525 + $0x8] sm:$0xf]
        %v4529 = vld [vmem:[%s4525 + $0xc] sm:$0xf]
        %v4546 = vunpack.c.l.b16 %v4509
        %v4547 = vunpack.c.l.b16 %v4510
        %v4548 = vunpack.c.l.b16 %v4511
        %v4549 = vunpack.c.l.b16 %v4512
        %v4550 = vunpack.c.l.b16 %v4513
        %v4551 = vunpack.c.l.b16 %v4514
        %v4552 = vunpack.c.l.b16 %v4515
        %v4553 = vunpack.c.l.b16 %v4516
        %v4554 = vunpack.c.l.b16 %v4517
        %v4555 = vunpack.c.l.b16 %v4518
        %v4556 = vunpack.c.l.b16 %v4519
        %v4557 = vunpack.c.l.b16 %v4520
        %v4558 = vunpack.c.l.b16 %v4521
        %v4559 = vunpack.c.l.b16 %v4522
        %v4560 = vunpack.c.l.b16 %v4523
        %v4561 = vunpack.c.l.b16 %v4524
        %v4562 = vpack.c.b16 %v4547, %v4546
        %v4563 = vpack.c.b16 %v4549, %v4548
        %v4564 = vpack.c.b16 %v4551, %v4550
        %v4565 = vpack.c.b16 %v4553, %v4552
        %v4566 = vpack.c.b16 %v4555, %v4554
        %v4567 = vpack.c.b16 %v4557, %v4556
        %v4568 = vpack.c.b16 %v4559, %v4558
        %v4569 = vpack.c.b16 %v4561, %v4560
        %v4574 = vunpack.c.l.b16 %v4526
        %v4575 = vunpack.c.l.b16 %v4527
        %v4576 = vunpack.c.l.b16 %v4528
        %v4577 = vunpack.c.l.b16 %v4529
        %v4578 = vpack.c.b16 %v4575, %v4574
        %v4579 = vpack.c.b16 %v4577, %v4576
        %v4583 = vsel %vm3955, %v4562, 0
        %v4586 = vsel %vm3955, %v4563, 0
        %v4589 = vsel %vm3955, %v4564, 0
        %v4592 = vsel %vm3955, %v4565, 0
        %v4595 = vsel %vm3955, %v4566, 0
        %v4598 = vsel %vm3955, %v4567, 0
        %v4601 = vsel %vm3955, %v4568, 0
        %v4604 = vsel %vm3955, %v4569, 0
        %4606 = vmatprep.subr.bf16.mxu0 0
        %4607 = vmatpush1.bf16.msra.mxu0 %v4578
        %4608 = vmatprep.subr.bf16.mxu0 0
        %4609 = vmatpush1.bf16.msra.mxu0 %v4579
        %4610 = vmatprep.subr.bf16.mxu0 0
        %4611 = vmatpush1.bf16.msra.mxu0 0
        %4612 = vmatprep.subr.bf16.mxu0 0
        %4613 = vmatpush1.bf16.msra.mxu0 0
        %4614 = vmatprep.subr.bf16.mxu0 0
        %4615 = vmatpush1.bf16.msra.mxu0 0
        %4616 = vmatprep.subr.bf16.mxu0 0
        %4617 = vmatpush1.bf16.msra.mxu0 0
        %4618 = vmatprep.subr.bf16.mxu0 0
        %4619 = vmatpush1.bf16.msra.mxu0 0
        %4620 = vmatprep.subr.bf16.mxu0 0
        %4621 = vmatpush1.bf16.msra.mxu0 0
        %4622 = vmatprep.subr.bf16.mxu0 0
        %4623 = vmatpush1.bf16.msra.mxu0 0
        %4624 = vmatprep.subr.bf16.mxu0 0
        %4625 = vmatpush1.bf16.msra.mxu0 0
        %4626 = vmatprep.subr.bf16.mxu0 0
        %4627 = vmatpush1.bf16.msra.mxu0 0
        %4628 = vmatprep.subr.bf16.mxu0 0
        %4629 = vmatpush1.bf16.msra.mxu0 0
        %4630 = vmatprep.subr.bf16.mxu0 0
        %4631 = vmatpush1.bf16.msra.mxu0 0
        %4632 = vmatprep.subr.bf16.mxu0 0
        %4633 = vmatpush1.bf16.msra.mxu0 0
        %4634 = vmatprep.subr.bf16.mxu0 0
        %4635 = vmatpush1.bf16.msra.mxu0 0
        %4636 = vmatprep.subr.bf16.mxu0 0
        %4637 = vmatpush1.bf16.msra.mxu0 0
        %4638 = vmatprep.mubr.bf16.mxu0 0
        %4639 = vmatmul.mubr.bf16.gmra.mrb[0].mxu0 %v4583
        %v4640 = vpop.f32.mrb[0].mxu0
        %v4641 = vadd.f32 0.0, %v4640
        %v4642 = vpop.f32.mrb[0].mxu0
        %v4643 = vpop.f32.mrb[0].mxu0
        %v4644 = vadd.f32 0.0, %v4643
        %v4645 = vpop.f32.mrb[0].mxu0
        %4646 = vmatprep.mubr.bf16.mxu0 0
        %4647 = vmatmul.mubr.bf16.gmra.mrb[0].mxu0 %v4586
        %v4648 = vpop.f32.mrb[0].mxu0
        %v4649 = vadd.f32 0.0, %v4648
        %v4650 = vpop.f32.mrb[0].mxu0
        %v4651 = vpop.f32.mrb[0].mxu0
        %v4652 = vadd.f32 0.0, %v4651
        %v4653 = vpop.f32.mrb[0].mxu0
        %4654 = vmatprep.mubr.bf16.mxu0 0
        %4655 = vmatmul.mubr.bf16.gmra.mrb[0].mxu0 %v4589
        %v4656 = vpop.f32.mrb[0].mxu0
        %v4657 = vadd.f32 0.0, %v4656
        %v4658 = vpop.f32.mrb[0].mxu0
        %v4659 = vpop.f32.mrb[0].mxu0
        %v4660 = vadd.f32 0.0, %v4659
        %v4661 = vpop.f32.mrb[0].mxu0
        %4662 = vmatprep.mubr.bf16.mxu0 0
        %4663 = vmatmul.mubr.bf16.gmra.mrb[0].mxu0 %v4592
        %v4664 = vpop.f32.mrb[0].mxu0
        %v4665 = vadd.f32 0.0, %v4664
        %v4666 = vpop.f32.mrb[0].mxu0
        %v4667 = vpop.f32.mrb[0].mxu0
        %v4668 = vadd.f32 0.0, %v4667
        %v4669 = vpop.f32.mrb[0].mxu0
        %4670 = vmatprep.mubr.bf16.mxu0 0
        %4671 = vmatmul.mubr.bf16.gmra.mrb[0].mxu0 %v4595
        %v4672 = vpop.f32.mrb[0].mxu0
        %v4673 = vadd.f32 0.0, %v4672
        %v4674 = vpop.f32.mrb[0].mxu0
        %v4675 = vpop.f32.mrb[0].mxu0
        %v4676 = vadd.f32 0.0, %v4675
        %v4677 = vpop.f32.mrb[0].mxu0
        %4678 = vmatprep.mubr.bf16.mxu0 0
        %4679 = vmatmul.mubr.bf16.gmra.mrb[0].mxu0 %v4598
        %v4680 = vpop.f32.mrb[0].mxu0
        %v4681 = vadd.f32 0.0, %v4680
        %v4682 = vpop.f32.mrb[0].mxu0
        %v4683 = vpop.f32.mrb[0].mxu0
        %v4684 = vadd.f32 0.0, %v4683
        %v4685 = vpop.f32.mrb[0].mxu0
        %4686 = vmatprep.mubr.bf16.mxu0 0
        %4687 = vmatmul.mubr.bf16.gmra.mrb[0].mxu0 %v4601
        %v4688 = vpop.f32.mrb[0].mxu0
        %v4689 = vadd.f32 0.0, %v4688
        %v4690 = vpop.f32.mrb[0].mxu0
        %v4691 = vpop.f32.mrb[0].mxu0
        %v4692 = vadd.f32 0.0, %v4691
        %v4693 = vpop.f32.mrb[0].mxu0
        %4694 = vmatprep.mubr.bf16.mxu0 0
        %4695 = vmatmul.mubr.bf16.gmra.mrb[0].mxu0 %v4604
        %v4696 = vpop.f32.mrb[0].mxu0
        %v4697 = vadd.f32 0.0, %v4696
        %v4698 = vpop.f32.mrb[0].mxu0
        %v4699 = vpop.f32.mrb[0].mxu0
        %v4700 = vadd.f32 0.0, %v4699
        %v4701 = vpop.f32.mrb[0].mxu0
        %4702 = vdwg.mxu0
        %v4703 = vadd.f32 %v4492, %v4641
        %v4704 = vadd.f32 %v4493, %v4644
        %v4705 = vadd.f32 %v4494, %v4649
        %v4706 = vadd.f32 %v4495, %v4652
        %v4707 = vadd.f32 %v4496, %v4657
        %v4708 = vadd.f32 %v4497, %v4660
        %v4709 = vadd.f32 %v4498, %v4665
        %v4710 = vadd.f32 %v4499, %v4668
        %v4711 = vadd.f32 %v4500, %v4673
        %v4712 = vadd.f32 %v4501, %v4676
        %v4713 = vadd.f32 %v4502, %v4681
        %v4714 = vadd.f32 %v4503, %v4684
        %v4715 = vadd.f32 %v4504, %v4689
        %v4716 = vadd.f32 %v4505, %v4692
        %v4717 = vadd.f32 %v4506, %v4697
        %v4718 = vadd.f32 %v4507, %v4700
        %v4719 = vld [vmem:[%s4508] sm:$0xf]
        %v4720 = vld [vmem:[%s4508 + $0x4] sm:$0xf]
        %v4721 = vld [vmem:[%s4508 + $0x8] sm:$0x1]
        %v4722 = vld [vmem:[%s4508 + $0xc] sm:$0xf]
        %v4723 = vld [vmem:[%s4508 + $0x10] sm:$0xf]
        %v4724 = vld [vmem:[%s4508 + $0x14] sm:$0x1]
        %v4725 = vld [vmem:[%s4508 + $0x18] sm:$0xf]
        %v4726 = vld [vmem:[%s4508 + $0x1c] sm:$0xf]
        %v4727 = vld [vmem:[%s4508 + $0x20] sm:$0x1]
        %v4728 = vld [vmem:[%s4508 + $0x24] sm:$0xf]
        %v4729 = vld [vmem:[%s4508 + $0x28] sm:$0xf]
        %v4730 = vld [vmem:[%s4508 + $0x2c] sm:$0x1]
        %v4731 = vld [vmem:[%s4508 + $0x30] sm:$0xf]
        %v4732 = vld [vmem:[%s4508 + $0x34] sm:$0xf]
        %v4733 = vld [vmem:[%s4508 + $0x38] sm:$0x1]
        %v4734 = vld [vmem:[%s4508 + $0x3c] sm:$0xf]
        %v4735 = vld [vmem:[%s4508 + $0x40] sm:$0xf]
        %v4736 = vld [vmem:[%s4508 + $0x44] sm:$0x1]
        %v4737 = vld [vmem:[%s4508 + $0x48] sm:$0xf]
        %v4738 = vld [vmem:[%s4508 + $0x4c] sm:$0xf]
        %v4739 = vld [vmem:[%s4508 + $0x50] sm:$0x1]
        %v4740 = vld [vmem:[%s4508 + $0x54] sm:$0xf]
        %v4741 = vld [vmem:[%s4508 + $0x58] sm:$0xf]
        %v4742 = vld [vmem:[%s4508 + $0x5c] sm:$0x1]
        %v4744 = vshrl.u32 %v4719, 16
        %v4746 = vrot.slane %v4744, 4
        %v4747 = vshll.u32 %v4719, 16
        %v4749 = vrot.slane %v4747, 5
        %v4750 = vor.u32 %v4746, %v4749
        %v4751 = vrot.slane %v4750, 4
        %v4753 = vshll.u32 %v4720, 16
        %v4755 = vrot.slane %v4753, 5
        %v4756 = vsel %vm276, %v4751, %v4755
        %v4757 = vshrl.u32 %v4720, 16
        %v4759 = vrot.slane %v4757, 4
        %v4760 = vor.u32 %v4759, %v4755
        %v4761 = vrot.slane %v4760, 4
        %v4763 = vshll.u32 %v4721, 16
        %v4765 = vrot.slane %v4763, 5
        %v4766 = vsel %vm276, %v4761, %v4765
        %v4768 = vshrl.u32 %v4722, 16
        %v4770 = vrot.slane %v4768, 4
        %v4771 = vshll.u32 %v4722, 16
        %v4773 = vrot.slane %v4771, 5
        %v4774 = vor.u32 %v4770, %v4773
        %v4775 = vrot.slane %v4774, 4
        %v4777 = vshll.u32 %v4723, 16
        %v4779 = vrot.slane %v4777, 5
        %v4780 = vsel %vm276, %v4775, %v4779
        %v4781 = vshrl.u32 %v4723, 16
        %v4783 = vrot.slane %v4781, 4
        %v4784 = vor.u32 %v4783, %v4779
        %v4785 = vrot.slane %v4784, 4
        %v4787 = vshll.u32 %v4724, 16
        %v4789 = vrot.slane %v4787, 5
        %v4790 = vsel %vm276, %v4785, %v4789
        %v4792 = vshrl.u32 %v4725, 16
        %v4794 = vrot.slane %v4792, 4
        %v4795 = vshll.u32 %v4725, 16
        %v4797 = vrot.slane %v4795, 5
        %v4798 = vor.u32 %v4794, %v4797
        %v4799 = vrot.slane %v4798, 4
        %v4801 = vshll.u32 %v4726, 16
        %v4803 = vrot.slane %v4801, 5
        %v4804 = vsel %vm276, %v4799, %v4803
        %v4805 = vshrl.u32 %v4726, 16
        %v4807 = vrot.slane %v4805, 4
        %v4808 = vor.u32 %v4807, %v4803
        %v4809 = vrot.slane %v4808, 4
        %v4811 = vshll.u32 %v4727, 16
        %v4813 = vrot.slane %v4811, 5
        %v4814 = vsel %vm276, %v4809, %v4813
        %v4816 = vshrl.u32 %v4728, 16
        %v4818 = vrot.slane %v4816, 4
        %v4819 = vshll.u32 %v4728, 16
        %v4821 = vrot.slane %v4819, 5
        %v4822 = vor.u32 %v4818, %v4821
        %v4823 = vrot.slane %v4822, 4
        %v4825 = vshll.u32 %v4729, 16
        %v4827 = vrot.slane %v4825, 5
        %v4828 = vsel %vm276, %v4823, %v4827
        %v4829 = vshrl.u32 %v4729, 16
        %v4831 = vrot.slane %v4829, 4
        %v4832 = vor.u32 %v4831, %v4827
        %v4833 = vrot.slane %v4832, 4
        %v4835 = vshll.u32 %v4730, 16
        %v4837 = vrot.slane %v4835, 5
        %v4838 = vsel %vm276, %v4833, %v4837
        %v4840 = vshrl.u32 %v4731, 16
        %v4842 = vrot.slane %v4840, 4
        %v4843 = vshll.u32 %v4731, 16
        %v4845 = vrot.slane %v4843, 5
        %v4846 = vor.u32 %v4842, %v4845
        %v4847 = vrot.slane %v4846, 4
        %v4849 = vshll.u32 %v4732, 16
        %v4851 = vrot.slane %v4849, 5
        %v4852 = vsel %vm276, %v4847, %v4851
        %v4853 = vshrl.u32 %v4732, 16
        %v4855 = vrot.slane %v4853, 4
        %v4856 = vor.u32 %v4855, %v4851
        %v4857 = vrot.slane %v4856, 4
        %v4859 = vshll.u32 %v4733, 16
        %v4861 = vrot.slane %v4859, 5
        %v4862 = vsel %vm276, %v4857, %v4861
        %v4864 = vshrl.u32 %v4734, 16
        %v4866 = vrot.slane %v4864, 4
        %v4867 = vshll.u32 %v4734, 16
        %v4869 = vrot.slane %v4867, 5
        %v4870 = vor.u32 %v4866, %v4869
        %v4871 = vrot.slane %v4870, 4
        %v4873 = vshll.u32 %v4735, 16
        %v4875 = vrot.slane %v4873, 5
        %v4876 = vsel %vm276, %v4871, %v4875
        %v4877 = vshrl.u32 %v4735, 16
        %v4879 = vrot.slane %v4877, 4
        %v4880 = vor.u32 %v4879, %v4875
        %v4881 = vrot.slane %v4880, 4
        %v4883 = vshll.u32 %v4736, 16
        %v4885 = vrot.slane %v4883, 5
        %v4886 = vsel %vm276, %v4881, %v4885
        %v4888 = vshrl.u32 %v4737, 16
        %v4890 = vrot.slane %v4888, 4
        %v4891 = vshll.u32 %v4737, 16
        %v4893 = vrot.slane %v4891, 5
        %v4894 = vor.u32 %v4890, %v4893
        %v4895 = vrot.slane %v4894, 4
        %v4897 = vshll.u32 %v4738, 16
        %v4899 = vrot.slane %v4897, 5
        %v4900 = vsel %vm276, %v4895, %v4899
        %v4901 = vshrl.u32 %v4738, 16
        %v4903 = vrot.slane %v4901, 4
        %v4904 = vor.u32 %v4903, %v4899
        %v4905 = vrot.slane %v4904, 4
        %v4907 = vshll.u32 %v4739, 16
        %v4909 = vrot.slane %v4907, 5
        %v4910 = vsel %vm276, %v4905, %v4909
        %v4912 = vshrl.u32 %v4740, 16
        %v4914 = vrot.slane %v4912, 4
        %v4915 = vshll.u32 %v4740, 16
        %v4917 = vrot.slane %v4915, 5
        %v4918 = vor.u32 %v4914, %v4917
        %v4919 = vrot.slane %v4918, 4
        %v4921 = vshll.u32 %v4741, 16
        %v4923 = vrot.slane %v4921, 5
        %v4924 = vsel %vm276, %v4919, %v4923
        %v4925 = vshrl.u32 %v4741, 16
        %v4927 = vrot.slane %v4925, 4
        %v4928 = vor.u32 %v4927, %v4923
        %v4929 = vrot.slane %v4928, 4
        %v4931 = vshll.u32 %v4742, 16
        %v4933 = vrot.slane %v4931, 5
        %v4934 = vsel %vm276, %v4929, %v4933
        %s4935 = scalar_lea.vmem %s3, 64
        %v4936 = vld [vmem:[%s4935] sm:$0xf]
        %v4937 = vld [vmem:[%s4935 + $0x4] sm:$0xf]
        %v4938 = vld [vmem:[%s4935 + $0x8] sm:$0xf]
        %v4939 = vld [vmem:[%s4935 + $0xc] sm:$0xf]
        %v4940 = vunpack.c.l.b16 %v4756
        %v4941 = vunpack.c.l.b16 %v4766
        %v4942 = vunpack.c.l.b16 %v4780
        %v4943 = vunpack.c.l.b16 %v4790
        %v4944 = vunpack.c.l.b16 %v4804
        %v4945 = vunpack.c.l.b16 %v4814
        %v4946 = vunpack.c.l.b16 %v4828
        %v4947 = vunpack.c.l.b16 %v4838
        %v4948 = vunpack.c.l.b16 %v4852
        %v4949 = vunpack.c.l.b16 %v4862
        %v4950 = vunpack.c.l.b16 %v4876
        %v4951 = vunpack.c.l.b16 %v4886
        %v4952 = vunpack.c.l.b16 %v4900
        %v4953 = vunpack.c.l.b16 %v4910
        %v4954 = vunpack.c.l.b16 %v4924
        %v4955 = vunpack.c.l.b16 %v4934
        %v4956 = vpack.c.b16 %v4941, %v4940
        %v4957 = vpack.c.b16 %v4943, %v4942
        %v4958 = vpack.c.b16 %v4945, %v4944
        %v4959 = vpack.c.b16 %v4947, %v4946
        %v4960 = vpack.c.b16 %v4949, %v4948
        %v4961 = vpack.c.b16 %v4951, %v4950
        %v4962 = vpack.c.b16 %v4953, %v4952
        %v4963 = vpack.c.b16 %v4955, %v4954
        %v4968 = vunpack.c.l.b16 %v4936
        %v4969 = vunpack.c.l.b16 %v4937
        %v4970 = vunpack.c.l.b16 %v4938
        %v4971 = vunpack.c.l.b16 %v4939
        %v4972 = vpack.c.b16 %v4969, %v4968
        %v4973 = vpack.c.b16 %v4971, %v4970
        %v4977 = vsel %vm3955, %v4956, 0
        %v4980 = vsel %vm3955, %v4957, 0
        %v4983 = vsel %vm3955, %v4958, 0
        %v4986 = vsel %vm3955, %v4959, 0
        %v4989 = vsel %vm3955, %v4960, 0
        %v4992 = vsel %vm3955, %v4961, 0
        %v4995 = vsel %vm3955, %v4962, 0
        %v4998 = vsel %vm3955, %v4963, 0
        %5000 = vmatprep.subr.bf16.mxu0 0
        %5001 = vmatpush1.bf16.msra.mxu0 %v4972
        %5002 = vmatprep.subr.bf16.mxu0 0
        %5003 = vmatpush1.bf16.msra.mxu0 %v4973
        %5004 = vmatprep.subr.bf16.mxu0 0
        %5005 = vmatpush1.bf16.msra.mxu0 0
        %5006 = vmatprep.subr.bf16.mxu0 0
        %5007 = vmatpush1.bf16.msra.mxu0 0
        %5008 = vmatprep.subr.bf16.mxu0 0
        %5009 = vmatpush1.bf16.msra.mxu0 0
        %5010 = vmatprep.subr.bf16.mxu0 0
        %5011 = vmatpush1.bf16.msra.mxu0 0
        %5012 = vmatprep.subr.bf16.mxu0 0
        %5013 = vmatpush1.bf16.msra.mxu0 0
        %5014 = vmatprep.subr.bf16.mxu0 0
        %5015 = vmatpush1.bf16.msra.mxu0 0
        %5016 = vmatprep.subr.bf16.mxu0 0
        %5017 = vmatpush1.bf16.msra.mxu0 0
        %5018 = vmatprep.subr.bf16.mxu0 0
        %5019 = vmatpush1.bf16.msra.mxu0 0
        %5020 = vmatprep.subr.bf16.mxu0 0
        %5021 = vmatpush1.bf16.msra.mxu0 0
        %5022 = vmatprep.subr.bf16.mxu0 0
        %5023 = vmatpush1.bf16.msra.mxu0 0
        %5024 = vmatprep.subr.bf16.mxu0 0
        %5025 = vmatpush1.bf16.msra.mxu0 0
        %5026 = vmatprep.subr.bf16.mxu0 0
        %5027 = vmatpush1.bf16.msra.mxu0 0
        %5028 = vmatprep.subr.bf16.mxu0 0
        %5029 = vmatpush1.bf16.msra.mxu0 0
        %5030 = vmatprep.subr.bf16.mxu0 0
        %5031 = vmatpush1.bf16.msra.mxu0 0
        %5032 = vmatprep.mubr.bf16.mxu0 0
        %5033 = vmatmul.mubr.bf16.gmra.mrb[0].mxu0 %v4977
        %v5034 = vpop.f32.mrb[0].mxu0
        %v5035 = vadd.f32 0.0, %v5034
        %v5036 = vpop.f32.mrb[0].mxu0
        %v5037 = vpop.f32.mrb[0].mxu0
        %v5038 = vadd.f32 0.0, %v5037
        %v5039 = vpop.f32.mrb[0].mxu0
        %5040 = vmatprep.mubr.bf16.mxu0 0
        %5041 = vmatmul.mubr.bf16.gmra.mrb[0].mxu0 %v4980
        %v5042 = vpop.f32.mrb[0].mxu0
        %v5043 = vadd.f32 0.0, %v5042
        %v5044 = vpop.f32.mrb[0].mxu0
        %v5045 = vpop.f32.mrb[0].mxu0
        %v5046 = vadd.f32 0.0, %v5045
        %v5047 = vpop.f32.mrb[0].mxu0
        %5048 = vmatprep.mubr.bf16.mxu0 0
        %5049 = vmatmul.mubr.bf16.gmra.mrb[0].mxu0 %v4983
        %v5050 = vpop.f32.mrb[0].mxu0
        %v5051 = vadd.f32 0.0, %v5050
        %v5052 = vpop.f32.mrb[0].mxu0
        %v5053 = vpop.f32.mrb[0].mxu0
        %v5054 = vadd.f32 0.0, %v5053
        %v5055 = vpop.f32.mrb[0].mxu0
        %5056 = vmatprep.mubr.bf16.mxu0 0
        %5057 = vmatmul.mubr.bf16.gmra.mrb[0].mxu0 %v4986
        %v5058 = vpop.f32.mrb[0].mxu0
        %v5059 = vadd.f32 0.0, %v5058
        %v5060 = vpop.f32.mrb[0].mxu0
        %v5061 = vpop.f32.mrb[0].mxu0
        %v5062 = vadd.f32 0.0, %v5061
        %v5063 = vpop.f32.mrb[0].mxu0
        %5064 = vmatprep.mubr.bf16.mxu0 0
        %5065 = vmatmul.mubr.bf16.gmra.mrb[0].mxu0 %v4989
        %v5066 = vpop.f32.mrb[0].mxu0
        %v5067 = vadd.f32 0.0, %v5066
        %v5068 = vpop.f32.mrb[0].mxu0
        %v5069 = vpop.f32.mrb[0].mxu0
        %v5070 = vadd.f32 0.0, %v5069
        %v5071 = vpop.f32.mrb[0].mxu0
        %5072 = vmatprep.mubr.bf16.mxu0 0
        %5073 = vmatmul.mubr.bf16.gmra.mrb[0].mxu0 %v4992
        %v5074 = vpop.f32.mrb[0].mxu0
        %v5075 = vadd.f32 0.0, %v5074
        %v5076 = vpop.f32.mrb[0].mxu0
        %v5077 = vpop.f32.mrb[0].mxu0
        %v5078 = vadd.f32 0.0, %v5077
        %v5079 = vpop.f32.mrb[0].mxu0
        %5080 = vmatprep.mubr.bf16.mxu0 0
        %5081 = vmatmul.mubr.bf16.gmra.mrb[0].mxu0 %v4995
        %v5082 = vpop.f32.mrb[0].mxu0
        %v5083 = vadd.f32 0.0, %v5082
        %v5084 = vpop.f32.mrb[0].mxu0
        %v5085 = vpop.f32.mrb[0].mxu0
        %v5086 = vadd.f32 0.0, %v5085
        %v5087 = vpop.f32.mrb[0].mxu0
        %5088 = vmatprep.mubr.bf16.mxu0 0
        %5089 = vmatmul.mubr.bf16.gmra.mrb[0].mxu0 %v4998
        %v5090 = vpop.f32.mrb[0].mxu0
        %v5091 = vadd.f32 0.0, %v5090
        %v5092 = vpop.f32.mrb[0].mxu0
        %v5093 = vpop.f32.mrb[0].mxu0
        %v5094 = vadd.f32 0.0, %v5093
        %v5095 = vpop.f32.mrb[0].mxu0
        %5096 = vdwg.mxu0
        %v5097 = vadd.f32 %v4703, %v5035
        %v5098 = vadd.f32 %v4704, %v5038
        %v5099 = vadd.f32 %v4705, %v5043
        %v5100 = vadd.f32 %v4706, %v5046
        %v5101 = vadd.f32 %v4707, %v5051
        %v5102 = vadd.f32 %v4708, %v5054
        %v5103 = vadd.f32 %v4709, %v5059
        %v5104 = vadd.f32 %v4710, %v5062
        %v5105 = vadd.f32 %v4711, %v5067
        %v5106 = vadd.f32 %v4712, %v5070
        %v5107 = vadd.f32 %v4713, %v5075
        %v5108 = vadd.f32 %v4714, %v5078
        %v5109 = vadd.f32 %v4715, %v5083
        %v5110 = vadd.f32 %v4716, %v5086
        %v5111 = vadd.f32 %v4717, %v5091
        %v5112 = vadd.f32 %v4718, %v5094
        %v5113 = vld [vmem:[%s4508] sm:$0xe]
        %v5114 = vld [vmem:[%s4508 + $0xc] sm:$0xe]
        %v5115 = vld [vmem:[%s4508 + $0x18] sm:$0xe]
        %v5116 = vld [vmem:[%s4508 + $0x24] sm:$0xe]
        %v5117 = vld [vmem:[%s4508 + $0x30] sm:$0xe]
        %v5118 = vld [vmem:[%s4508 + $0x3c] sm:$0xe]
        %v5119 = vld [vmem:[%s4508 + $0x48] sm:$0xe]
        %v5120 = vld [vmem:[%s4508 + $0x54] sm:$0xe]
        %v5145 = vrot.slane %v5113, 5
        %v5146 = vrot.slane %v5145, 4
        %v5147 = vrot.slane %v4720, 5
        %v5148 = vsel %vm925, %v5146, %v5147
        %v5149 = vrot.slane %v5147, 4
        %v5150 = vrot.slane %v4721, 5
        %v5151 = vsel %vm925, %v5149, %v5150
        %v5152 = vrot.slane %v5114, 5
        %v5153 = vrot.slane %v5152, 4
        %v5154 = vrot.slane %v4723, 5
        %v5155 = vsel %vm925, %v5153, %v5154
        %v5156 = vrot.slane %v5154, 4
        %v5157 = vrot.slane %v4724, 5
        %v5158 = vsel %vm925, %v5156, %v5157
        %v5159 = vrot.slane %v5115, 5
        %v5160 = vrot.slane %v5159, 4
        %v5161 = vrot.slane %v4726, 5
        %v5162 = vsel %vm925, %v5160, %v5161
        %v5163 = vrot.slane %v5161, 4
        %v5164 = vrot.slane %v4727, 5
        %v5165 = vsel %vm925, %v5163, %v5164
        %v5166 = vrot.slane %v5116, 5
        %v5167 = vrot.slane %v5166, 4
        %v5168 = vrot.slane %v4729, 5
        %v5169 = vsel %vm925, %v5167, %v5168
        %v5170 = vrot.slane %v5168, 4
        %v5171 = vrot.slane %v4730, 5
        %v5172 = vsel %vm925, %v5170, %v5171
        %v5173 = vrot.slane %v5117, 5
        %v5174 = vrot.slane %v5173, 4
        %v5175 = vrot.slane %v4732, 5
        %v5176 = vsel %vm925, %v5174, %v5175
        %v5177 = vrot.slane %v5175, 4
        %v5178 = vrot.slane %v4733, 5
        %v5179 = vsel %vm925, %v5177, %v5178
        %v5180 = vrot.slane %v5118, 5
        %v5181 = vrot.slane %v5180, 4
        %v5182 = vrot.slane %v4735, 5
        %v5183 = vsel %vm925, %v5181, %v5182
        %v5184 = vrot.slane %v5182, 4
        %v5185 = vrot.slane %v4736, 5
        %v5186 = vsel %vm925, %v5184, %v5185
        %v5187 = vrot.slane %v5119, 5
        %v5188 = vrot.slane %v5187, 4
        %v5189 = vrot.slane %v4738, 5
        %v5190 = vsel %vm925, %v5188, %v5189
        %v5191 = vrot.slane %v5189, 4
        %v5192 = vrot.slane %v4739, 5
        %v5193 = vsel %vm925, %v5191, %v5192
        %v5194 = vrot.slane %v5120, 5
        %v5195 = vrot.slane %v5194, 4
        %v5196 = vrot.slane %v4741, 5
        %v5197 = vsel %vm925, %v5195, %v5196
        %v5198 = vrot.slane %v5196, 4
        %v5199 = vrot.slane %v4742, 5
        %v5200 = vsel %vm925, %v5198, %v5199
        %s5201 = scalar_lea.vmem %s3, 80
        %v5202 = vld [vmem:[%s5201] sm:$0xf]
        %v5203 = vld [vmem:[%s5201 + $0x4] sm:$0xf]
        %v5204 = vld [vmem:[%s5201 + $0x8] sm:$0xf]
        %v5205 = vld [vmem:[%s5201 + $0xc] sm:$0xf]
        %v5206 = vunpack.c.l.b16 %v5148
        %v5207 = vunpack.c.l.b16 %v5151
        %v5208 = vunpack.c.l.b16 %v5155
        %v5209 = vunpack.c.l.b16 %v5158
        %v5210 = vunpack.c.l.b16 %v5162
        %v5211 = vunpack.c.l.b16 %v5165
        %v5212 = vunpack.c.l.b16 %v5169
        %v5213 = vunpack.c.l.b16 %v5172
        %v5214 = vunpack.c.l.b16 %v5176
        %v5215 = vunpack.c.l.b16 %v5179
        %v5216 = vunpack.c.l.b16 %v5183
        %v5217 = vunpack.c.l.b16 %v5186
        %v5218 = vunpack.c.l.b16 %v5190
        %v5219 = vunpack.c.l.b16 %v5193
        %v5220 = vunpack.c.l.b16 %v5197
        %v5221 = vunpack.c.l.b16 %v5200
        %v5222 = vpack.c.b16 %v5207, %v5206
        %v5223 = vpack.c.b16 %v5209, %v5208
        %v5224 = vpack.c.b16 %v5211, %v5210
        %v5225 = vpack.c.b16 %v5213, %v5212
        %v5226 = vpack.c.b16 %v5215, %v5214
        %v5227 = vpack.c.b16 %v5217, %v5216
        %v5228 = vpack.c.b16 %v5219, %v5218
        %v5229 = vpack.c.b16 %v5221, %v5220
        %v5234 = vunpack.c.l.b16 %v5202
        %v5235 = vunpack.c.l.b16 %v5203
        %v5236 = vunpack.c.l.b16 %v5204
        %v5237 = vunpack.c.l.b16 %v5205
        %v5238 = vpack.c.b16 %v5235, %v5234
        %v5239 = vpack.c.b16 %v5237, %v5236
        %v5243 = vsel %vm3955, %v5222, 0
        %v5246 = vsel %vm3955, %v5223, 0
        %v5249 = vsel %vm3955, %v5224, 0
        %v5252 = vsel %vm3955, %v5225, 0
        %v5255 = vsel %vm3955, %v5226, 0
        %v5258 = vsel %vm3955, %v5227, 0
        %v5261 = vsel %vm3955, %v5228, 0
        %v5264 = vsel %vm3955, %v5229, 0
        %5266 = vmatprep.subr.bf16.mxu0 0
        %5267 = vmatpush1.bf16.msra.mxu0 %v5238
        %5268 = vmatprep.subr.bf16.mxu0 0
        %5269 = vmatpush1.bf16.msra.mxu0 %v5239
        %5270 = vmatprep.subr.bf16.mxu0 0
        %5271 = vmatpush1.bf16.msra.mxu0 0
        %5272 = vmatprep.subr.bf16.mxu0 0
        %5273 = vmatpush1.bf16.msra.mxu0 0
        %5274 = vmatprep.subr.bf16.mxu0 0
        %5275 = vmatpush1.bf16.msra.mxu0 0
        %5276 = vmatprep.subr.bf16.mxu0 0
        %5277 = vmatpush1.bf16.msra.mxu0 0
        %5278 = vmatprep.subr.bf16.mxu0 0
        %5279 = vmatpush1.bf16.msra.mxu0 0
        %5280 = vmatprep.subr.bf16.mxu0 0
        %5281 = vmatpush1.bf16.msra.mxu0 0
        %5282 = vmatprep.subr.bf16.mxu0 0
        %5283 = vmatpush1.bf16.msra.mxu0 0
        %5284 = vmatprep.subr.bf16.mxu0 0
        %5285 = vmatpush1.bf16.msra.mxu0 0
        %5286 = vmatprep.subr.bf16.mxu0 0
        %5287 = vmatpush1.bf16.msra.mxu0 0
        %5288 = vmatprep.subr.bf16.mxu0 0
        %5289 = vmatpush1.bf16.msra.mxu0 0
        %5290 = vmatprep.subr.bf16.mxu0 0
        %5291 = vmatpush1.bf16.msra.mxu0 0
        %5292 = vmatprep.subr.bf16.mxu0 0
        %5293 = vmatpush1.bf16.msra.mxu0 0
        %5294 = vmatprep.subr.bf16.mxu0 0
        %5295 = vmatpush1.bf16.msra.mxu0 0
        %5296 = vmatprep.subr.bf16.mxu0 0
        %5297 = vmatpush1.bf16.msra.mxu0 0
        %5298 = vmatprep.mubr.bf16.mxu0 0
        %5299 = vmatmul.mubr.bf16.gmra.mrb[0].mxu0 %v5243
        %v5300 = vpop.f32.mrb[0].mxu0
        %v5301 = vadd.f32 0.0, %v5300
        %v5302 = vpop.f32.mrb[0].mxu0
        %v5303 = vpop.f32.mrb[0].mxu0
        %v5304 = vadd.f32 0.0, %v5303
        %v5305 = vpop.f32.mrb[0].mxu0
        %5306 = vmatprep.mubr.bf16.mxu0 0
        %5307 = vmatmul.mubr.bf16.gmra.mrb[0].mxu0 %v5246
        %v5308 = vpop.f32.mrb[0].mxu0
        %v5309 = vadd.f32 0.0, %v5308
        %v5310 = vpop.f32.mrb[0].mxu0
        %v5311 = vpop.f32.mrb[0].mxu0
        %v5312 = vadd.f32 0.0, %v5311
        %v5313 = vpop.f32.mrb[0].mxu0
        %5314 = vmatprep.mubr.bf16.mxu0 0
        %5315 = vmatmul.mubr.bf16.gmra.mrb[0].mxu0 %v5249
        %v5316 = vpop.f32.mrb[0].mxu0
        %v5317 = vadd.f32 0.0, %v5316
        %v5318 = vpop.f32.mrb[0].mxu0
        %v5319 = vpop.f32.mrb[0].mxu0
        %v5320 = vadd.f32 0.0, %v5319
        %v5321 = vpop.f32.mrb[0].mxu0
        %5322 = vmatprep.mubr.bf16.mxu0 0
        %5323 = vmatmul.mubr.bf16.gmra.mrb[0].mxu0 %v5252
        %v5324 = vpop.f32.mrb[0].mxu0
        %v5325 = vadd.f32 0.0, %v5324
        %v5326 = vpop.f32.mrb[0].mxu0
        %v5327 = vpop.f32.mrb[0].mxu0
        %v5328 = vadd.f32 0.0, %v5327
        %v5329 = vpop.f32.mrb[0].mxu0
        %5330 = vmatprep.mubr.bf16.mxu0 0
        %5331 = vmatmul.mubr.bf16.gmra.mrb[0].mxu0 %v5255
        %v5332 = vpop.f32.mrb[0].mxu0
        %v5333 = vadd.f32 0.0, %v5332
        %v5334 = vpop.f32.mrb[0].mxu0
        %v5335 = vpop.f32.mrb[0].mxu0
        %v5336 = vadd.f32 0.0, %v5335
        %v5337 = vpop.f32.mrb[0].mxu0
        %5338 = vmatprep.mubr.bf16.mxu0 0
        %5339 = vmatmul.mubr.bf16.gmra.mrb[0].mxu0 %v5258
        %v5340 = vpop.f32.mrb[0].mxu0
        %v5341 = vadd.f32 0.0, %v5340
        %v5342 = vpop.f32.mrb[0].mxu0
        %v5343 = vpop.f32.mrb[0].mxu0
        %v5344 = vadd.f32 0.0, %v5343
        %v5345 = vpop.f32.mrb[0].mxu0
        %5346 = vmatprep.mubr.bf16.mxu0 0
        %5347 = vmatmul.mubr.bf16.gmra.mrb[0].mxu0 %v5261
        %v5348 = vpop.f32.mrb[0].mxu0
        %v5349 = vadd.f32 0.0, %v5348
        %v5350 = vpop.f32.mrb[0].mxu0
        %v5351 = vpop.f32.mrb[0].mxu0
        %v5352 = vadd.f32 0.0, %v5351
        %v5353 = vpop.f32.mrb[0].mxu0
        %5354 = vmatprep.mubr.bf16.mxu0 0
        %5355 = vmatmul.mubr.bf16.gmra.mrb[0].mxu0 %v5264
        %v5356 = vpop.f32.mrb[0].mxu0
        %v5357 = vadd.f32 0.0, %v5356
        %v5358 = vpop.f32.mrb[0].mxu0
        %v5359 = vpop.f32.mrb[0].mxu0
        %v5360 = vadd.f32 0.0, %v5359
        %v5361 = vpop.f32.mrb[0].mxu0
        %5362 = vdwg.mxu0
        %v5363 = vadd.f32 %v5097, %v5301
        %v5364 = vadd.f32 %v5098, %v5304
        %v5365 = vadd.f32 %v5099, %v5309
        %v5366 = vadd.f32 %v5100, %v5312
        %v5367 = vadd.f32 %v5101, %v5317
        %v5368 = vadd.f32 %v5102, %v5320
        %v5369 = vadd.f32 %v5103, %v5325
        %v5370 = vadd.f32 %v5104, %v5328
        %v5371 = vadd.f32 %v5105, %v5333
        %v5372 = vadd.f32 %v5106, %v5336
        %v5373 = vadd.f32 %v5107, %v5341
        %v5374 = vadd.f32 %v5108, %v5344
        %v5375 = vadd.f32 %v5109, %v5349
        %v5376 = vadd.f32 %v5110, %v5352
        %v5377 = vadd.f32 %v5111, %v5357
        %v5378 = vadd.f32 %v5112, %v5360
        %s5379 = scalar_lea.vmem [#allocation2], 24
        %v5380 = vld [vmem:[%s5379] sm:$0xf]
        %v5381 = vld [vmem:[%s5379 + $0x4] sm:$0xf]
        %v5382 = vld [vmem:[%s5379 + $0xc] sm:$0xf]
        %v5383 = vld [vmem:[%s5379 + $0x10] sm:$0xf]
        %v5384 = vld [vmem:[%s5379 + $0x18] sm:$0xf]
        %v5385 = vld [vmem:[%s5379 + $0x1c] sm:$0xf]
        %v5386 = vld [vmem:[%s5379 + $0x24] sm:$0xf]
        %v5387 = vld [vmem:[%s5379 + $0x28] sm:$0xf]
        %v5388 = vld [vmem:[%s5379 + $0x30] sm:$0xf]
        %v5389 = vld [vmem:[%s5379 + $0x34] sm:$0xf]
        %v5390 = vld [vmem:[%s5379 + $0x3c] sm:$0xf]
        %v5391 = vld [vmem:[%s5379 + $0x40] sm:$0xf]
        %v5392 = vld [vmem:[%s5379 + $0x48] sm:$0xf]
        %v5393 = vld [vmem:[%s5379 + $0x4c] sm:$0xf]
        %v5394 = vld [vmem:[%s5379 + $0x54] sm:$0xf]
        %v5395 = vld [vmem:[%s5379 + $0x58] sm:$0xf]
        %s5396 = scalar_lea.vmem %s3, 96
        %v5397 = vld [vmem:[%s5396] sm:$0xf]
        %v5398 = vld [vmem:[%s5396 + $0x4] sm:$0xf]
        %v5399 = vld [vmem:[%s5396 + $0x8] sm:$0xf]
        %v5400 = vld [vmem:[%s5396 + $0xc] sm:$0xf]
        %v5417 = vunpack.c.l.b16 %v5380
        %v5418 = vunpack.c.l.b16 %v5381
        %v5419 = vunpack.c.l.b16 %v5382
        %v5420 = vunpack.c.l.b16 %v5383
        %v5421 = vunpack.c.l.b16 %v5384
        %v5422 = vunpack.c.l.b16 %v5385
        %v5423 = vunpack.c.l.b16 %v5386
        %v5424 = vunpack.c.l.b16 %v5387
        %v5425 = vunpack.c.l.b16 %v5388
        %v5426 = vunpack.c.l.b16 %v5389
        %v5427 = vunpack.c.l.b16 %v5390
        %v5428 = vunpack.c.l.b16 %v5391
        %v5429 = vunpack.c.l.b16 %v5392
        %v5430 = vunpack.c.l.b16 %v5393
        %v5431 = vunpack.c.l.b16 %v5394
        %v5432 = vunpack.c.l.b16 %v5395
        %v5433 = vpack.c.b16 %v5418, %v5417
        %v5434 = vpack.c.b16 %v5420, %v5419
        %v5435 = vpack.c.b16 %v5422, %v5421
        %v5436 = vpack.c.b16 %v5424, %v5423
        %v5437 = vpack.c.b16 %v5426, %v5425
        %v5438 = vpack.c.b16 %v5428, %v5427
        %v5439 = vpack.c.b16 %v5430, %v5429
        %v5440 = vpack.c.b16 %v5432, %v5431
        %v5445 = vunpack.c.l.b16 %v5397
        %v5446 = vunpack.c.l.b16 %v5398
        %v5447 = vunpack.c.l.b16 %v5399
        %v5448 = vunpack.c.l.b16 %v5400
        %v5449 = vpack.c.b16 %v5446, %v5445
        %v5450 = vpack.c.b16 %v5448, %v5447
        %v5454 = vsel %vm3955, %v5433, 0
        %v5457 = vsel %vm3955, %v5434, 0
        %v5460 = vsel %vm3955, %v5435, 0
        %v5463 = vsel %vm3955, %v5436, 0
        %v5466 = vsel %vm3955, %v5437, 0
        %v5469 = vsel %vm3955, %v5438, 0
        %v5472 = vsel %vm3955, %v5439, 0
        %v5475 = vsel %vm3955, %v5440, 0
        %5477 = vmatprep.subr.bf16.mxu0 0
        %5478 = vmatpush1.bf16.msra.mxu0 %v5449
        %5479 = vmatprep.subr.bf16.mxu0 0
        %5480 = vmatpush1.bf16.msra.mxu0 %v5450
        %5481 = vmatprep.subr.bf16.mxu0 0
        %5482 = vmatpush1.bf16.msra.mxu0 0
        %5483 = vmatprep.subr.bf16.mxu0 0
        %5484 = vmatpush1.bf16.msra.mxu0 0
        %5485 = vmatprep.subr.bf16.mxu0 0
        %5486 = vmatpush1.bf16.msra.mxu0 0
        %5487 = vmatprep.subr.bf16.mxu0 0
        %5488 = vmatpush1.bf16.msra.mxu0 0
        %5489 = vmatprep.subr.bf16.mxu0 0
        %5490 = vmatpush1.bf16.msra.mxu0 0
        %5491 = vmatprep.subr.bf16.mxu0 0
        %5492 = vmatpush1.bf16.msra.mxu0 0
        %5493 = vmatprep.subr.bf16.mxu0 0
        %5494 = vmatpush1.bf16.msra.mxu0 0
        %5495 = vmatprep.subr.bf16.mxu0 0
        %5496 = vmatpush1.bf16.msra.mxu0 0
        %5497 = vmatprep.subr.bf16.mxu0 0
        %5498 = vmatpush1.bf16.msra.mxu0 0
        %5499 = vmatprep.subr.bf16.mxu0 0
        %5500 = vmatpush1.bf16.msra.mxu0 0
        %5501 = vmatprep.subr.bf16.mxu0 0
        %5502 = vmatpush1.bf16.msra.mxu0 0
        %5503 = vmatprep.subr.bf16.mxu0 0
        %5504 = vmatpush1.bf16.msra.mxu0 0
        %5505 = vmatprep.subr.bf16.mxu0 0
        %5506 = vmatpush1.bf16.msra.mxu0 0
        %5507 = vmatprep.subr.bf16.mxu0 0
        %5508 = vmatpush1.bf16.msra.mxu0 0
        %5509 = vmatprep.mubr.bf16.mxu0 0
        %5510 = vmatmul.mubr.bf16.gmra.mrb[0].mxu0 %v5454
        %v5511 = vpop.f32.mrb[0].mxu0
        %v5512 = vadd.f32 0.0, %v5511
        %v5513 = vpop.f32.mrb[0].mxu0
        %v5514 = vpop.f32.mrb[0].mxu0
        %v5515 = vadd.f32 0.0, %v5514
        %v5516 = vpop.f32.mrb[0].mxu0
        %5517 = vmatprep.mubr.bf16.mxu0 0
        %5518 = vmatmul.mubr.bf16.gmra.mrb[0].mxu0 %v5457
        %v5519 = vpop.f32.mrb[0].mxu0
        %v5520 = vadd.f32 0.0, %v5519
        %v5521 = vpop.f32.mrb[0].mxu0
        %v5522 = vpop.f32.mrb[0].mxu0
        %v5523 = vadd.f32 0.0, %v5522
        %v5524 = vpop.f32.mrb[0].mxu0
        %5525 = vmatprep.mubr.bf16.mxu0 0
        %5526 = vmatmul.mubr.bf16.gmra.mrb[0].mxu0 %v5460
        %v5527 = vpop.f32.mrb[0].mxu0
        %v5528 = vadd.f32 0.0, %v5527
        %v5529 = vpop.f32.mrb[0].mxu0
        %v5530 = vpop.f32.mrb[0].mxu0
        %v5531 = vadd.f32 0.0, %v5530
        %v5532 = vpop.f32.mrb[0].mxu0
        %5533 = vmatprep.mubr.bf16.mxu0 0
        %5534 = vmatmul.mubr.bf16.gmra.mrb[0].mxu0 %v5463
        %v5535 = vpop.f32.mrb[0].mxu0
        %v5536 = vadd.f32 0.0, %v5535
        %v5537 = vpop.f32.mrb[0].mxu0
        %v5538 = vpop.f32.mrb[0].mxu0
        %v5539 = vadd.f32 0.0, %v5538
        %v5540 = vpop.f32.mrb[0].mxu0
        %5541 = vmatprep.mubr.bf16.mxu0 0
        %5542 = vmatmul.mubr.bf16.gmra.mrb[0].mxu0 %v5466
        %v5543 = vpop.f32.mrb[0].mxu0
        %v5544 = vadd.f32 0.0, %v5543
        %v5545 = vpop.f32.mrb[0].mxu0
        %v5546 = vpop.f32.mrb[0].mxu0
        %v5547 = vadd.f32 0.0, %v5546
        %v5548 = vpop.f32.mrb[0].mxu0
        %5549 = vmatprep.mubr.bf16.mxu0 0
        %5550 = vmatmul.mubr.bf16.gmra.mrb[0].mxu0 %v5469
        %v5551 = vpop.f32.mrb[0].mxu0
        %v5552 = vadd.f32 0.0, %v5551
        %v5553 = vpop.f32.mrb[0].mxu0
        %v5554 = vpop.f32.mrb[0].mxu0
        %v5555 = vadd.f32 0.0, %v5554
        %v5556 = vpop.f32.mrb[0].mxu0
        %5557 = vmatprep.mubr.bf16.mxu0 0
        %5558 = vmatmul.mubr.bf16.gmra.mrb[0].mxu0 %v5472
        %v5559 = vpop.f32.mrb[0].mxu0
        %v5560 = vadd.f32 0.0, %v5559
        %v5561 = vpop.f32.mrb[0].mxu0
        %v5562 = vpop.f32.mrb[0].mxu0
        %v5563 = vadd.f32 0.0, %v5562
        %v5564 = vpop.f32.mrb[0].mxu0
        %5565 = vmatprep.mubr.bf16.mxu0 0
        %5566 = vmatmul.mubr.bf16.gmra.mrb[0].mxu0 %v5475
        %v5567 = vpop.f32.mrb[0].mxu0
        %v5568 = vadd.f32 0.0, %v5567
        %v5569 = vpop.f32.mrb[0].mxu0
        %v5570 = vpop.f32.mrb[0].mxu0
        %v5571 = vadd.f32 0.0, %v5570
        %v5572 = vpop.f32.mrb[0].mxu0
        %5573 = vdwg.mxu0
        %v5574 = vadd.f32 %v5363, %v5512
        %v5575 = vadd.f32 %v5364, %v5515
        %v5576 = vadd.f32 %v5365, %v5520
        %v5577 = vadd.f32 %v5366, %v5523
        %v5578 = vadd.f32 %v5367, %v5528
        %v5579 = vadd.f32 %v5368, %v5531
        %v5580 = vadd.f32 %v5369, %v5536
        %v5581 = vadd.f32 %v5370, %v5539
        %v5582 = vadd.f32 %v5371, %v5544
        %v5583 = vadd.f32 %v5372, %v5547
        %v5584 = vadd.f32 %v5373, %v5552
        %v5585 = vadd.f32 %v5374, %v5555
        %v5586 = vadd.f32 %v5375, %v5560
        %v5587 = vadd.f32 %v5376, %v5563
        %v5588 = vadd.f32 %v5377, %v5568
        %v5589 = vadd.f32 %v5378, %v5571
        %v5590 = vld [vmem:[%s5379] sm:$0xf]
        %v5591 = vld [vmem:[%s5379 + $0x4] sm:$0xf]
        %v5592 = vld [vmem:[%s5379 + $0x8] sm:$0x1]
        %v5593 = vld [vmem:[%s5379 + $0xc] sm:$0xf]
        %v5594 = vld [vmem:[%s5379 + $0x10] sm:$0xf]
        %v5595 = vld [vmem:[%s5379 + $0x14] sm:$0x1]
        %v5596 = vld [vmem:[%s5379 + $0x18] sm:$0xf]
        %v5597 = vld [vmem:[%s5379 + $0x1c] sm:$0xf]
        %v5598 = vld [vmem:[%s5379 + $0x20] sm:$0x1]
        %v5599 = vld [vmem:[%s5379 + $0x24] sm:$0xf]
        %v5600 = vld [vmem:[%s5379 + $0x28] sm:$0xf]
        %v5601 = vld [vmem:[%s5379 + $0x2c] sm:$0x1]
        %v5602 = vld [vmem:[%s5379 + $0x30] sm:$0xf]
        %v5603 = vld [vmem:[%s5379 + $0x34] sm:$0xf]
        %v5604 = vld [vmem:[%s5379 + $0x38] sm:$0x1]
        %v5605 = vld [vmem:[%s5379 + $0x3c] sm:$0xf]
        %v5606 = vld [vmem:[%s5379 + $0x40] sm:$0xf]
        %v5607 = vld [vmem:[%s5379 + $0x44] sm:$0x1]
        %v5608 = vld [vmem:[%s5379 + $0x48] sm:$0xf]
        %v5609 = vld [vmem:[%s5379 + $0x4c] sm:$0xf]
        %v5610 = vld [vmem:[%s5379 + $0x50] sm:$0x1]
        %v5611 = vld [vmem:[%s5379 + $0x54] sm:$0xf]
        %v5612 = vld [vmem:[%s5379 + $0x58] sm:$0xf]
        %v5613 = vld [vmem:[%s5379 + $0x5c] sm:$0x1]
        %v5615 = vshrl.u32 %v5590, 16
        %v5617 = vrot.slane %v5615, 4
        %v5618 = vshll.u32 %v5590, 16
        %v5620 = vrot.slane %v5618, 5
        %v5621 = vor.u32 %v5617, %v5620
        %v5622 = vrot.slane %v5621, 4
        %v5624 = vshll.u32 %v5591, 16
        %v5626 = vrot.slane %v5624, 5
        %v5627 = vsel %vm276, %v5622, %v5626
        %v5628 = vshrl.u32 %v5591, 16
        %v5630 = vrot.slane %v5628, 4
        %v5631 = vor.u32 %v5630, %v5626
        %v5632 = vrot.slane %v5631, 4
        %v5634 = vshll.u32 %v5592, 16
        %v5636 = vrot.slane %v5634, 5
        %v5637 = vsel %vm276, %v5632, %v5636
        %v5639 = vshrl.u32 %v5593, 16
        %v5641 = vrot.slane %v5639, 4
        %v5642 = vshll.u32 %v5593, 16
        %v5644 = vrot.slane %v5642, 5
        %v5645 = vor.u32 %v5641, %v5644
        %v5646 = vrot.slane %v5645, 4
        %v5648 = vshll.u32 %v5594, 16
        %v5650 = vrot.slane %v5648, 5
        %v5651 = vsel %vm276, %v5646, %v5650
        %v5652 = vshrl.u32 %v5594, 16
        %v5654 = vrot.slane %v5652, 4
        %v5655 = vor.u32 %v5654, %v5650
        %v5656 = vrot.slane %v5655, 4
        %v5658 = vshll.u32 %v5595, 16
        %v5660 = vrot.slane %v5658, 5
        %v5661 = vsel %vm276, %v5656, %v5660
        %v5663 = vshrl.u32 %v5596, 16
        %v5665 = vrot.slane %v5663, 4
        %v5666 = vshll.u32 %v5596, 16
        %v5668 = vrot.slane %v5666, 5
        %v5669 = vor.u32 %v5665, %v5668
        %v5670 = vrot.slane %v5669, 4
        %v5672 = vshll.u32 %v5597, 16
        %v5674 = vrot.slane %v5672, 5
        %v5675 = vsel %vm276, %v5670, %v5674
        %v5676 = vshrl.u32 %v5597, 16
        %v5678 = vrot.slane %v5676, 4
        %v5679 = vor.u32 %v5678, %v5674
        %v5680 = vrot.slane %v5679, 4
        %v5682 = vshll.u32 %v5598, 16
        %v5684 = vrot.slane %v5682, 5
        %v5685 = vsel %vm276, %v5680, %v5684
        %v5687 = vshrl.u32 %v5599, 16
        %v5689 = vrot.slane %v5687, 4
        %v5690 = vshll.u32 %v5599, 16
        %v5692 = vrot.slane %v5690, 5
        %v5693 = vor.u32 %v5689, %v5692
        %v5694 = vrot.slane %v5693, 4
        %v5696 = vshll.u32 %v5600, 16
        %v5698 = vrot.slane %v5696, 5
        %v5699 = vsel %vm276, %v5694, %v5698
        %v5700 = vshrl.u32 %v5600, 16
        %v5702 = vrot.slane %v5700, 4
        %v5703 = vor.u32 %v5702, %v5698
        %v5704 = vrot.slane %v5703, 4
        %v5706 = vshll.u32 %v5601, 16
        %v5708 = vrot.slane %v5706, 5
        %v5709 = vsel %vm276, %v5704, %v5708
        %v5711 = vshrl.u32 %v5602, 16
        %v5713 = vrot.slane %v5711, 4
        %v5714 = vshll.u32 %v5602, 16
        %v5716 = vrot.slane %v5714, 5
        %v5717 = vor.u32 %v5713, %v5716
        %v5718 = vrot.slane %v5717, 4
        %v5720 = vshll.u32 %v5603, 16
        %v5722 = vrot.slane %v5720, 5
        %v5723 = vsel %vm276, %v5718, %v5722
        %v5724 = vshrl.u32 %v5603, 16
        %v5726 = vrot.slane %v5724, 4
        %v5727 = vor.u32 %v5726, %v5722
        %v5728 = vrot.slane %v5727, 4
        %v5730 = vshll.u32 %v5604, 16
        %v5732 = vrot.slane %v5730, 5
        %v5733 = vsel %vm276, %v5728, %v5732
        %v5735 = vshrl.u32 %v5605, 16
        %v5737 = vrot.slane %v5735, 4
        %v5738 = vshll.u32 %v5605, 16
        %v5740 = vrot.slane %v5738, 5
        %v5741 = vor.u32 %v5737, %v5740
        %v5742 = vrot.slane %v5741, 4
        %v5744 = vshll.u32 %v5606, 16
        %v5746 = vrot.slane %v5744, 5
        %v5747 = vsel %vm276, %v5742, %v5746
        %v5748 = vshrl.u32 %v5606, 16
        %v5750 = vrot.slane %v5748, 4
        %v5751 = vor.u32 %v5750, %v5746
        %v5752 = vrot.slane %v5751, 4
        %v5754 = vshll.u32 %v5607, 16
        %v5756 = vrot.slane %v5754, 5
        %v5757 = vsel %vm276, %v5752, %v5756
        %v5759 = vshrl.u32 %v5608, 16
        %v5761 = vrot.slane %v5759, 4
        %v5762 = vshll.u32 %v5608, 16
        %v5764 = vrot.slane %v5762, 5
        %v5765 = vor.u32 %v5761, %v5764
        %v5766 = vrot.slane %v5765, 4
        %v5768 = vshll.u32 %v5609, 16
        %v5770 = vrot.slane %v5768, 5
        %v5771 = vsel %vm276, %v5766, %v5770
        %v5772 = vshrl.u32 %v5609, 16
        %v5774 = vrot.slane %v5772, 4
        %v5775 = vor.u32 %v5774, %v5770
        %v5776 = vrot.slane %v5775, 4
        %v5778 = vshll.u32 %v5610, 16
        %v5780 = vrot.slane %v5778, 5
        %v5781 = vsel %vm276, %v5776, %v5780
        %v5783 = vshrl.u32 %v5611, 16
        %v5785 = vrot.slane %v5783, 4
        %v5786 = vshll.u32 %v5611, 16
        %v5788 = vrot.slane %v5786, 5
        %v5789 = vor.u32 %v5785, %v5788
        %v5790 = vrot.slane %v5789, 4
        %v5792 = vshll.u32 %v5612, 16
        %v5794 = vrot.slane %v5792, 5
        %v5795 = vsel %vm276, %v5790, %v5794
        %v5796 = vshrl.u32 %v5612, 16
        %v5798 = vrot.slane %v5796, 4
        %v5799 = vor.u32 %v5798, %v5794
        %v5800 = vrot.slane %v5799, 4
        %v5802 = vshll.u32 %v5613, 16
        %v5804 = vrot.slane %v5802, 5
        %v5805 = vsel %vm276, %v5800, %v5804
        %s5806 = scalar_lea.vmem %s3, 112
        %v5807 = vld [vmem:[%s5806] sm:$0xf]
        %v5808 = vld [vmem:[%s5806 + $0x4] sm:$0xf]
        %v5809 = vld [vmem:[%s5806 + $0x8] sm:$0xf]
        %v5810 = vld [vmem:[%s5806 + $0xc] sm:$0xf]
        %v5811 = vunpack.c.l.b16 %v5627
        %v5812 = vunpack.c.l.b16 %v5637
        %v5813 = vunpack.c.l.b16 %v5651
        %v5814 = vunpack.c.l.b16 %v5661
        %v5815 = vunpack.c.l.b16 %v5675
        %v5816 = vunpack.c.l.b16 %v5685
        %v5817 = vunpack.c.l.b16 %v5699
        %v5818 = vunpack.c.l.b16 %v5709
        %v5819 = vunpack.c.l.b16 %v5723
        %v5820 = vunpack.c.l.b16 %v5733
        %v5821 = vunpack.c.l.b16 %v5747
        %v5822 = vunpack.c.l.b16 %v5757
        %v5823 = vunpack.c.l.b16 %v5771
        %v5824 = vunpack.c.l.b16 %v5781
        %v5825 = vunpack.c.l.b16 %v5795
        %v5826 = vunpack.c.l.b16 %v5805
        %v5827 = vpack.c.b16 %v5812, %v5811
        %v5828 = vpack.c.b16 %v5814, %v5813
        %v5829 = vpack.c.b16 %v5816, %v5815
        %v5830 = vpack.c.b16 %v5818, %v5817
        %v5831 = vpack.c.b16 %v5820, %v5819
        %v5832 = vpack.c.b16 %v5822, %v5821
        %v5833 = vpack.c.b16 %v5824, %v5823
        %v5834 = vpack.c.b16 %v5826, %v5825
        %v5839 = vunpack.c.l.b16 %v5807
        %v5840 = vunpack.c.l.b16 %v5808
        %v5841 = vunpack.c.l.b16 %v5809
        %v5842 = vunpack.c.l.b16 %v5810
        %v5843 = vpack.c.b16 %v5840, %v5839
        %v5844 = vpack.c.b16 %v5842, %v5841
        %v5848 = vsel %vm3955, %v5827, 0
        %v5851 = vsel %vm3955, %v5828, 0
        %v5854 = vsel %vm3955, %v5829, 0
        %v5857 = vsel %vm3955, %v5830, 0
        %v5860 = vsel %vm3955, %v5831, 0
        %v5863 = vsel %vm3955, %v5832, 0
        %v5866 = vsel %vm3955, %v5833, 0
        %v5869 = vsel %vm3955, %v5834, 0
        %5871 = vmatprep.subr.bf16.mxu0 0
        %5872 = vmatpush1.bf16.msra.mxu0 %v5843
        %5873 = vmatprep.subr.bf16.mxu0 0
        %5874 = vmatpush1.bf16.msra.mxu0 %v5844
        %5875 = vmatprep.subr.bf16.mxu0 0
        %5876 = vmatpush1.bf16.msra.mxu0 0
        %5877 = vmatprep.subr.bf16.mxu0 0
        %5878 = vmatpush1.bf16.msra.mxu0 0
        %5879 = vmatprep.subr.bf16.mxu0 0
        %5880 = vmatpush1.bf16.msra.mxu0 0
        %5881 = vmatprep.subr.bf16.mxu0 0
        %5882 = vmatpush1.bf16.msra.mxu0 0
        %5883 = vmatprep.subr.bf16.mxu0 0
        %5884 = vmatpush1.bf16.msra.mxu0 0
        %5885 = vmatprep.subr.bf16.mxu0 0
        %5886 = vmatpush1.bf16.msra.mxu0 0
        %5887 = vmatprep.subr.bf16.mxu0 0
        %5888 = vmatpush1.bf16.msra.mxu0 0
        %5889 = vmatprep.subr.bf16.mxu0 0
        %5890 = vmatpush1.bf16.msra.mxu0 0
        %5891 = vmatprep.subr.bf16.mxu0 0
        %5892 = vmatpush1.bf16.msra.mxu0 0
        %5893 = vmatprep.subr.bf16.mxu0 0
        %5894 = vmatpush1.bf16.msra.mxu0 0
        %5895 = vmatprep.subr.bf16.mxu0 0
        %5896 = vmatpush1.bf16.msra.mxu0 0
        %5897 = vmatprep.subr.bf16.mxu0 0
        %5898 = vmatpush1.bf16.msra.mxu0 0
        %5899 = vmatprep.subr.bf16.mxu0 0
        %5900 = vmatpush1.bf16.msra.mxu0 0
        %5901 = vmatprep.subr.bf16.mxu0 0
        %5902 = vmatpush1.bf16.msra.mxu0 0
        %5903 = vmatprep.mubr.bf16.mxu0 0
        %5904 = vmatmul.mubr.bf16.gmra.mrb[0].mxu0 %v5848
        %v5905 = vpop.f32.mrb[0].mxu0
        %v5906 = vadd.f32 0.0, %v5905
        %v5907 = vpop.f32.mrb[0].mxu0
        %v5908 = vpop.f32.mrb[0].mxu0
        %v5909 = vadd.f32 0.0, %v5908
        %v5910 = vpop.f32.mrb[0].mxu0
        %5911 = vmatprep.mubr.bf16.mxu0 0
        %5912 = vmatmul.mubr.bf16.gmra.mrb[0].mxu0 %v5851
        %v5913 = vpop.f32.mrb[0].mxu0
        %v5914 = vadd.f32 0.0, %v5913
        %v5915 = vpop.f32.mrb[0].mxu0
        %v5916 = vpop.f32.mrb[0].mxu0
        %v5917 = vadd.f32 0.0, %v5916
        %v5918 = vpop.f32.mrb[0].mxu0
        %5919 = vmatprep.mubr.bf16.mxu0 0
        %5920 = vmatmul.mubr.bf16.gmra.mrb[0].mxu0 %v5854
        %v5921 = vpop.f32.mrb[0].mxu0
        %v5922 = vadd.f32 0.0, %v5921
        %v5923 = vpop.f32.mrb[0].mxu0
        %v5924 = vpop.f32.mrb[0].mxu0
        %v5925 = vadd.f32 0.0, %v5924
        %v5926 = vpop.f32.mrb[0].mxu0
        %5927 = vmatprep.mubr.bf16.mxu0 0
        %5928 = vmatmul.mubr.bf16.gmra.mrb[0].mxu0 %v5857
        %v5929 = vpop.f32.mrb[0].mxu0
        %v5930 = vadd.f32 0.0, %v5929
        %v5931 = vpop.f32.mrb[0].mxu0
        %v5932 = vpop.f32.mrb[0].mxu0
        %v5933 = vadd.f32 0.0, %v5932
        %v5934 = vpop.f32.mrb[0].mxu0
        %5935 = vmatprep.mubr.bf16.mxu0 0
        %5936 = vmatmul.mubr.bf16.gmra.mrb[0].mxu0 %v5860
        %v5937 = vpop.f32.mrb[0].mxu0
        %v5938 = vadd.f32 0.0, %v5937
        %v5939 = vpop.f32.mrb[0].mxu0
        %v5940 = vpop.f32.mrb[0].mxu0
        %v5941 = vadd.f32 0.0, %v5940
        %v5942 = vpop.f32.mrb[0].mxu0
        %5943 = vmatprep.mubr.bf16.mxu0 0
        %5944 = vmatmul.mubr.bf16.gmra.mrb[0].mxu0 %v5863
        %v5945 = vpop.f32.mrb[0].mxu0
        %v5946 = vadd.f32 0.0, %v5945
        %v5947 = vpop.f32.mrb[0].mxu0
        %v5948 = vpop.f32.mrb[0].mxu0
        %v5949 = vadd.f32 0.0, %v5948
        %v5950 = vpop.f32.mrb[0].mxu0
        %5951 = vmatprep.mubr.bf16.mxu0 0
        %5952 = vmatmul.mubr.bf16.gmra.mrb[0].mxu0 %v5866
        %v5953 = vpop.f32.mrb[0].mxu0
        %v5954 = vadd.f32 0.0, %v5953
        %v5955 = vpop.f32.mrb[0].mxu0
        %v5956 = vpop.f32.mrb[0].mxu0
        %v5957 = vadd.f32 0.0, %v5956
        %v5958 = vpop.f32.mrb[0].mxu0
        %5959 = vmatprep.mubr.bf16.mxu0 0
        %5960 = vmatmul.mubr.bf16.gmra.mrb[0].mxu0 %v5869
        %v5961 = vpop.f32.mrb[0].mxu0
        %v5962 = vadd.f32 0.0, %v5961
        %v5963 = vpop.f32.mrb[0].mxu0
        %v5964 = vpop.f32.mrb[0].mxu0
        %v5965 = vadd.f32 0.0, %v5964
        %v5966 = vpop.f32.mrb[0].mxu0
        %5967 = vdwg.mxu0
        %v5968 = vadd.f32 %v5574, %v5906
        %v5969 = vadd.f32 %v5575, %v5909
        %v5970 = vadd.f32 %v5576, %v5914
        %v5971 = vadd.f32 %v5577, %v5917
        %v5972 = vadd.f32 %v5578, %v5922
        %v5973 = vadd.f32 %v5579, %v5925
        %v5974 = vadd.f32 %v5580, %v5930
        %v5975 = vadd.f32 %v5581, %v5933
        %v5976 = vadd.f32 %v5582, %v5938
        %v5977 = vadd.f32 %v5583, %v5941
        %v5978 = vadd.f32 %v5584, %v5946
        %v5979 = vadd.f32 %v5585, %v5949
        %v5980 = vadd.f32 %v5586, %v5954
        %v5981 = vadd.f32 %v5587, %v5957
        %v5982 = vadd.f32 %v5588, %v5962
        %v5983 = vadd.f32 %v5589, %v5965
        %v5984 = vld [vmem:[%s5379] sm:$0xe]
        %v5985 = vld [vmem:[%s5379 + $0xc] sm:$0xe]
        %v5986 = vld [vmem:[%s5379 + $0x18] sm:$0xe]
        %v5987 = vld [vmem:[%s5379 + $0x24] sm:$0xe]
        %v5988 = vld [vmem:[%s5379 + $0x30] sm:$0xe]
        %v5989 = vld [vmem:[%s5379 + $0x3c] sm:$0xe]
        %v5990 = vld [vmem:[%s5379 + $0x48] sm:$0xe]
        %v5991 = vld [vmem:[%s5379 + $0x54] sm:$0xe]
        %v6016 = vrot.slane %v5984, 5
        %v6017 = vrot.slane %v6016, 4
        %v6018 = vrot.slane %v5591, 5
        %v6019 = vsel %vm925, %v6017, %v6018
        %v6020 = vrot.slane %v6018, 4
        %v6021 = vrot.slane %v5592, 5
        %v6022 = vsel %vm925, %v6020, %v6021
        %v6023 = vrot.slane %v5985, 5
        %v6024 = vrot.slane %v6023, 4
        %v6025 = vrot.slane %v5594, 5
        %v6026 = vsel %vm925, %v6024, %v6025
        %v6027 = vrot.slane %v6025, 4
        %v6028 = vrot.slane %v5595, 5
        %v6029 = vsel %vm925, %v6027, %v6028
        %v6030 = vrot.slane %v5986, 5
        %v6031 = vrot.slane %v6030, 4
        %v6032 = vrot.slane %v5597, 5
        %v6033 = vsel %vm925, %v6031, %v6032
        %v6034 = vrot.slane %v6032, 4
        %v6035 = vrot.slane %v5598, 5
        %v6036 = vsel %vm925, %v6034, %v6035
        %v6037 = vrot.slane %v5987, 5
        %v6038 = vrot.slane %v6037, 4
        %v6039 = vrot.slane %v5600, 5
        %v6040 = vsel %vm925, %v6038, %v6039
        %v6041 = vrot.slane %v6039, 4
        %v6042 = vrot.slane %v5601, 5
        %v6043 = vsel %vm925, %v6041, %v6042
        %v6044 = vrot.slane %v5988, 5
        %v6045 = vrot.slane %v6044, 4
        %v6046 = vrot.slane %v5603, 5
        %v6047 = vsel %vm925, %v6045, %v6046
        %v6048 = vrot.slane %v6046, 4
        %v6049 = vrot.slane %v5604, 5
        %v6050 = vsel %vm925, %v6048, %v6049
        %v6051 = vrot.slane %v5989, 5
        %v6052 = vrot.slane %v6051, 4
        %v6053 = vrot.slane %v5606, 5
        %v6054 = vsel %vm925, %v6052, %v6053
        %v6055 = vrot.slane %v6053, 4
        %v6056 = vrot.slane %v5607, 5
        %v6057 = vsel %vm925, %v6055, %v6056
        %v6058 = vrot.slane %v5990, 5
        %v6059 = vrot.slane %v6058, 4
        %v6060 = vrot.slane %v5609, 5
        %v6061 = vsel %vm925, %v6059, %v6060
        %v6062 = vrot.slane %v6060, 4
        %v6063 = vrot.slane %v5610, 5
        %v6064 = vsel %vm925, %v6062, %v6063
        %v6065 = vrot.slane %v5991, 5
        %v6066 = vrot.slane %v6065, 4
        %v6067 = vrot.slane %v5612, 5
        %v6068 = vsel %vm925, %v6066, %v6067
        %v6069 = vrot.slane %v6067, 4
        %v6070 = vrot.slane %v5613, 5
        %v6071 = vsel %vm925, %v6069, %v6070
        %s6072 = scalar_lea.vmem %s3, 128
        %v6073 = vld [vmem:[%s6072] sm:$0xf]
        %v6074 = vld [vmem:[%s6072 + $0x4] sm:$0xf]
        %v6075 = vld [vmem:[%s6072 + $0x8] sm:$0xf]
        %v6076 = vld [vmem:[%s6072 + $0xc] sm:$0xf]
        %v6077 = vunpack.c.l.b16 %v6019
        %v6078 = vunpack.c.l.b16 %v6022
        %v6079 = vunpack.c.l.b16 %v6026
        %v6080 = vunpack.c.l.b16 %v6029
        %v6081 = vunpack.c.l.b16 %v6033
        %v6082 = vunpack.c.l.b16 %v6036
        %v6083 = vunpack.c.l.b16 %v6040
        %v6084 = vunpack.c.l.b16 %v6043
        %v6085 = vunpack.c.l.b16 %v6047
        %v6086 = vunpack.c.l.b16 %v6050
        %v6087 = vunpack.c.l.b16 %v6054
        %v6088 = vunpack.c.l.b16 %v6057
        %v6089 = vunpack.c.l.b16 %v6061
        %v6090 = vunpack.c.l.b16 %v6064
        %v6091 = vunpack.c.l.b16 %v6068
        %v6092 = vunpack.c.l.b16 %v6071
        %v6093 = vpack.c.b16 %v6078, %v6077
        %v6094 = vpack.c.b16 %v6080, %v6079
        %v6095 = vpack.c.b16 %v6082, %v6081
        %v6096 = vpack.c.b16 %v6084, %v6083
        %v6097 = vpack.c.b16 %v6086, %v6085
        %v6098 = vpack.c.b16 %v6088, %v6087
        %v6099 = vpack.c.b16 %v6090, %v6089
        %v6100 = vpack.c.b16 %v6092, %v6091
        %v6105 = vunpack.c.l.b16 %v6073
        %v6106 = vunpack.c.l.b16 %v6074
        %v6107 = vunpack.c.l.b16 %v6075
        %v6108 = vunpack.c.l.b16 %v6076
        %v6109 = vpack.c.b16 %v6106, %v6105
        %v6110 = vpack.c.b16 %v6108, %v6107
        %v6114 = vsel %vm3955, %v6093, 0
        %v6117 = vsel %vm3955, %v6094, 0
        %v6120 = vsel %vm3955, %v6095, 0
        %v6123 = vsel %vm3955, %v6096, 0
        %v6126 = vsel %vm3955, %v6097, 0
        %v6129 = vsel %vm3955, %v6098, 0
        %v6132 = vsel %vm3955, %v6099, 0
        %v6135 = vsel %vm3955, %v6100, 0
        %6137 = vmatprep.subr.bf16.mxu0 0
        %6138 = vmatpush1.bf16.msra.mxu0 %v6109
        %6139 = vmatprep.subr.bf16.mxu0 0
        %6140 = vmatpush1.bf16.msra.mxu0 %v6110
        %6141 = vmatprep.subr.bf16.mxu0 0
        %6142 = vmatpush1.bf16.msra.mxu0 0
        %6143 = vmatprep.subr.bf16.mxu0 0
        %6144 = vmatpush1.bf16.msra.mxu0 0
        %6145 = vmatprep.subr.bf16.mxu0 0
        %6146 = vmatpush1.bf16.msra.mxu0 0
        %6147 = vmatprep.subr.bf16.mxu0 0
        %6148 = vmatpush1.bf16.msra.mxu0 0
        %6149 = vmatprep.subr.bf16.mxu0 0
        %6150 = vmatpush1.bf16.msra.mxu0 0
        %6151 = vmatprep.subr.bf16.mxu0 0
        %6152 = vmatpush1.bf16.msra.mxu0 0
        %6153 = vmatprep.subr.bf16.mxu0 0
        %6154 = vmatpush1.bf16.msra.mxu0 0
        %6155 = vmatprep.subr.bf16.mxu0 0
        %6156 = vmatpush1.bf16.msra.mxu0 0
        %6157 = vmatprep.subr.bf16.mxu0 0
        %6158 = vmatpush1.bf16.msra.mxu0 0
        %6159 = vmatprep.subr.bf16.mxu0 0
        %6160 = vmatpush1.bf16.msra.mxu0 0
        %6161 = vmatprep.subr.bf16.mxu0 0
        %6162 = vmatpush1.bf16.msra.mxu0 0
        %6163 = vmatprep.subr.bf16.mxu0 0
        %6164 = vmatpush1.bf16.msra.mxu0 0
        %6165 = vmatprep.subr.bf16.mxu0 0
        %6166 = vmatpush1.bf16.msra.mxu0 0
        %6167 = vmatprep.subr.bf16.mxu0 0
        %6168 = vmatpush1.bf16.msra.mxu0 0
        %6169 = vmatprep.mubr.bf16.mxu0 0
        %6170 = vmatmul.mubr.bf16.gmra.mrb[0].mxu0 %v6114
        %v6171 = vpop.f32.mrb[0].mxu0
        %v6172 = vadd.f32 0.0, %v6171
        %v6173 = vpop.f32.mrb[0].mxu0
        %v6174 = vpop.f32.mrb[0].mxu0
        %v6175 = vadd.f32 0.0, %v6174
        %v6176 = vpop.f32.mrb[0].mxu0
        %6177 = vmatprep.mubr.bf16.mxu0 0
        %6178 = vmatmul.mubr.bf16.gmra.mrb[0].mxu0 %v6117
        %v6179 = vpop.f32.mrb[0].mxu0
        %v6180 = vadd.f32 0.0, %v6179
        %v6181 = vpop.f32.mrb[0].mxu0
        %v6182 = vpop.f32.mrb[0].mxu0
        %v6183 = vadd.f32 0.0, %v6182
        %v6184 = vpop.f32.mrb[0].mxu0
        %6185 = vmatprep.mubr.bf16.mxu0 0
        %6186 = vmatmul.mubr.bf16.gmra.mrb[0].mxu0 %v6120
        %v6187 = vpop.f32.mrb[0].mxu0
        %v6188 = vadd.f32 0.0, %v6187
        %v6189 = vpop.f32.mrb[0].mxu0
        %v6190 = vpop.f32.mrb[0].mxu0
        %v6191 = vadd.f32 0.0, %v6190
        %v6192 = vpop.f32.mrb[0].mxu0
        %6193 = vmatprep.mubr.bf16.mxu0 0
        %6194 = vmatmul.mubr.bf16.gmra.mrb[0].mxu0 %v6123
        %v6195 = vpop.f32.mrb[0].mxu0
        %v6196 = vadd.f32 0.0, %v6195
        %v6197 = vpop.f32.mrb[0].mxu0
        %v6198 = vpop.f32.mrb[0].mxu0
        %v6199 = vadd.f32 0.0, %v6198
        %v6200 = vpop.f32.mrb[0].mxu0
        %6201 = vmatprep.mubr.bf16.mxu0 0
        %6202 = vmatmul.mubr.bf16.gmra.mrb[0].mxu0 %v6126
        %v6203 = vpop.f32.mrb[0].mxu0
        %v6204 = vadd.f32 0.0, %v6203
        %v6205 = vpop.f32.mrb[0].mxu0
        %v6206 = vpop.f32.mrb[0].mxu0
        %v6207 = vadd.f32 0.0, %v6206
        %v6208 = vpop.f32.mrb[0].mxu0
        %6209 = vmatprep.mubr.bf16.mxu0 0
        %6210 = vmatmul.mubr.bf16.gmra.mrb[0].mxu0 %v6129
        %v6211 = vpop.f32.mrb[0].mxu0
        %v6212 = vadd.f32 0.0, %v6211
        %v6213 = vpop.f32.mrb[0].mxu0
        %v6214 = vpop.f32.mrb[0].mxu0
        %v6215 = vadd.f32 0.0, %v6214
        %v6216 = vpop.f32.mrb[0].mxu0
        %6217 = vmatprep.mubr.bf16.mxu0 0
        %6218 = vmatmul.mubr.bf16.gmra.mrb[0].mxu0 %v6132
        %v6219 = vpop.f32.mrb[0].mxu0
        %v6220 = vadd.f32 0.0, %v6219
        %v6221 = vpop.f32.mrb[0].mxu0
        %v6222 = vpop.f32.mrb[0].mxu0
        %v6223 = vadd.f32 0.0, %v6222
        %v6224 = vpop.f32.mrb[0].mxu0
        %6225 = vmatprep.mubr.bf16.mxu0 0
        %6226 = vmatmul.mubr.bf16.gmra.mrb[0].mxu0 %v6135
        %v6227 = vpop.f32.mrb[0].mxu0
        %v6228 = vadd.f32 0.0, %v6227
        %v6229 = vpop.f32.mrb[0].mxu0
        %v6230 = vpop.f32.mrb[0].mxu0
        %v6231 = vadd.f32 0.0, %v6230
        %v6232 = vpop.f32.mrb[0].mxu0
        %6233 = vdwg.mxu0
        %v6234 = vadd.f32 %v5968, %v6172
        %v6235 = vadd.f32 %v5969, %v6175
        %v6236 = vadd.f32 %v5970, %v6180
        %v6237 = vadd.f32 %v5971, %v6183
        %v6238 = vadd.f32 %v5972, %v6188
        %v6239 = vadd.f32 %v5973, %v6191
        %v6240 = vadd.f32 %v5974, %v6196
        %v6241 = vadd.f32 %v5975, %v6199
        %v6242 = vadd.f32 %v5976, %v6204
        %v6243 = vadd.f32 %v5977, %v6207
        %v6244 = vadd.f32 %v5978, %v6212
        %v6245 = vadd.f32 %v5979, %v6215
        %v6246 = vadd.f32 %v5980, %v6220
        %v6247 = vadd.f32 %v5981, %v6223
        %v6248 = vadd.f32 %v5982, %v6228
        %v6249 = vadd.f32 %v5983, %v6231
        %v6250 = vld [vmem:[%s4] sm:$0x1]
        %v6252 = vlaneseq
        %v6253 = vshrl.u32 %v6252, 7
        %v6254 = vsub.s32 0, %v6253
        %v6255 = vrot.slane %v6250, %v6254
        %v6257 = vadd.f32 %v6234, %v6255
        %v6258 = vadd.f32 %v6235, %v6255
        %v6259 = vadd.f32 %v6236, %v6255
        %v6260 = vadd.f32 %v6237, %v6255
        %v6261 = vadd.f32 %v6238, %v6255
        %v6262 = vadd.f32 %v6239, %v6255
        %v6263 = vadd.f32 %v6240, %v6255
        %v6264 = vadd.f32 %v6241, %v6255
        %v6265 = vadd.f32 %v6242, %v6255
        %v6266 = vadd.f32 %v6243, %v6255
        %v6267 = vadd.f32 %v6244, %v6255
        %v6268 = vadd.f32 %v6245, %v6255
        %v6269 = vadd.f32 %v6246, %v6255
        %v6270 = vadd.f32 %v6247, %v6255
        %v6271 = vadd.f32 %v6248, %v6255
        %v6272 = vadd.f32 %v6249, %v6255
        %v6273 = vmax.f32 %v6257, 0.0
        %v6274 = vmax.f32 %v6258, 0.0
        %v6275 = vmax.f32 %v6259, 0.0
        %v6276 = vmax.f32 %v6260, 0.0
        %v6277 = vmax.f32 %v6261, 0.0
        %v6278 = vmax.f32 %v6262, 0.0
        %v6279 = vmax.f32 %v6263, 0.0
        %v6280 = vmax.f32 %v6264, 0.0
        %v6281 = vmax.f32 %v6265, 0.0
        %v6282 = vmax.f32 %v6266, 0.0
        %v6283 = vmax.f32 %v6267, 0.0
        %v6284 = vmax.f32 %v6268, 0.0
        %v6285 = vmax.f32 %v6269, 0.0
        %v6286 = vmax.f32 %v6270, 0.0
        %v6287 = vmax.f32 %v6271, 0.0
        %v6288 = vmax.f32 %v6272, 0.0
        %6289 = vst.msk [vmem:[%s231] sm:$0xff] %vm3955, %v6273
        %6290 = vst.msk [vmem:[%s231 + $0x8] sm:$0xff] %vm3955, %v6274
        %6291 = vst.msk [vmem:[%s231 + $0x10] sm:$0xff] %vm3955, %v6275
        %6292 = vst.msk [vmem:[%s231 + $0x18] sm:$0xff] %vm3955, %v6276
        %6293 = vst.msk [vmem:[%s231 + $0x20] sm:$0xff] %vm3955, %v6277
        %6294 = vst.msk [vmem:[%s231 + $0x28] sm:$0xff] %vm3955, %v6278
        %6295 = vst.msk [vmem:[%s231 + $0x30] sm:$0xff] %vm3955, %v6279
        %6296 = vst.msk [vmem:[%s231 + $0x38] sm:$0xff] %vm3955, %v6280
        %6297 = vst.msk [vmem:[%s231 + $0x40] sm:$0xff] %vm3955, %v6281
        %6298 = vst.msk [vmem:[%s231 + $0x48] sm:$0xff] %vm3955, %v6282
        %6299 = vst.msk [vmem:[%s231 + $0x50] sm:$0xff] %vm3955, %v6283
        %6300 = vst.msk [vmem:[%s231 + $0x58] sm:$0xff] %vm3955, %v6284
        %6301 = vst.msk [vmem:[%s231 + $0x60] sm:$0xff] %vm3955, %v6285
        %6302 = vst.msk [vmem:[%s231 + $0x68] sm:$0xff] %vm3955, %v6286
        %6303 = vst.msk [vmem:[%s231 + $0x70] sm:$0xff] %vm3955, %v6287
        %6304 = vst.msk [vmem:[%s231 + $0x78] sm:$0xff] %vm3955, %v6288
        %s6305 = sand.u32 %s151, 1
        %s6306 = scalar_lea.sflag [#allocation4], %s6305
        %s6307 = sand.u32 %s151, 1
        %s6308 = smul.addr %s6307, 128
        %s6309 = scalar_lea.vmem [#allocation3], %s6308
        // Predicated region
        $region49: #{double_conv.1} parent=39 // pred_check
          %p6310 = pneg %p161
        $region50: #{double_conv.1} parent=39 // pred_check_branch
          %6312 = sbr.rel (%p6310) target = $region52
        $region51: #{double_conv.1} parent=39 // pred_region
          %s6313 = smul.u32 8, %s24
          %s6315 = ssub.s32 2048, 2048
          %6316 = vsyncadd %s6306, %s6315
          %s6317 = smul.addr %s6313, 2
          %s6318 = smul.addr %s23, 32
          %s6319 = sadd.s32 %s6317, %s6318
          %s6320 = smul.addr %s6319, 128
          %s6321 = scalar_lea.hbm %s5, %s6320
          %s6322 = sshll.u32 %s6309, 4
          %s6323 = int_to_ptr.vmem [resolvable:$true] %s6322
          %6328 = dma.vmem_to_hbm [thread:$0]  %s6323, 2048, %s6321, %s6306, 128, 128, 8
        $region52: #{double_conv.1} parent=39 // pred_fallthru
          _
      $region40: #{double_conv.1} parent=5 // pred_fallthru
        _
      %p6329 = scmp.le.s32.totalorder 2, %s14
      // Predicated region
      $region53: #{double_conv.1} parent=5 // pred_check
        %p6330 = pneg %p6329
      $region54: #{double_conv.1} parent=5 // pred_check_branch
        %6332 = sbr.rel (%p6330) target = $region56
      $region55: #{double_conv.1} parent=5 // pred_region
        %s6333 = ssub.s32 %s14, 2
        // Predicated region
        $region57: #{double_conv.1} parent=55 // pred_check
          %p6334 = pneg %p167
        $region58: #{double_conv.1} parent=55 // pred_check_branch
          %6336 = sbr.rel (%p6334) target = $region60
        $region59: #{double_conv.1} parent=55 // pred_region
          %s6337 = sand.u32 %s152, 1
          %s6338 = scalar_lea.sflag [#allocation4], %s6337
          %s6339 = sand.u32 %s152, 1
          %s6340 = smul.addr %s6339, 128
          %s6341 = scalar_lea.vmem [#allocation3], %s6340
          %6342 = dma.done %s6338, 2048
        $region60: #{double_conv.1} parent=55 // pred_fallthru
          _
      $region56: #{double_conv.1} parent=5 // pred_fallthru
        _
    $region6: #{double_conv.1} parent=1 // loop_footer
      %s18 = sadd.s32 1, %s14
    $region7: #{double_conv.1} parent=1 // loop_footer_branch
      %13 = sbr.rel target = $region3
    $region8: #{double_conv.1} parent=1 // loop_exit
      _
    %6343 = vsyncpa [#allocation4], 1
    %s6344 = scalar_lea.sflag [#allocation4], 1
    %6345 = vsyncpa %s6344, 1

</llo_original>
